<compile_context>
chip_gen: v7x
topology: tpu7x:2x2x1
jax: 0.10.0
libtpu: 0.0.40
codegen_flags: <defaults>
</compile_context>

<pallas_src>
import jax
import jax.numpy as jnp
from jax import lax
from jax.experimental import pallas as pl
from jax.experimental.pallas import tpu as pltpu  # noqa: F401  (TPU backend)

# ----- model hyper-params (small, consistent with the module's __init__) -----
D_MODEL = 128
NHEAD = 4
HEAD_DIM = D_MODEL // NHEAD
DIM_FF = 256
NUM_LAYERS = 2
LN_EPS = 1e-5
NUM_TEMPORAL = 16
NUM_POSITIONAL = 64

BATCH = 2
SEQ = 8


# ----------------------------- kernel helpers -------------------------------
def _layernorm(x, w, b):
    # x: (N, D); w, b: (1, D)
    mu = jnp.mean(x, axis=-1, keepdims=True)
    var = jnp.mean((x - mu) ** 2, axis=-1, keepdims=True)
    return (x - mu) * lax.rsqrt(var + LN_EPS) * w + b


# ------------------------------- fused kernel --------------------------------
def fused_forward_kernel(src_ref, pos_ref, temp_ref,
                         wqkv_ref, bqkv_ref, wo_ref, bo_ref,
                         ln1w_ref, ln1b_ref,
                         w1_ref, b1_ref, w2_ref, b2_ref,
                         ln2w_ref, ln2b_ref,
                         fnw_ref, fnb_ref,
                         o_ref):
    B, S, D = src_ref.shape
    N = B * S
    scale = 1.0 / (HEAD_DIM ** 0.5)

    # ---- embeddings: src + positional (broadcast over batch) + temporal ----
    x3 = src_ref[...] + pos_ref[...][None, :, :] + temp_ref[...]      # (B,S,D)
    x = x3.reshape(N, D)                                              # (B*S,D)

    # ---- encoder layers (static unroll; weights resident in VMEM) ----
    for layer in range(NUM_LAYERS):
        wqkv = wqkv_ref[layer]          # (D, 3D)
        bqkv = bqkv_ref[layer]          # (1, 3D)
        wo = wo_ref[layer]              # (D, D)
        bo = bo_ref[layer]              # (1, D)
        ln1w, ln1b = ln1w_ref[layer], ln1b_ref[layer]
        w1, b1 = w1_ref[layer], b1_ref[layer]
        w2, b2 = w2_ref[layer], b2_ref[layer]
        ln2w, ln2b = ln2w_ref[layer], ln2b_ref[layer]

        # ---- multi-head self-attention: fused QKV, single out-proj ----
        qkv = jnp.dot(x, wqkv, preferred_element_type=jnp.float32) + bqkv
        q = qkv[:, :D].reshape(B, S, D)
        k = qkv[:, D:2 * D].reshape(B, S, D)
        v = qkv[:, 2 * D:].reshape(B, S, D)

        heads = []
        for h in range(NHEAD):
            lo = h * HEAD_DIM
            hi = lo + HEAD_DIM
            qh = q[:, :, lo:hi]                                      # (B,S,hd)
            kh = k[:, :, lo:hi]
            vh = v[:, :, lo:hi]
            s = jnp.einsum('bqd,bkd->bqk', qh, kh,
                           preferred_element_type=jnp.float32) * scale
            s = s - jnp.max(s, axis=-1, keepdims=True)
            p = jnp.exp(s)
            inv = pl.reciprocal(jnp.sum(p, axis=-1, keepdims=True), approx=True)
            p = p * inv
            heads.append(jnp.einsum('bqk,bkd->bqd', p, vh,
                                    preferred_element_type=jnp.float32))
        attn = jnp.concatenate(heads, axis=-1).reshape(N, D)          # (N, D)
        attn = jnp.dot(attn, wo, preferred_element_type=jnp.float32) + bo

        # ---- residual + LayerNorm 1 ----
        x = _layernorm(x + attn, ln1w, ln1b)

        # ---- feed-forward (relu) ----
        h1 = jnp.maximum(
            jnp.dot(x, w1, preferred_element_type=jnp.float32) + b1, 0.0)
        ff = jnp.dot(h1, w2, preferred_element_type=jnp.float32) + b2

        # ---- residual + LayerNorm 2 ----
        x = _layernorm(x + ff, ln2w, ln2b)

    # ---- final encoder LayerNorm ----
    x = _layernorm(x, fnw_ref[...], fnb_ref[...])
    o_ref[...] = x.reshape(B, S, D)


# ------------------------------ wrapper --------------------------------------
@jax.jit
def transformer_forward(src, temporal_input, params):
    B, S, D = src.shape
    # embedding gathers stay in plain JAX glue (data-dependent gather);
    # positional indices are arange(S) so the lookup is a simple slice.
    pos = params["pos_emb"][:S]                                      # (S, D)
    temp = jnp.take(params["temp_emb"], temporal_input, axis=0)      # (B, S, D)

    st = params["stacked"]
    return pl.pallas_call(
        fused_forward_kernel,
        out_shape=jax.ShapeDtypeStruct((B, S, D), jnp.float32),
        compiler_params=pltpu.CompilerParams(
            vmem_limit_bytes=32 * 1024 * 1024),
    )(src, pos, temp,
      st["wqkv"], st["bqkv"], st["wo"], st["bo"],
      st["ln1w"], st["ln1b"], st["w1"], st["b1"],
      st["w2"], st["b2"], st["ln2w"], st["ln2b"],
      params["norm_w"], params["norm_b"])


# --------------------------- parameter init -----------------------------------
def init_params(key):
    def w(key, shape, scale=0.02):
        return (scale * jax.random.normal(key, shape)).astype(jnp.float32)

    keys = iter(jax.random.split(key, 2 + NUM_LAYERS * 8))
    params = {
        "pos_emb": w(next(keys), (NUM_POSITIONAL, D_MODEL), 1.0),
        "temp_emb": w(next(keys), (NUM_TEMPORAL, D_MODEL), 1.0),
        "norm_w": jnp.ones((1, D_MODEL), jnp.float32),
        "norm_b": jnp.zeros((1, D_MODEL), jnp.float32),
    }

    # Per-layer weights, stored pre-transposed as (in, out) for `x @ W`,
    # then stacked along a leading (L, ...) axis so the fused kernel loads
    # every layer's weights into VMEM exactly once.
    acc = {name: [] for name in
           ("wqkv", "bqkv", "wo", "bo", "ln1w", "ln1b",
            "w1", "b1", "w2", "b2", "ln2w", "ln2b")}
    for _ in range(NUM_LAYERS):
        acc["wqkv"].append(w(next(keys), (D_MODEL, 3 * D_MODEL)))
        acc["bqkv"].append(w(next(keys), (1, 3 * D_MODEL)))
        acc["wo"].append(w(next(keys), (D_MODEL, D_MODEL)))
        acc["bo"].append(w(next(keys), (1, D_MODEL)))
        acc["ln1w"].append(jnp.ones((1, D_MODEL), jnp.float32))
        acc["ln1b"].append(jnp.zeros((1, D_MODEL), jnp.float32))
        acc["w1"].append(w(next(keys), (D_MODEL, DIM_FF)))
        acc["b1"].append(w(next(keys), (1, DIM_FF)))
        acc["w2"].append(w(next(keys), (DIM_FF, D_MODEL)))
        acc["b2"].append(w(next(keys), (1, D_MODEL)))
        acc["ln2w"].append(jnp.ones((1, D_MODEL), jnp.float32))
        acc["ln2b"].append(jnp.zeros((1, D_MODEL), jnp.float32))
    params["stacked"] = {k: jnp.stack(v, axis=0) for k, v in acc.items()}
    return params


# --------------------------------- main ---------------------------------------
if __name__ == "__main__":
    key = jax.random.PRNGKey(0)
    k_param, k_src, k_temp = jax.random.split(key, 3)

    params = init_params(k_param)
    src = jax.random.normal(k_src, (BATCH, SEQ, D_MODEL), dtype=jnp.float32)
    temporal_input = jax.random.randint(k_temp, (BATCH, SEQ), 0, NUM_TEMPORAL,
                                        dtype=jnp.int32)

    out = transformer_forward(src, temporal_input, params)
    out = jax.block_until_ready(out)
    assert out.shape == (BATCH, SEQ, D_MODEL)
    assert bool(jnp.all(jnp.isfinite(out)))
    print("KERNEL_OK")
</pallas_src>

<mosaic_0001>
module attributes {stable_mosaic.version = 11 : i64} {
  func.func @fused_forward_kernel(%arg0: memref<2x8x128xf32, #tpu.memory_space<vmem>>, %arg1: memref<8x128xf32, #tpu.memory_space<vmem>>, %arg2: memref<2x8x128xf32, #tpu.memory_space<vmem>>, %arg3: memref<2x128x384xf32, #tpu.memory_space<vmem>>, %arg4: memref<2x1x384xf32, #tpu.memory_space<vmem>>, %arg5: memref<2x128x128xf32, #tpu.memory_space<vmem>>, %arg6: memref<2x1x128xf32, #tpu.memory_space<vmem>>, %arg7: memref<2x1x128xf32, #tpu.memory_space<vmem>>, %arg8: memref<2x1x128xf32, #tpu.memory_space<vmem>>, %arg9: memref<2x128x256xf32, #tpu.memory_space<vmem>>, %arg10: memref<2x1x256xf32, #tpu.memory_space<vmem>>, %arg11: memref<2x256x128xf32, #tpu.memory_space<vmem>>, %arg12: memref<2x1x128xf32, #tpu.memory_space<vmem>>, %arg13: memref<2x1x128xf32, #tpu.memory_space<vmem>>, %arg14: memref<2x1x128xf32, #tpu.memory_space<vmem>>, %arg15: memref<1x128xf32, #tpu.memory_space<vmem>>, %arg16: memref<1x128xf32, #tpu.memory_space<vmem>>, %arg17: memref<2x8x128xf32, #tpu.memory_space<vmem>>) attributes {dimension_semantics = [], scalar_prefetch = 0 : i64, scratch_operands = 0 : i64, tpu.core_type = #tpu.core_type<tc>} {
    %c0 = arith.constant 0 : index
    %c0_0 = arith.constant 0 : index
    %c0_1 = arith.constant 0 : index
    %0 = vector.load %arg0[%c0, %c0_0, %c0_1] : memref<2x8x128xf32, #tpu.memory_space<vmem>>, vector<2x8x128xf32>
    %c0_2 = arith.constant 0 : index
    %c0_3 = arith.constant 0 : index
    %1 = vector.load %arg1[%c0_2, %c0_3] : memref<8x128xf32, #tpu.memory_space<vmem>>, vector<8x128xf32>
    %2 = vector.shape_cast %1 : vector<8x128xf32> to vector<1x8x128xf32>
    %3 = vector.broadcast %2 : vector<1x8x128xf32> to vector<2x8x128xf32>
    %4 = arith.addf %0, %3 : vector<2x8x128xf32>
    %c0_4 = arith.constant 0 : index
    %c0_5 = arith.constant 0 : index
    %c0_6 = arith.constant 0 : index
    %5 = vector.load %arg2[%c0_4, %c0_5, %c0_6] : memref<2x8x128xf32, #tpu.memory_space<vmem>>, vector<2x8x128xf32>
    %6 = arith.addf %4, %5 : vector<2x8x128xf32>
    %7 = vector.shape_cast %6 : vector<2x8x128xf32> to vector<16x128xf32>
    %c0_7 = arith.constant 0 : index
    %c0_8 = arith.constant 0 : index
    %c0_9 = arith.constant 0 : index
    %8 = vector.load %arg3[%c0_7, %c0_8, %c0_9] : memref<2x128x384xf32, #tpu.memory_space<vmem>>, vector<1x128x384xf32>
    %9 = vector.shape_cast %8 : vector<1x128x384xf32> to vector<128x384xf32>
    %c0_10 = arith.constant 0 : index
    %c0_11 = arith.constant 0 : index
    %c0_12 = arith.constant 0 : index
    %10 = vector.load %arg4[%c0_10, %c0_11, %c0_12] : memref<2x1x384xf32, #tpu.memory_space<vmem>>, vector<1x1x384xf32>
    %11 = vector.shape_cast %10 : vector<1x1x384xf32> to vector<1x384xf32>
    %c0_13 = arith.constant 0 : index
    %c0_14 = arith.constant 0 : index
    %c0_15 = arith.constant 0 : index
    %12 = vector.load %arg5[%c0_13, %c0_14, %c0_15] : memref<2x128x128xf32, #tpu.memory_space<vmem>>, vector<1x128x128xf32>
    %13 = vector.shape_cast %12 : vector<1x128x128xf32> to vector<128x128xf32>
    %c0_16 = arith.constant 0 : index
    %c0_17 = arith.constant 0 : index
    %c0_18 = arith.constant 0 : index
    %14 = vector.load %arg6[%c0_16, %c0_17, %c0_18] : memref<2x1x128xf32, #tpu.memory_space<vmem>>, vector<1x1x128xf32>
    %15 = vector.shape_cast %14 : vector<1x1x128xf32> to vector<1x128xf32>
    %c0_19 = arith.constant 0 : index
    %c0_20 = arith.constant 0 : index
    %c0_21 = arith.constant 0 : index
    %16 = vector.load %arg7[%c0_19, %c0_20, %c0_21] : memref<2x1x128xf32, #tpu.memory_space<vmem>>, vector<1x1x128xf32>
    %17 = vector.shape_cast %16 : vector<1x1x128xf32> to vector<1x128xf32>
    %c0_22 = arith.constant 0 : index
    %c0_23 = arith.constant 0 : index
    %c0_24 = arith.constant 0 : index
    %18 = vector.load %arg8[%c0_22, %c0_23, %c0_24] : memref<2x1x128xf32, #tpu.memory_space<vmem>>, vector<1x1x128xf32>
    %19 = vector.shape_cast %18 : vector<1x1x128xf32> to vector<1x128xf32>
    %c0_25 = arith.constant 0 : index
    %c0_26 = arith.constant 0 : index
    %c0_27 = arith.constant 0 : index
    %20 = vector.load %arg9[%c0_25, %c0_26, %c0_27] : memref<2x128x256xf32, #tpu.memory_space<vmem>>, vector<1x128x256xf32>
    %21 = vector.shape_cast %20 : vector<1x128x256xf32> to vector<128x256xf32>
    %c0_28 = arith.constant 0 : index
    %c0_29 = arith.constant 0 : index
    %c0_30 = arith.constant 0 : index
    %22 = vector.load %arg10[%c0_28, %c0_29, %c0_30] : memref<2x1x256xf32, #tpu.memory_space<vmem>>, vector<1x1x256xf32>
    %23 = vector.shape_cast %22 : vector<1x1x256xf32> to vector<1x256xf32>
    %c0_31 = arith.constant 0 : index
    %c0_32 = arith.constant 0 : index
    %c0_33 = arith.constant 0 : index
    %24 = vector.load %arg11[%c0_31, %c0_32, %c0_33] : memref<2x256x128xf32, #tpu.memory_space<vmem>>, vector<1x256x128xf32>
    %25 = vector.shape_cast %24 : vector<1x256x128xf32> to vector<256x128xf32>
    %c0_34 = arith.constant 0 : index
    %c0_35 = arith.constant 0 : index
    %c0_36 = arith.constant 0 : index
    %26 = vector.load %arg12[%c0_34, %c0_35, %c0_36] : memref<2x1x128xf32, #tpu.memory_space<vmem>>, vector<1x1x128xf32>
    %27 = vector.shape_cast %26 : vector<1x1x128xf32> to vector<1x128xf32>
    %c0_37 = arith.constant 0 : index
    %c0_38 = arith.constant 0 : index
    %c0_39 = arith.constant 0 : index
    %28 = vector.load %arg13[%c0_37, %c0_38, %c0_39] : memref<2x1x128xf32, #tpu.memory_space<vmem>>, vector<1x1x128xf32>
    %29 = vector.shape_cast %28 : vector<1x1x128xf32> to vector<1x128xf32>
    %c0_40 = arith.constant 0 : index
    %c0_41 = arith.constant 0 : index
    %c0_42 = arith.constant 0 : index
    %30 = vector.load %arg14[%c0_40, %c0_41, %c0_42] : memref<2x1x128xf32, #tpu.memory_space<vmem>>, vector<1x1x128xf32>
    %31 = vector.shape_cast %30 : vector<1x1x128xf32> to vector<1x128xf32>
    %cst = arith.constant dense<0.000000e+00> : vector<16x384xf32>
    %32 = tpu.matmul %7, %9, %cst {dimension_numbers = #tpu.dot_dimension_numbers<[1], [0], [0], [1], [0, 0, 1, 1], [], []>} : vector<16x128xf32>, vector<128x384xf32>, vector<16x384xf32> -> vector<16x384xf32>
    %33 = vector.broadcast %11 : vector<1x384xf32> to vector<16x384xf32>
    %34 = arith.addf %32, %33 : vector<16x384xf32>
    %35 = vector.extract_strided_slice %34 {offsets = [0, 0], sizes = [16, 128], strides = [1, 1]} : vector<16x384xf32> to vector<16x128xf32>
    %36 = vector.shape_cast %35 : vector<16x128xf32> to vector<2x8x128xf32>
    %37 = vector.extract_strided_slice %34 {offsets = [0, 128], sizes = [16, 128], strides = [1, 1]} : vector<16x384xf32> to vector<16x128xf32>
    %38 = vector.shape_cast %37 : vector<16x128xf32> to vector<2x8x128xf32>
    %39 = vector.extract_strided_slice %34 {offsets = [0, 256], sizes = [16, 128], strides = [1, 1]} : vector<16x384xf32> to vector<16x128xf32>
    %40 = vector.shape_cast %39 : vector<16x128xf32> to vector<2x8x128xf32>
    %41 = vector.extract_strided_slice %36 {offsets = [0, 0, 0], sizes = [2, 8, 32], strides = [1, 1, 1]} : vector<2x8x128xf32> to vector<2x8x32xf32>
    %42 = vector.extract_strided_slice %38 {offsets = [0, 0, 0], sizes = [2, 8, 32], strides = [1, 1, 1]} : vector<2x8x128xf32> to vector<2x8x32xf32>
    %43 = vector.extract_strided_slice %40 {offsets = [0, 0, 0], sizes = [2, 8, 32], strides = [1, 1, 1]} : vector<2x8x128xf32> to vector<2x8x32xf32>
    "tpu.trace_start"() <{level = 10 : i32, message = "bqd,bkd->bqk"}> : () -> ()
    %cst_43 = arith.constant dense<0.000000e+00> : vector<2x8x8xf32>
    %44 = tpu.matmul %41, %42, %cst_43 {dimension_numbers = #tpu.dot_dimension_numbers<[2], [2], [1], [1], [0, 0, 0, 1, 1, 1], [0], [0]>} : vector<2x8x32xf32>, vector<2x8x32xf32>, vector<2x8x8xf32> -> vector<2x8x8xf32>
    "tpu.trace_stop"() : () -> ()
    %cst_44 = arith.constant 0.176776692 : f32
    %45 = vector.broadcast %cst_44 : f32 to vector<2x8x8xf32>
    %46 = arith.mulf %44, %45 : vector<2x8x8xf32>
    %cst_45 = arith.constant dense<0xFF800000> : vector<2x8xf32>
    %47 = vector.multi_reduction <maximumf>, %46, %cst_45 [2] : vector<2x8x8xf32> to vector<2x8xf32>
    %48 = vector.shape_cast %47 : vector<2x8xf32> to vector<2x8x1xf32>
    %49 = vector.broadcast %48 : vector<2x8x1xf32> to vector<2x8x8xf32>
    %50 = arith.subf %46, %49 : vector<2x8x8xf32>
    %51 = math.exp %50 : vector<2x8x8xf32>
    %cst_46 = arith.constant dense<0.000000e+00> : vector<2x8xf32>
    %52 = vector.multi_reduction <add>, %51, %cst_46 [2] : vector<2x8x8xf32> to vector<2x8xf32>
    %53 = vector.shape_cast %52 : vector<2x8xf32> to vector<2x8x1xf32>
    %54 = tpu.reciprocal %53 {approx = true} : vector<2x8x1xf32> -> vector<2x8x1xf32>
    %55 = vector.broadcast %54 : vector<2x8x1xf32> to vector<2x8x8xf32>
    %56 = arith.mulf %51, %55 : vector<2x8x8xf32>
    "tpu.trace_start"() <{level = 10 : i32, message = "bqk,bkd->bqd"}> : () -> ()
    %cst_47 = arith.constant dense<0.000000e+00> : vector<2x8x32xf32>
    %57 = tpu.matmul %56, %43, %cst_47 {dimension_numbers = #tpu.dot_dimension_numbers<[2], [1], [1], [2], [0, 0, 0, 1, 1, 2], [0], [0]>} : vector<2x8x8xf32>, vector<2x8x32xf32>, vector<2x8x32xf32> -> vector<2x8x32xf32>
    "tpu.trace_stop"() : () -> ()
    %58 = vector.extract_strided_slice %36 {offsets = [0, 0, 32], sizes = [2, 8, 32], strides = [1, 1, 1]} : vector<2x8x128xf32> to vector<2x8x32xf32>
    %59 = vector.extract_strided_slice %38 {offsets = [0, 0, 32], sizes = [2, 8, 32], strides = [1, 1, 1]} : vector<2x8x128xf32> to vector<2x8x32xf32>
    %60 = vector.extract_strided_slice %40 {offsets = [0, 0, 32], sizes = [2, 8, 32], strides = [1, 1, 1]} : vector<2x8x128xf32> to vector<2x8x32xf32>
    "tpu.trace_start"() <{level = 10 : i32, message = "bqd,bkd->bqk"}> : () -> ()
    %cst_48 = arith.constant dense<0.000000e+00> : vector<2x8x8xf32>
    %61 = tpu.matmul %58, %59, %cst_48 {dimension_numbers = #tpu.dot_dimension_numbers<[2], [2], [1], [1], [0, 0, 0, 1, 1, 1], [0], [0]>} : vector<2x8x32xf32>, vector<2x8x32xf32>, vector<2x8x8xf32> -> vector<2x8x8xf32>
    "tpu.trace_stop"() : () -> ()
    %cst_49 = arith.constant 0.176776692 : f32
    %62 = vector.broadcast %cst_49 : f32 to vector<2x8x8xf32>
    %63 = arith.mulf %61, %62 : vector<2x8x8xf32>
    %cst_50 = arith.constant dense<0xFF800000> : vector<2x8xf32>
    %64 = vector.multi_reduction <maximumf>, %63, %cst_50 [2] : vector<2x8x8xf32> to vector<2x8xf32>
    %65 = vector.shape_cast %64 : vector<2x8xf32> to vector<2x8x1xf32>
    %66 = vector.broadcast %65 : vector<2x8x1xf32> to vector<2x8x8xf32>
    %67 = arith.subf %63, %66 : vector<2x8x8xf32>
    %68 = math.exp %67 : vector<2x8x8xf32>
    %cst_51 = arith.constant dense<0.000000e+00> : vector<2x8xf32>
    %69 = vector.multi_reduction <add>, %68, %cst_51 [2] : vector<2x8x8xf32> to vector<2x8xf32>
    %70 = vector.shape_cast %69 : vector<2x8xf32> to vector<2x8x1xf32>
    %71 = tpu.reciprocal %70 {approx = true} : vector<2x8x1xf32> -> vector<2x8x1xf32>
    %72 = vector.broadcast %71 : vector<2x8x1xf32> to vector<2x8x8xf32>
    %73 = arith.mulf %68, %72 : vector<2x8x8xf32>
    "tpu.trace_start"() <{level = 10 : i32, message = "bqk,bkd->bqd"}> : () -> ()
    %cst_52 = arith.constant dense<0.000000e+00> : vector<2x8x32xf32>
    %74 = tpu.matmul %73, %60, %cst_52 {dimension_numbers = #tpu.dot_dimension_numbers<[2], [1], [1], [2], [0, 0, 0, 1, 1, 2], [0], [0]>} : vector<2x8x8xf32>, vector<2x8x32xf32>, vector<2x8x32xf32> -> vector<2x8x32xf32>
    "tpu.trace_stop"() : () -> ()
    %75 = vector.extract_strided_slice %36 {offsets = [0, 0, 64], sizes = [2, 8, 32], strides = [1, 1, 1]} : vector<2x8x128xf32> to vector<2x8x32xf32>
    %76 = vector.extract_strided_slice %38 {offsets = [0, 0, 64], sizes = [2, 8, 32], strides = [1, 1, 1]} : vector<2x8x128xf32> to vector<2x8x32xf32>
    %77 = vector.extract_strided_slice %40 {offsets = [0, 0, 64], sizes = [2, 8, 32], strides = [1, 1, 1]} : vector<2x8x128xf32> to vector<2x8x32xf32>
    "tpu.trace_start"() <{level = 10 : i32, message = "bqd,bkd->bqk"}> : () -> ()
    %cst_53 = arith.constant dense<0.000000e+00> : vector<2x8x8xf32>
    %78 = tpu.matmul %75, %76, %cst_53 {dimension_numbers = #tpu.dot_dimension_numbers<[2], [2], [1], [1], [0, 0, 0, 1, 1, 1], [0], [0]>} : vector<2x8x32xf32>, vector<2x8x32xf32>, vector<2x8x8xf32> -> vector<2x8x8xf32>
    "tpu.trace_stop"() : () -> ()
    %cst_54 = arith.constant 0.176776692 : f32
    %79 = vector.broadcast %cst_54 : f32 to vector<2x8x8xf32>
    %80 = arith.mulf %78, %79 : vector<2x8x8xf32>
    %cst_55 = arith.constant dense<0xFF800000> : vector<2x8xf32>
    %81 = vector.multi_reduction <maximumf>, %80, %cst_55 [2] : vector<2x8x8xf32> to vector<2x8xf32>
    %82 = vector.shape_cast %81 : vector<2x8xf32> to vector<2x8x1xf32>
    %83 = vector.broadcast %82 : vector<2x8x1xf32> to vector<2x8x8xf32>
    %84 = arith.subf %80, %83 : vector<2x8x8xf32>
    %85 = math.exp %84 : vector<2x8x8xf32>
    %cst_56 = arith.constant dense<0.000000e+00> : vector<2x8xf32>
    %86 = vector.multi_reduction <add>, %85, %cst_56 [2] : vector<2x8x8xf32> to vector<2x8xf32>
    %87 = vector.shape_cast %86 : vector<2x8xf32> to vector<2x8x1xf32>
    %88 = tpu.reciprocal %87 {approx = true} : vector<2x8x1xf32> -> vector<2x8x1xf32>
    %89 = vector.broadcast %88 : vector<2x8x1xf32> to vector<2x8x8xf32>
    %90 = arith.mulf %85, %89 : vector<2x8x8xf32>
    "tpu.trace_start"() <{level = 10 : i32, message = "bqk,bkd->bqd"}> : () -> ()
    %cst_57 = arith.constant dense<0.000000e+00> : vector<2x8x32xf32>
    %91 = tpu.matmul %90, %77, %cst_57 {dimension_numbers = #tpu.dot_dimension_numbers<[2], [1], [1], [2], [0, 0, 0, 1, 1, 2], [0], [0]>} : vector<2x8x8xf32>, vector<2x8x32xf32>, vector<2x8x32xf32> -> vector<2x8x32xf32>
    "tpu.trace_stop"() : () -> ()
    %92 = vector.extract_strided_slice %36 {offsets = [0, 0, 96], sizes = [2, 8, 32], strides = [1, 1, 1]} : vector<2x8x128xf32> to vector<2x8x32xf32>
    %93 = vector.extract_strided_slice %38 {offsets = [0, 0, 96], sizes = [2, 8, 32], strides = [1, 1, 1]} : vector<2x8x128xf32> to vector<2x8x32xf32>
    %94 = vector.extract_strided_slice %40 {offsets = [0, 0, 96], sizes = [2, 8, 32], strides = [1, 1, 1]} : vector<2x8x128xf32> to vector<2x8x32xf32>
    "tpu.trace_start"() <{level = 10 : i32, message = "bqd,bkd->bqk"}> : () -> ()
    %cst_58 = arith.constant dense<0.000000e+00> : vector<2x8x8xf32>
    %95 = tpu.matmul %92, %93, %cst_58 {dimension_numbers = #tpu.dot_dimension_numbers<[2], [2], [1], [1], [0, 0, 0, 1, 1, 1], [0], [0]>} : vector<2x8x32xf32>, vector<2x8x32xf32>, vector<2x8x8xf32> -> vector<2x8x8xf32>
    "tpu.trace_stop"() : () -> ()
    %cst_59 = arith.constant 0.176776692 : f32
    %96 = vector.broadcast %cst_59 : f32 to vector<2x8x8xf32>
    %97 = arith.mulf %95, %96 : vector<2x8x8xf32>
    %cst_60 = arith.constant dense<0xFF800000> : vector<2x8xf32>
    %98 = vector.multi_reduction <maximumf>, %97, %cst_60 [2] : vector<2x8x8xf32> to vector<2x8xf32>
    %99 = vector.shape_cast %98 : vector<2x8xf32> to vector<2x8x1xf32>
    %100 = vector.broadcast %99 : vector<2x8x1xf32> to vector<2x8x8xf32>
    %101 = arith.subf %97, %100 : vector<2x8x8xf32>
    %102 = math.exp %101 : vector<2x8x8xf32>
    %cst_61 = arith.constant dense<0.000000e+00> : vector<2x8xf32>
    %103 = vector.multi_reduction <add>, %102, %cst_61 [2] : vector<2x8x8xf32> to vector<2x8xf32>
    %104 = vector.shape_cast %103 : vector<2x8xf32> to vector<2x8x1xf32>
    %105 = tpu.reciprocal %104 {approx = true} : vector<2x8x1xf32> -> vector<2x8x1xf32>
    %106 = vector.broadcast %105 : vector<2x8x1xf32> to vector<2x8x8xf32>
    %107 = arith.mulf %102, %106 : vector<2x8x8xf32>
    "tpu.trace_start"() <{level = 10 : i32, message = "bqk,bkd->bqd"}> : () -> ()
    %cst_62 = arith.constant dense<0.000000e+00> : vector<2x8x32xf32>
    %108 = tpu.matmul %107, %94, %cst_62 {dimension_numbers = #tpu.dot_dimension_numbers<[2], [1], [1], [2], [0, 0, 0, 1, 1, 2], [0], [0]>} : vector<2x8x8xf32>, vector<2x8x32xf32>, vector<2x8x32xf32> -> vector<2x8x32xf32>
    "tpu.trace_stop"() : () -> ()
    %109 = tpu.concatenate %57, %74, %91, %108 in 2 : vector<2x8x32xf32>, vector<2x8x32xf32>, vector<2x8x32xf32>, vector<2x8x32xf32> -> vector<2x8x128xf32>
    %110 = vector.shape_cast %109 : vector<2x8x128xf32> to vector<16x128xf32>
    %cst_63 = arith.constant dense<0.000000e+00> : vector<16x128xf32>
    %111 = tpu.matmul %110, %13, %cst_63 {dimension_numbers = #tpu.dot_dimension_numbers<[1], [0], [0], [1], [0, 0, 1, 1], [], []>} : vector<16x128xf32>, vector<128x128xf32>, vector<16x128xf32> -> vector<16x128xf32>
    %112 = vector.broadcast %15 : vector<1x128xf32> to vector<16x128xf32>
    %113 = arith.addf %111, %112 : vector<16x128xf32>
    %114 = arith.addf %7, %113 : vector<16x128xf32>
    %cst_64 = arith.constant dense<0.000000e+00> : vector<16xf32>
    %115 = vector.multi_reduction <add>, %114, %cst_64 [1] : vector<16x128xf32> to vector<16xf32>
    %116 = vector.shape_cast %115 : vector<16xf32> to vector<16x1xf32>
    %cst_65 = arith.constant 1.280000e+02 : f32
    %117 = vector.broadcast %cst_65 : f32 to vector<16x1xf32>
    %118 = arith.divf %116, %117 : vector<16x1xf32>
    %119 = vector.broadcast %118 : vector<16x1xf32> to vector<16x128xf32>
    %120 = arith.subf %114, %119 : vector<16x128xf32>
    %121 = arith.mulf %120, %120 : vector<16x128xf32>
    %cst_66 = arith.constant dense<0.000000e+00> : vector<16xf32>
    %122 = vector.multi_reduction <add>, %121, %cst_66 [1] : vector<16x128xf32> to vector<16xf32>
    %123 = vector.shape_cast %122 : vector<16xf32> to vector<16x1xf32>
    %cst_67 = arith.constant 1.280000e+02 : f32
    %124 = vector.broadcast %cst_67 : f32 to vector<16x1xf32>
    %125 = arith.divf %123, %124 : vector<16x1xf32>
    %126 = vector.broadcast %118 : vector<16x1xf32> to vector<16x128xf32>
    %127 = arith.subf %114, %126 : vector<16x128xf32>
    %cst_68 = arith.constant 9.99999974E-6 : f32
    %128 = vector.broadcast %cst_68 : f32 to vector<16x1xf32>
    %129 = arith.addf %125, %128 : vector<16x1xf32>
    %130 = math.rsqrt %129 : vector<16x1xf32>
    %131 = vector.broadcast %130 : vector<16x1xf32> to vector<16x128xf32>
    %132 = arith.mulf %127, %131 : vector<16x128xf32>
    %133 = vector.broadcast %17 : vector<1x128xf32> to vector<16x128xf32>
    %134 = arith.mulf %132, %133 : vector<16x128xf32>
    %135 = vector.broadcast %19 : vector<1x128xf32> to vector<16x128xf32>
    %136 = arith.addf %134, %135 : vector<16x128xf32>
    %cst_69 = arith.constant dense<0.000000e+00> : vector<16x256xf32>
    %137 = tpu.matmul %136, %21, %cst_69 {dimension_numbers = #tpu.dot_dimension_numbers<[1], [0], [0], [1], [0, 0, 1, 1], [], []>} : vector<16x128xf32>, vector<128x256xf32>, vector<16x256xf32> -> vector<16x256xf32>
    %138 = vector.broadcast %23 : vector<1x256xf32> to vector<16x256xf32>
    %139 = arith.addf %137, %138 : vector<16x256xf32>
    %cst_70 = arith.constant 0.000000e+00 : f32
    %140 = vector.broadcast %cst_70 : f32 to vector<16x256xf32>
    %141 = arith.maximumf %139, %140 : vector<16x256xf32>
    %cst_71 = arith.constant dense<0.000000e+00> : vector<16x128xf32>
    %142 = tpu.matmul %141, %25, %cst_71 {dimension_numbers = #tpu.dot_dimension_numbers<[1], [0], [0], [1], [0, 0, 1, 1], [], []>} : vector<16x256xf32>, vector<256x128xf32>, vector<16x128xf32> -> vector<16x128xf32>
    %143 = vector.broadcast %27 : vector<1x128xf32> to vector<16x128xf32>
    %144 = arith.addf %142, %143 : vector<16x128xf32>
    %145 = arith.addf %136, %144 : vector<16x128xf32>
    %cst_72 = arith.constant dense<0.000000e+00> : vector<16xf32>
    %146 = vector.multi_reduction <add>, %145, %cst_72 [1] : vector<16x128xf32> to vector<16xf32>
    %147 = vector.shape_cast %146 : vector<16xf32> to vector<16x1xf32>
    %cst_73 = arith.constant 1.280000e+02 : f32
    %148 = vector.broadcast %cst_73 : f32 to vector<16x1xf32>
    %149 = arith.divf %147, %148 : vector<16x1xf32>
    %150 = vector.broadcast %149 : vector<16x1xf32> to vector<16x128xf32>
    %151 = arith.subf %145, %150 : vector<16x128xf32>
    %152 = arith.mulf %151, %151 : vector<16x128xf32>
    %cst_74 = arith.constant dense<0.000000e+00> : vector<16xf32>
    %153 = vector.multi_reduction <add>, %152, %cst_74 [1] : vector<16x128xf32> to vector<16xf32>
    %154 = vector.shape_cast %153 : vector<16xf32> to vector<16x1xf32>
    %cst_75 = arith.constant 1.280000e+02 : f32
    %155 = vector.broadcast %cst_75 : f32 to vector<16x1xf32>
    %156 = arith.divf %154, %155 : vector<16x1xf32>
    %157 = vector.broadcast %149 : vector<16x1xf32> to vector<16x128xf32>
    %158 = arith.subf %145, %157 : vector<16x128xf32>
    %cst_76 = arith.constant 9.99999974E-6 : f32
    %159 = vector.broadcast %cst_76 : f32 to vector<16x1xf32>
    %160 = arith.addf %156, %159 : vector<16x1xf32>
    %161 = math.rsqrt %160 : vector<16x1xf32>
    %162 = vector.broadcast %161 : vector<16x1xf32> to vector<16x128xf32>
    %163 = arith.mulf %158, %162 : vector<16x128xf32>
    %164 = vector.broadcast %29 : vector<1x128xf32> to vector<16x128xf32>
    %165 = arith.mulf %163, %164 : vector<16x128xf32>
    %166 = vector.broadcast %31 : vector<1x128xf32> to vector<16x128xf32>
    %167 = arith.addf %165, %166 : vector<16x128xf32>
    %c1 = arith.constant 1 : index
    %c0_77 = arith.constant 0 : index
    %c0_78 = arith.constant 0 : index
    %168 = vector.load %arg3[%c1, %c0_77, %c0_78] : memref<2x128x384xf32, #tpu.memory_space<vmem>>, vector<1x128x384xf32>
    %169 = vector.shape_cast %168 : vector<1x128x384xf32> to vector<128x384xf32>
    %c1_79 = arith.constant 1 : index
    %c0_80 = arith.constant 0 : index
    %c0_81 = arith.constant 0 : index
    %170 = vector.load %arg4[%c1_79, %c0_80, %c0_81] : memref<2x1x384xf32, #tpu.memory_space<vmem>>, vector<1x1x384xf32>
    %171 = vector.shape_cast %170 : vector<1x1x384xf32> to vector<1x384xf32>
    %c1_82 = arith.constant 1 : index
    %c0_83 = arith.constant 0 : index
    %c0_84 = arith.constant 0 : index
    %172 = vector.load %arg5[%c1_82, %c0_83, %c0_84] : memref<2x128x128xf32, #tpu.memory_space<vmem>>, vector<1x128x128xf32>
    %173 = vector.shape_cast %172 : vector<1x128x128xf32> to vector<128x128xf32>
    %c1_85 = arith.constant 1 : index
    %c0_86 = arith.constant 0 : index
    %c0_87 = arith.constant 0 : index
    %174 = vector.load %arg6[%c1_85, %c0_86, %c0_87] : memref<2x1x128xf32, #tpu.memory_space<vmem>>, vector<1x1x128xf32>
    %175 = vector.shape_cast %174 : vector<1x1x128xf32> to vector<1x128xf32>
    %c1_88 = arith.constant 1 : index
    %c0_89 = arith.constant 0 : index
    %c0_90 = arith.constant 0 : index
    %176 = vector.load %arg7[%c1_88, %c0_89, %c0_90] : memref<2x1x128xf32, #tpu.memory_space<vmem>>, vector<1x1x128xf32>
    %177 = vector.shape_cast %176 : vector<1x1x128xf32> to vector<1x128xf32>
    %c1_91 = arith.constant 1 : index
    %c0_92 = arith.constant 0 : index
    %c0_93 = arith.constant 0 : index
    %178 = vector.load %arg8[%c1_91, %c0_92, %c0_93] : memref<2x1x128xf32, #tpu.memory_space<vmem>>, vector<1x1x128xf32>
    %179 = vector.shape_cast %178 : vector<1x1x128xf32> to vector<1x128xf32>
    %c1_94 = arith.constant 1 : index
    %c0_95 = arith.constant 0 : index
    %c0_96 = arith.constant 0 : index
    %180 = vector.load %arg9[%c1_94, %c0_95, %c0_96] : memref<2x128x256xf32, #tpu.memory_space<vmem>>, vector<1x128x256xf32>
    %181 = vector.shape_cast %180 : vector<1x128x256xf32> to vector<128x256xf32>
    %c1_97 = arith.constant 1 : index
    %c0_98 = arith.constant 0 : index
    %c0_99 = arith.constant 0 : index
    %182 = vector.load %arg10[%c1_97, %c0_98, %c0_99] : memref<2x1x256xf32, #tpu.memory_space<vmem>>, vector<1x1x256xf32>
    %183 = vector.shape_cast %182 : vector<1x1x256xf32> to vector<1x256xf32>
    %c1_100 = arith.constant 1 : index
    %c0_101 = arith.constant 0 : index
    %c0_102 = arith.constant 0 : index
    %184 = vector.load %arg11[%c1_100, %c0_101, %c0_102] : memref<2x256x128xf32, #tpu.memory_space<vmem>>, vector<1x256x128xf32>
    %185 = vector.shape_cast %184 : vector<1x256x128xf32> to vector<256x128xf32>
    %c1_103 = arith.constant 1 : index
    %c0_104 = arith.constant 0 : index
    %c0_105 = arith.constant 0 : index
    %186 = vector.load %arg12[%c1_103, %c0_104, %c0_105] : memref<2x1x128xf32, #tpu.memory_space<vmem>>, vector<1x1x128xf32>
    %187 = vector.shape_cast %186 : vector<1x1x128xf32> to vector<1x128xf32>
    %c1_106 = arith.constant 1 : index
    %c0_107 = arith.constant 0 : index
    %c0_108 = arith.constant 0 : index
    %188 = vector.load %arg13[%c1_106, %c0_107, %c0_108] : memref<2x1x128xf32, #tpu.memory_space<vmem>>, vector<1x1x128xf32>
    %189 = vector.shape_cast %188 : vector<1x1x128xf32> to vector<1x128xf32>
    %c1_109 = arith.constant 1 : index
    %c0_110 = arith.constant 0 : index
    %c0_111 = arith.constant 0 : index
    %190 = vector.load %arg14[%c1_109, %c0_110, %c0_111] : memref<2x1x128xf32, #tpu.memory_space<vmem>>, vector<1x1x128xf32>
    %191 = vector.shape_cast %190 : vector<1x1x128xf32> to vector<1x128xf32>
    %cst_112 = arith.constant dense<0.000000e+00> : vector<16x384xf32>
    %192 = tpu.matmul %167, %169, %cst_112 {dimension_numbers = #tpu.dot_dimension_numbers<[1], [0], [0], [1], [0, 0, 1, 1], [], []>} : vector<16x128xf32>, vector<128x384xf32>, vector<16x384xf32> -> vector<16x384xf32>
    %193 = vector.broadcast %171 : vector<1x384xf32> to vector<16x384xf32>
    %194 = arith.addf %192, %193 : vector<16x384xf32>
    %195 = vector.extract_strided_slice %194 {offsets = [0, 0], sizes = [16, 128], strides = [1, 1]} : vector<16x384xf32> to vector<16x128xf32>
    %196 = vector.shape_cast %195 : vector<16x128xf32> to vector<2x8x128xf32>
    %197 = vector.extract_strided_slice %194 {offsets = [0, 128], sizes = [16, 128], strides = [1, 1]} : vector<16x384xf32> to vector<16x128xf32>
    %198 = vector.shape_cast %197 : vector<16x128xf32> to vector<2x8x128xf32>
    %199 = vector.extract_strided_slice %194 {offsets = [0, 256], sizes = [16, 128], strides = [1, 1]} : vector<16x384xf32> to vector<16x128xf32>
    %200 = vector.shape_cast %199 : vector<16x128xf32> to vector<2x8x128xf32>
    %201 = vector.extract_strided_slice %196 {offsets = [0, 0, 0], sizes = [2, 8, 32], strides = [1, 1, 1]} : vector<2x8x128xf32> to vector<2x8x32xf32>
    %202 = vector.extract_strided_slice %198 {offsets = [0, 0, 0], sizes = [2, 8, 32], strides = [1, 1, 1]} : vector<2x8x128xf32> to vector<2x8x32xf32>
    %203 = vector.extract_strided_slice %200 {offsets = [0, 0, 0], sizes = [2, 8, 32], strides = [1, 1, 1]} : vector<2x8x128xf32> to vector<2x8x32xf32>
    "tpu.trace_start"() <{level = 10 : i32, message = "bqd,bkd->bqk"}> : () -> ()
    %cst_113 = arith.constant dense<0.000000e+00> : vector<2x8x8xf32>
    %204 = tpu.matmul %201, %202, %cst_113 {dimension_numbers = #tpu.dot_dimension_numbers<[2], [2], [1], [1], [0, 0, 0, 1, 1, 1], [0], [0]>} : vector<2x8x32xf32>, vector<2x8x32xf32>, vector<2x8x8xf32> -> vector<2x8x8xf32>
    "tpu.trace_stop"() : () -> ()
    %cst_114 = arith.constant 0.176776692 : f32
    %205 = vector.broadcast %cst_114 : f32 to vector<2x8x8xf32>
    %206 = arith.mulf %204, %205 : vector<2x8x8xf32>
    %cst_115 = arith.constant dense<0xFF800000> : vector<2x8xf32>
    %207 = vector.multi_reduction <maximumf>, %206, %cst_115 [2] : vector<2x8x8xf32> to vector<2x8xf32>
    %208 = vector.shape_cast %207 : vector<2x8xf32> to vector<2x8x1xf32>
    %209 = vector.broadcast %208 : vector<2x8x1xf32> to vector<2x8x8xf32>
    %210 = arith.subf %206, %209 : vector<2x8x8xf32>
    %211 = math.exp %210 : vector<2x8x8xf32>
    %cst_116 = arith.constant dense<0.000000e+00> : vector<2x8xf32>
    %212 = vector.multi_reduction <add>, %211, %cst_116 [2] : vector<2x8x8xf32> to vector<2x8xf32>
    %213 = vector.shape_cast %212 : vector<2x8xf32> to vector<2x8x1xf32>
    %214 = tpu.reciprocal %213 {approx = true} : vector<2x8x1xf32> -> vector<2x8x1xf32>
    %215 = vector.broadcast %214 : vector<2x8x1xf32> to vector<2x8x8xf32>
    %216 = arith.mulf %211, %215 : vector<2x8x8xf32>
    "tpu.trace_start"() <{level = 10 : i32, message = "bqk,bkd->bqd"}> : () -> ()
    %cst_117 = arith.constant dense<0.000000e+00> : vector<2x8x32xf32>
    %217 = tpu.matmul %216, %203, %cst_117 {dimension_numbers = #tpu.dot_dimension_numbers<[2], [1], [1], [2], [0, 0, 0, 1, 1, 2], [0], [0]>} : vector<2x8x8xf32>, vector<2x8x32xf32>, vector<2x8x32xf32> -> vector<2x8x32xf32>
    "tpu.trace_stop"() : () -> ()
    %218 = vector.extract_strided_slice %196 {offsets = [0, 0, 32], sizes = [2, 8, 32], strides = [1, 1, 1]} : vector<2x8x128xf32> to vector<2x8x32xf32>
    %219 = vector.extract_strided_slice %198 {offsets = [0, 0, 32], sizes = [2, 8, 32], strides = [1, 1, 1]} : vector<2x8x128xf32> to vector<2x8x32xf32>
    %220 = vector.extract_strided_slice %200 {offsets = [0, 0, 32], sizes = [2, 8, 32], strides = [1, 1, 1]} : vector<2x8x128xf32> to vector<2x8x32xf32>
    "tpu.trace_start"() <{level = 10 : i32, message = "bqd,bkd->bqk"}> : () -> ()
    %cst_118 = arith.constant dense<0.000000e+00> : vector<2x8x8xf32>
    %221 = tpu.matmul %218, %219, %cst_118 {dimension_numbers = #tpu.dot_dimension_numbers<[2], [2], [1], [1], [0, 0, 0, 1, 1, 1], [0], [0]>} : vector<2x8x32xf32>, vector<2x8x32xf32>, vector<2x8x8xf32> -> vector<2x8x8xf32>
    "tpu.trace_stop"() : () -> ()
    %cst_119 = arith.constant 0.176776692 : f32
    %222 = vector.broadcast %cst_119 : f32 to vector<2x8x8xf32>
    %223 = arith.mulf %221, %222 : vector<2x8x8xf32>
    %cst_120 = arith.constant dense<0xFF800000> : vector<2x8xf32>
    %224 = vector.multi_reduction <maximumf>, %223, %cst_120 [2] : vector<2x8x8xf32> to vector<2x8xf32>
    %225 = vector.shape_cast %224 : vector<2x8xf32> to vector<2x8x1xf32>
    %226 = vector.broadcast %225 : vector<2x8x1xf32> to vector<2x8x8xf32>
    %227 = arith.subf %223, %226 : vector<2x8x8xf32>
    %228 = math.exp %227 : vector<2x8x8xf32>
    %cst_121 = arith.constant dense<0.000000e+00> : vector<2x8xf32>
    %229 = vector.multi_reduction <add>, %228, %cst_121 [2] : vector<2x8x8xf32> to vector<2x8xf32>
    %230 = vector.shape_cast %229 : vector<2x8xf32> to vector<2x8x1xf32>
    %231 = tpu.reciprocal %230 {approx = true} : vector<2x8x1xf32> -> vector<2x8x1xf32>
    %232 = vector.broadcast %231 : vector<2x8x1xf32> to vector<2x8x8xf32>
    %233 = arith.mulf %228, %232 : vector<2x8x8xf32>
    "tpu.trace_start"() <{level = 10 : i32, message = "bqk,bkd->bqd"}> : () -> ()
    %cst_122 = arith.constant dense<0.000000e+00> : vector<2x8x32xf32>
    %234 = tpu.matmul %233, %220, %cst_122 {dimension_numbers = #tpu.dot_dimension_numbers<[2], [1], [1], [2], [0, 0, 0, 1, 1, 2], [0], [0]>} : vector<2x8x8xf32>, vector<2x8x32xf32>, vector<2x8x32xf32> -> vector<2x8x32xf32>
    "tpu.trace_stop"() : () -> ()
    %235 = vector.extract_strided_slice %196 {offsets = [0, 0, 64], sizes = [2, 8, 32], strides = [1, 1, 1]} : vector<2x8x128xf32> to vector<2x8x32xf32>
    %236 = vector.extract_strided_slice %198 {offsets = [0, 0, 64], sizes = [2, 8, 32], strides = [1, 1, 1]} : vector<2x8x128xf32> to vector<2x8x32xf32>
    %237 = vector.extract_strided_slice %200 {offsets = [0, 0, 64], sizes = [2, 8, 32], strides = [1, 1, 1]} : vector<2x8x128xf32> to vector<2x8x32xf32>
    "tpu.trace_start"() <{level = 10 : i32, message = "bqd,bkd->bqk"}> : () -> ()
    %cst_123 = arith.constant dense<0.000000e+00> : vector<2x8x8xf32>
    %238 = tpu.matmul %235, %236, %cst_123 {dimension_numbers = #tpu.dot_dimension_numbers<[2], [2], [1], [1], [0, 0, 0, 1, 1, 1], [0], [0]>} : vector<2x8x32xf32>, vector<2x8x32xf32>, vector<2x8x8xf32> -> vector<2x8x8xf32>
    "tpu.trace_stop"() : () -> ()
    %cst_124 = arith.constant 0.176776692 : f32
    %239 = vector.broadcast %cst_124 : f32 to vector<2x8x8xf32>
    %240 = arith.mulf %238, %239 : vector<2x8x8xf32>
    %cst_125 = arith.constant dense<0xFF800000> : vector<2x8xf32>
    %241 = vector.multi_reduction <maximumf>, %240, %cst_125 [2] : vector<2x8x8xf32> to vector<2x8xf32>
    %242 = vector.shape_cast %241 : vector<2x8xf32> to vector<2x8x1xf32>
    %243 = vector.broadcast %242 : vector<2x8x1xf32> to vector<2x8x8xf32>
    %244 = arith.subf %240, %243 : vector<2x8x8xf32>
    %245 = math.exp %244 : vector<2x8x8xf32>
    %cst_126 = arith.constant dense<0.000000e+00> : vector<2x8xf32>
    %246 = vector.multi_reduction <add>, %245, %cst_126 [2] : vector<2x8x8xf32> to vector<2x8xf32>
    %247 = vector.shape_cast %246 : vector<2x8xf32> to vector<2x8x1xf32>
    %248 = tpu.reciprocal %247 {approx = true} : vector<2x8x1xf32> -> vector<2x8x1xf32>
    %249 = vector.broadcast %248 : vector<2x8x1xf32> to vector<2x8x8xf32>
    %250 = arith.mulf %245, %249 : vector<2x8x8xf32>
    "tpu.trace_start"() <{level = 10 : i32, message = "bqk,bkd->bqd"}> : () -> ()
    %cst_127 = arith.constant dense<0.000000e+00> : vector<2x8x32xf32>
    %251 = tpu.matmul %250, %237, %cst_127 {dimension_numbers = #tpu.dot_dimension_numbers<[2], [1], [1], [2], [0, 0, 0, 1, 1, 2], [0], [0]>} : vector<2x8x8xf32>, vector<2x8x32xf32>, vector<2x8x32xf32> -> vector<2x8x32xf32>
    "tpu.trace_stop"() : () -> ()
    %252 = vector.extract_strided_slice %196 {offsets = [0, 0, 96], sizes = [2, 8, 32], strides = [1, 1, 1]} : vector<2x8x128xf32> to vector<2x8x32xf32>
    %253 = vector.extract_strided_slice %198 {offsets = [0, 0, 96], sizes = [2, 8, 32], strides = [1, 1, 1]} : vector<2x8x128xf32> to vector<2x8x32xf32>
    %254 = vector.extract_strided_slice %200 {offsets = [0, 0, 96], sizes = [2, 8, 32], strides = [1, 1, 1]} : vector<2x8x128xf32> to vector<2x8x32xf32>
    "tpu.trace_start"() <{level = 10 : i32, message = "bqd,bkd->bqk"}> : () -> ()
    %cst_128 = arith.constant dense<0.000000e+00> : vector<2x8x8xf32>
    %255 = tpu.matmul %252, %253, %cst_128 {dimension_numbers = #tpu.dot_dimension_numbers<[2], [2], [1], [1], [0, 0, 0, 1, 1, 1], [0], [0]>} : vector<2x8x32xf32>, vector<2x8x32xf32>, vector<2x8x8xf32> -> vector<2x8x8xf32>
    "tpu.trace_stop"() : () -> ()
    %cst_129 = arith.constant 0.176776692 : f32
    %256 = vector.broadcast %cst_129 : f32 to vector<2x8x8xf32>
    %257 = arith.mulf %255, %256 : vector<2x8x8xf32>
    %cst_130 = arith.constant dense<0xFF800000> : vector<2x8xf32>
    %258 = vector.multi_reduction <maximumf>, %257, %cst_130 [2] : vector<2x8x8xf32> to vector<2x8xf32>
    %259 = vector.shape_cast %258 : vector<2x8xf32> to vector<2x8x1xf32>
    %260 = vector.broadcast %259 : vector<2x8x1xf32> to vector<2x8x8xf32>
    %261 = arith.subf %257, %260 : vector<2x8x8xf32>
    %262 = math.exp %261 : vector<2x8x8xf32>
    %cst_131 = arith.constant dense<0.000000e+00> : vector<2x8xf32>
    %263 = vector.multi_reduction <add>, %262, %cst_131 [2] : vector<2x8x8xf32> to vector<2x8xf32>
    %264 = vector.shape_cast %263 : vector<2x8xf32> to vector<2x8x1xf32>
    %265 = tpu.reciprocal %264 {approx = true} : vector<2x8x1xf32> -> vector<2x8x1xf32>
    %266 = vector.broadcast %265 : vector<2x8x1xf32> to vector<2x8x8xf32>
    %267 = arith.mulf %262, %266 : vector<2x8x8xf32>
    "tpu.trace_start"() <{level = 10 : i32, message = "bqk,bkd->bqd"}> : () -> ()
    %cst_132 = arith.constant dense<0.000000e+00> : vector<2x8x32xf32>
    %268 = tpu.matmul %267, %254, %cst_132 {dimension_numbers = #tpu.dot_dimension_numbers<[2], [1], [1], [2], [0, 0, 0, 1, 1, 2], [0], [0]>} : vector<2x8x8xf32>, vector<2x8x32xf32>, vector<2x8x32xf32> -> vector<2x8x32xf32>
    "tpu.trace_stop"() : () -> ()
    %269 = tpu.concatenate %217, %234, %251, %268 in 2 : vector<2x8x32xf32>, vector<2x8x32xf32>, vector<2x8x32xf32>, vector<2x8x32xf32> -> vector<2x8x128xf32>
    %270 = vector.shape_cast %269 : vector<2x8x128xf32> to vector<16x128xf32>
    %cst_133 = arith.constant dense<0.000000e+00> : vector<16x128xf32>
    %271 = tpu.matmul %270, %173, %cst_133 {dimension_numbers = #tpu.dot_dimension_numbers<[1], [0], [0], [1], [0, 0, 1, 1], [], []>} : vector<16x128xf32>, vector<128x128xf32>, vector<16x128xf32> -> vector<16x128xf32>
    %272 = vector.broadcast %175 : vector<1x128xf32> to vector<16x128xf32>
    %273 = arith.addf %271, %272 : vector<16x128xf32>
    %274 = arith.addf %167, %273 : vector<16x128xf32>
    %cst_134 = arith.constant dense<0.000000e+00> : vector<16xf32>
    %275 = vector.multi_reduction <add>, %274, %cst_134 [1] : vector<16x128xf32> to vector<16xf32>
    %276 = vector.shape_cast %275 : vector<16xf32> to vector<16x1xf32>
    %cst_135 = arith.constant 1.280000e+02 : f32
    %277 = vector.broadcast %cst_135 : f32 to vector<16x1xf32>
    %278 = arith.divf %276, %277 : vector<16x1xf32>
    %279 = vector.broadcast %278 : vector<16x1xf32> to vector<16x128xf32>
    %280 = arith.subf %274, %279 : vector<16x128xf32>
    %281 = arith.mulf %280, %280 : vector<16x128xf32>
    %cst_136 = arith.constant dense<0.000000e+00> : vector<16xf32>
    %282 = vector.multi_reduction <add>, %281, %cst_136 [1] : vector<16x128xf32> to vector<16xf32>
    %283 = vector.shape_cast %282 : vector<16xf32> to vector<16x1xf32>
    %cst_137 = arith.constant 1.280000e+02 : f32
    %284 = vector.broadcast %cst_137 : f32 to vector<16x1xf32>
    %285 = arith.divf %283, %284 : vector<16x1xf32>
    %286 = vector.broadcast %278 : vector<16x1xf32> to vector<16x128xf32>
    %287 = arith.subf %274, %286 : vector<16x128xf32>
    %cst_138 = arith.constant 9.99999974E-6 : f32
    %288 = vector.broadcast %cst_138 : f32 to vector<16x1xf32>
    %289 = arith.addf %285, %288 : vector<16x1xf32>
    %290 = math.rsqrt %289 : vector<16x1xf32>
    %291 = vector.broadcast %290 : vector<16x1xf32> to vector<16x128xf32>
    %292 = arith.mulf %287, %291 : vector<16x128xf32>
    %293 = vector.broadcast %177 : vector<1x128xf32> to vector<16x128xf32>
    %294 = arith.mulf %292, %293 : vector<16x128xf32>
    %295 = vector.broadcast %179 : vector<1x128xf32> to vector<16x128xf32>
    %296 = arith.addf %294, %295 : vector<16x128xf32>
    %cst_139 = arith.constant dense<0.000000e+00> : vector<16x256xf32>
    %297 = tpu.matmul %296, %181, %cst_139 {dimension_numbers = #tpu.dot_dimension_numbers<[1], [0], [0], [1], [0, 0, 1, 1], [], []>} : vector<16x128xf32>, vector<128x256xf32>, vector<16x256xf32> -> vector<16x256xf32>
    %298 = vector.broadcast %183 : vector<1x256xf32> to vector<16x256xf32>
    %299 = arith.addf %297, %298 : vector<16x256xf32>
    %cst_140 = arith.constant 0.000000e+00 : f32
    %300 = vector.broadcast %cst_140 : f32 to vector<16x256xf32>
    %301 = arith.maximumf %299, %300 : vector<16x256xf32>
    %cst_141 = arith.constant dense<0.000000e+00> : vector<16x128xf32>
    %302 = tpu.matmul %301, %185, %cst_141 {dimension_numbers = #tpu.dot_dimension_numbers<[1], [0], [0], [1], [0, 0, 1, 1], [], []>} : vector<16x256xf32>, vector<256x128xf32>, vector<16x128xf32> -> vector<16x128xf32>
    %303 = vector.broadcast %187 : vector<1x128xf32> to vector<16x128xf32>
    %304 = arith.addf %302, %303 : vector<16x128xf32>
    %305 = arith.addf %296, %304 : vector<16x128xf32>
    %cst_142 = arith.constant dense<0.000000e+00> : vector<16xf32>
    %306 = vector.multi_reduction <add>, %305, %cst_142 [1] : vector<16x128xf32> to vector<16xf32>
    %307 = vector.shape_cast %306 : vector<16xf32> to vector<16x1xf32>
    %cst_143 = arith.constant 1.280000e+02 : f32
    %308 = vector.broadcast %cst_143 : f32 to vector<16x1xf32>
    %309 = arith.divf %307, %308 : vector<16x1xf32>
    %310 = vector.broadcast %309 : vector<16x1xf32> to vector<16x128xf32>
    %311 = arith.subf %305, %310 : vector<16x128xf32>
    %312 = arith.mulf %311, %311 : vector<16x128xf32>
    %cst_144 = arith.constant dense<0.000000e+00> : vector<16xf32>
    %313 = vector.multi_reduction <add>, %312, %cst_144 [1] : vector<16x128xf32> to vector<16xf32>
    %314 = vector.shape_cast %313 : vector<16xf32> to vector<16x1xf32>
    %cst_145 = arith.constant 1.280000e+02 : f32
    %315 = vector.broadcast %cst_145 : f32 to vector<16x1xf32>
    %316 = arith.divf %314, %315 : vector<16x1xf32>
    %317 = vector.broadcast %309 : vector<16x1xf32> to vector<16x128xf32>
    %318 = arith.subf %305, %317 : vector<16x128xf32>
    %cst_146 = arith.constant 9.99999974E-6 : f32
    %319 = vector.broadcast %cst_146 : f32 to vector<16x1xf32>
    %320 = arith.addf %316, %319 : vector<16x1xf32>
    %321 = math.rsqrt %320 : vector<16x1xf32>
    %322 = vector.broadcast %321 : vector<16x1xf32> to vector<16x128xf32>
    %323 = arith.mulf %318, %322 : vector<16x128xf32>
    %324 = vector.broadcast %189 : vector<1x128xf32> to vector<16x128xf32>
    %325 = arith.mulf %323, %324 : vector<16x128xf32>
    %326 = vector.broadcast %191 : vector<1x128xf32> to vector<16x128xf32>
    %327 = arith.addf %325, %326 : vector<16x128xf32>
    %c0_147 = arith.constant 0 : index
    %c0_148 = arith.constant 0 : index
    %328 = vector.load %arg15[%c0_147, %c0_148] : memref<1x128xf32, #tpu.memory_space<vmem>>, vector<1x128xf32>
    %c0_149 = arith.constant 0 : index
    %c0_150 = arith.constant 0 : index
    %329 = vector.load %arg16[%c0_149, %c0_150] : memref<1x128xf32, #tpu.memory_space<vmem>>, vector<1x128xf32>
    %cst_151 = arith.constant dense<0.000000e+00> : vector<16xf32>
    %330 = vector.multi_reduction <add>, %327, %cst_151 [1] : vector<16x128xf32> to vector<16xf32>
    %331 = vector.shape_cast %330 : vector<16xf32> to vector<16x1xf32>
    %cst_152 = arith.constant 1.280000e+02 : f32
    %332 = vector.broadcast %cst_152 : f32 to vector<16x1xf32>
    %333 = arith.divf %331, %332 : vector<16x1xf32>
    %334 = vector.broadcast %333 : vector<16x1xf32> to vector<16x128xf32>
    %335 = arith.subf %327, %334 : vector<16x128xf32>
    %336 = arith.mulf %335, %335 : vector<16x128xf32>
    %cst_153 = arith.constant dense<0.000000e+00> : vector<16xf32>
    %337 = vector.multi_reduction <add>, %336, %cst_153 [1] : vector<16x128xf32> to vector<16xf32>
    %338 = vector.shape_cast %337 : vector<16xf32> to vector<16x1xf32>
    %cst_154 = arith.constant 1.280000e+02 : f32
    %339 = vector.broadcast %cst_154 : f32 to vector<16x1xf32>
    %340 = arith.divf %338, %339 : vector<16x1xf32>
    %341 = vector.broadcast %333 : vector<16x1xf32> to vector<16x128xf32>
    %342 = arith.subf %327, %341 : vector<16x128xf32>
    %cst_155 = arith.constant 9.99999974E-6 : f32
    %343 = vector.broadcast %cst_155 : f32 to vector<16x1xf32>
    %344 = arith.addf %340, %343 : vector<16x1xf32>
    %345 = math.rsqrt %344 : vector<16x1xf32>
    %346 = vector.broadcast %345 : vector<16x1xf32> to vector<16x128xf32>
    %347 = arith.mulf %342, %346 : vector<16x128xf32>
    %348 = vector.broadcast %328 : vector<1x128xf32> to vector<16x128xf32>
    %349 = arith.mulf %347, %348 : vector<16x128xf32>
    %350 = vector.broadcast %329 : vector<1x128xf32> to vector<16x128xf32>
    %351 = arith.addf %349, %350 : vector<16x128xf32>
    %352 = vector.shape_cast %351 : vector<16x128xf32> to vector<2x8x128xf32>
    %c0_156 = arith.constant 0 : index
    %c0_157 = arith.constant 0 : index
    %c0_158 = arith.constant 0 : index
    %353 = vector.load %arg17[%c0_156, %c0_157, %c0_158] : memref<2x8x128xf32, #tpu.memory_space<vmem>>, vector<2x8x128xf32>
    tpu.vector_store %arg17[%c0_156, %c0_157, %c0_158], %352 {strides = array<i32>} : memref<2x8x128xf32, #tpu.memory_space<vmem>>, vector<2x8x128xf32>,
    return
  }
}

</mosaic_0001>

<llo_original>
// kernel: transformer_forward.1
$region0: #{transformer_forward.1}
  #allocation0 [shape = 'u32[]', space=smem, size = 0x4, offset = 0x4, fixed_abs, tag = 'smem constant byte address 0x4 - core index']
  #allocation1 [shape = 'u32[144,128]{1,0:T(1,128)}', space=vmem, size = 0x12000, scoped, tag = 'internal scratch']
  %s0 = inlined_call_operand.hbm [shape: f32[2,8,128], index: 0, kind: input, shape index: {}]
  %s1 = inlined_call_operand.vmem [shape: f32[8,128], index: 1, kind: input, shape index: {}]
  %s2 = inlined_call_operand.vmem [shape: f32[2,8,128], index: 2, kind: input, shape index: {}]
  %s3 = inlined_call_operand.hbm [shape: f32[2,128,384], index: 3, kind: input, shape index: {}]
  %s4 = inlined_call_operand.hbm [shape: f32[2,1,384], index: 4, kind: input, shape index: {}]
  %s5 = inlined_call_operand.vmem [shape: f32[2,128,128], index: 5, kind: input, shape index: {}]
  %s6 = inlined_call_operand.hbm [shape: f32[2,1,128], index: 6, kind: input, shape index: {}]
  %s7 = inlined_call_operand.hbm [shape: f32[2,1,128], index: 7, kind: input, shape index: {}]
  %s8 = inlined_call_operand.hbm [shape: f32[2,1,128], index: 8, kind: input, shape index: {}]
  %s9 = inlined_call_operand.hbm [shape: f32[2,128,256], index: 9, kind: input, shape index: {}]
  %s10 = inlined_call_operand.vmem [shape: f32[2,1,256], index: 10, kind: input, shape index: {}]
  %s11 = inlined_call_operand.hbm [shape: f32[2,256,128], index: 11, kind: input, shape index: {}]
  %s12 = inlined_call_operand.hbm [shape: f32[2,1,128], index: 12, kind: input, shape index: {}]
  %s13 = inlined_call_operand.hbm [shape: f32[2,1,128], index: 13, kind: input, shape index: {}]
  %s14 = inlined_call_operand.hbm [shape: f32[2,1,128], index: 14, kind: input, shape index: {}]
  %s15 = inlined_call_operand.hbm [shape: f32[1,128], index: 15, kind: input, shape index: {}]
  %s16 = inlined_call_operand.hbm [shape: f32[1,128], index: 16, kind: input, shape index: {}]
  %s17 = inlined_call_operand.hbm [shape: f32[2,8,128], index: 17, kind: output, shape index: {}]
  %s18 = sld [smem:[#allocation0]]
  $region130: #{transformer_forward.1} parent=0
    _
  %s20 = ssub.s32 1, %s18
  %s21 = scalar_select 0, %s20, %s18
  $region1: #{transformer_forward.1} parent=0
    #allocation2 [shape = 'u8[8192]{0}', space=vmem, size = 0x2000, scoped, tag = 'input window, operand 0, single buffered']
    #allocation3 [shape = 's32[1]{0}', space=sflag, size = 0x4, scoped, tag = 'scoped memory for transformer_forward.1']
    #allocation4 [shape = 's32[1]{0}', space=sflag, size = 0x4, scoped, tag = 'scoped memory for transformer_forward.1']
    #allocation5 [shape = 'u8[393216]{0}', space=vmem, size = 0x60000, scoped, tag = 'input window, operand 3, single buffered']
    #allocation6 [shape = 's32[1]{0}', space=sflag, size = 0x4, scoped, tag = 'scoped memory for transformer_forward.1']
    #allocation7 [shape = 'u8[3072]{0}', space=vmem, size = 0xc00, scoped, tag = 'input window, operand 4, single buffered']
    #allocation8 [shape = 'u8[1024]{0}', space=vmem, size = 0x400, scoped, tag = 'input window, operand 6, single buffered']
    #allocation9 [shape = 's32[1]{0}', space=sflag, size = 0x4, scoped, tag = 'scoped memory for transformer_forward.1']
    #allocation10 [shape = 'u8[1024]{0}', space=vmem, size = 0x400, scoped, tag = 'input window, operand 7, single buffered']
    #allocation11 [shape = 'u8[1024]{0}', space=vmem, size = 0x400, scoped, tag = 'input window, operand 8, single buffered']
    #allocation12 [shape = 's32[1]{0}', space=sflag, size = 0x4, scoped, tag = 'scoped memory for transformer_forward.1']
    #allocation13 [shape = 'u8[262144]{0}', space=vmem, size = 0x40000, scoped, tag = 'input window, operand 9, single buffered']
    #allocation14 [shape = 'u8[262144]{0}', space=vmem, size = 0x40000, scoped, tag = 'input window, operand 11, single buffered']
    #allocation15 [shape = 's32[1]{0}', space=sflag, size = 0x4, scoped, tag = 'scoped memory for transformer_forward.1']
    #allocation16 [shape = 'u8[1024]{0}', space=vmem, size = 0x400, scoped, tag = 'input window, operand 12, single buffered']
    #allocation17 [shape = 'u8[1024]{0}', space=vmem, size = 0x400, scoped, tag = 'input window, operand 13, single buffered']
    #allocation18 [shape = 's32[1]{0}', space=sflag, size = 0x4, scoped, tag = 'scoped memory for transformer_forward.1']
    #allocation19 [shape = 'u8[1024]{0}', space=vmem, size = 0x400, scoped, tag = 'input window, operand 14, single buffered']
    #allocation20 [shape = 'u8[512]{0}', space=vmem, size = 0x400, scoped, tag = 'input window, operand 15, single buffered']
    #allocation21 [shape = 's32[1]{0}', space=sflag, size = 0x4, scoped, tag = 'scoped memory for transformer_forward.1']
    #allocation22 [shape = 'u8[512]{0}', space=vmem, size = 0x400, scoped, tag = 'input window, operand 16, single buffered']
    #allocation23 [shape = 'u8[8192]{0}', space=vmem, size = 0x2000, scoped, tag = 'output window, operand 0, single buffered']
    %22 = vsyncpa [#allocation3], 0
    %23 = vsyncpa [#allocation6], 0
    %24 = vsyncpa [#allocation9], 0
    %25 = vsyncpa [#allocation12], 0
    %26 = vsyncpa [#allocation15], 0
    %27 = vsyncpa [#allocation18], 0
    %28 = vsyncpa [#allocation21], 0
    %29 = vsyncpa [#allocation4], 0
    // Predicated region
    $region2: #{transformer_forward.1} parent=1 // pred_check
      _
    $region3: #{transformer_forward.1} parent=1 // pred_check_branch
      %31 = sbr.rel (0) target = $region5
    $region4: #{transformer_forward.1} parent=1 // pred_region
      %s33 = ssub.s32 256, 256
      %34 = vsyncadd [#allocation3], %s33
      %s35 = sshll.u32 [#allocation2], 4
      %s36 = int_to_ptr.vmem [resolvable:$true] %s35
      %41 = dma.hbm_to_vmem [thread:$0]  %s0, 256, %s36, [#allocation3], 128, 128, 8
    $region5: #{transformer_forward.1} parent=1 // pred_fallthru
      _
    // Predicated region
    $region6: #{transformer_forward.1} parent=1 // pred_check
      _
    $region7: #{transformer_forward.1} parent=1 // pred_check_branch
      %43 = sbr.rel (0) target = $region9
    $region8: #{transformer_forward.1} parent=1 // pred_region
      _
    $region9: #{transformer_forward.1} parent=1 // pred_fallthru
      _
    // Predicated region
    $region10: #{transformer_forward.1} parent=1 // pred_check
      _
    $region11: #{transformer_forward.1} parent=1 // pred_check_branch
      %45 = sbr.rel (0) target = $region13
    $region12: #{transformer_forward.1} parent=1 // pred_region
      _
    $region13: #{transformer_forward.1} parent=1 // pred_fallthru
      _
    // Predicated region
    $region14: #{transformer_forward.1} parent=1 // pred_check
      _
    $region15: #{transformer_forward.1} parent=1 // pred_check_branch
      %47 = sbr.rel (0) target = $region17
    $region16: #{transformer_forward.1} parent=1 // pred_region
      %s49 = ssub.s32 12288, 12288
      %50 = vsyncadd [#allocation6], %s49
      %s51 = sshll.u32 [#allocation5], 4
      %s52 = int_to_ptr.vmem [resolvable:$true] %s51
      %57 = dma.hbm_to_vmem [thread:$0]  %s3, 12288, %s52, [#allocation6], 384, 384, 24
    $region17: #{transformer_forward.1} parent=1 // pred_fallthru
      _
    // Predicated region
    $region18: #{transformer_forward.1} parent=1 // pred_check
      _
    $region19: #{transformer_forward.1} parent=1 // pred_check_branch
      %59 = sbr.rel (0) target = $region21
    $region20: #{transformer_forward.1} parent=1 // pred_region
      %s61 = ssub.s32 96, 96
      %62 = vsyncadd [#allocation6], %s61
      %s63 = sshll.u32 [#allocation7], 4
      %s64 = int_to_ptr.vmem [resolvable:$true] %s63
      %69 = dma.hbm_to_vmem [thread:$0]  %s4, 96, %s64, [#allocation6], 48, 48, 3
    $region21: #{transformer_forward.1} parent=1 // pred_fallthru
      _
    // Predicated region
    $region22: #{transformer_forward.1} parent=1 // pred_check
      _
    $region23: #{transformer_forward.1} parent=1 // pred_check_branch
      %71 = sbr.rel (0) target = $region25
    $region24: #{transformer_forward.1} parent=1 // pred_region
      _
    $region25: #{transformer_forward.1} parent=1 // pred_fallthru
      _
    // Predicated region
    $region26: #{transformer_forward.1} parent=1 // pred_check
      _
    $region27: #{transformer_forward.1} parent=1 // pred_check_branch
      %73 = sbr.rel (0) target = $region29
    $region28: #{transformer_forward.1} parent=1 // pred_region
      %s75 = ssub.s32 32, 32
      %76 = vsyncadd [#allocation9], %s75
      %s77 = sshll.u32 [#allocation8], 4
      %s78 = int_to_ptr.vmem [resolvable:$true] %s77
      %83 = dma.hbm_to_vmem [thread:$0]  %s6, 32, %s78, [#allocation9], 16, 16, 1
    $region29: #{transformer_forward.1} parent=1 // pred_fallthru
      _
    // Predicated region
    $region30: #{transformer_forward.1} parent=1 // pred_check
      _
    $region31: #{transformer_forward.1} parent=1 // pred_check_branch
      %85 = sbr.rel (0) target = $region33
    $region32: #{transformer_forward.1} parent=1 // pred_region
      %s87 = ssub.s32 32, 32
      %88 = vsyncadd [#allocation9], %s87
      %s89 = sshll.u32 [#allocation10], 4
      %s90 = int_to_ptr.vmem [resolvable:$true] %s89
      %95 = dma.hbm_to_vmem [thread:$0]  %s7, 32, %s90, [#allocation9], 16, 16, 1
    $region33: #{transformer_forward.1} parent=1 // pred_fallthru
      _
    // Predicated region
    $region34: #{transformer_forward.1} parent=1 // pred_check
      _
    $region35: #{transformer_forward.1} parent=1 // pred_check_branch
      %97 = sbr.rel (0) target = $region37
    $region36: #{transformer_forward.1} parent=1 // pred_region
      %s99 = ssub.s32 32, 32
      %100 = vsyncadd [#allocation12], %s99
      %s101 = sshll.u32 [#allocation11], 4
      %s102 = int_to_ptr.vmem [resolvable:$true] %s101
      %107 = dma.hbm_to_vmem [thread:$0]  %s8, 32, %s102, [#allocation12], 16, 16, 1
    $region37: #{transformer_forward.1} parent=1 // pred_fallthru
      _
    // Predicated region
    $region38: #{transformer_forward.1} parent=1 // pred_check
      _
    $region39: #{transformer_forward.1} parent=1 // pred_check_branch
      %109 = sbr.rel (0) target = $region41
    $region40: #{transformer_forward.1} parent=1 // pred_region
      %s111 = ssub.s32 8192, 8192
      %112 = vsyncadd [#allocation12], %s111
      %s113 = sshll.u32 [#allocation13], 4
      %s114 = int_to_ptr.vmem [resolvable:$true] %s113
      %119 = dma.hbm_to_vmem [thread:$0]  %s9, 8192, %s114, [#allocation12], 256, 256, 16
    $region41: #{transformer_forward.1} parent=1 // pred_fallthru
      _
    // Predicated region
    $region42: #{transformer_forward.1} parent=1 // pred_check
      _
    $region43: #{transformer_forward.1} parent=1 // pred_check_branch
      %121 = sbr.rel (0) target = $region45
    $region44: #{transformer_forward.1} parent=1 // pred_region
      _
    $region45: #{transformer_forward.1} parent=1 // pred_fallthru
      _
    // Predicated region
    $region46: #{transformer_forward.1} parent=1 // pred_check
      _
    $region47: #{transformer_forward.1} parent=1 // pred_check_branch
      %123 = sbr.rel (0) target = $region49
    $region48: #{transformer_forward.1} parent=1 // pred_region
      %s125 = ssub.s32 8192, 8192
      %126 = vsyncadd [#allocation15], %s125
      %s127 = sshll.u32 [#allocation14], 4
      %s128 = int_to_ptr.vmem [resolvable:$true] %s127
      %133 = dma.hbm_to_vmem [thread:$0]  %s11, 8192, %s128, [#allocation15], 128, 128, 8
    $region49: #{transformer_forward.1} parent=1 // pred_fallthru
      _
    // Predicated region
    $region50: #{transformer_forward.1} parent=1 // pred_check
      _
    $region51: #{transformer_forward.1} parent=1 // pred_check_branch
      %135 = sbr.rel (0) target = $region53
    $region52: #{transformer_forward.1} parent=1 // pred_region
      %s137 = ssub.s32 32, 32
      %138 = vsyncadd [#allocation15], %s137
      %s139 = sshll.u32 [#allocation16], 4
      %s140 = int_to_ptr.vmem [resolvable:$true] %s139
      %145 = dma.hbm_to_vmem [thread:$0]  %s12, 32, %s140, [#allocation15], 16, 16, 1
    $region53: #{transformer_forward.1} parent=1 // pred_fallthru
      _
    // Predicated region
    $region54: #{transformer_forward.1} parent=1 // pred_check
      _
    $region55: #{transformer_forward.1} parent=1 // pred_check_branch
      %147 = sbr.rel (0) target = $region57
    $region56: #{transformer_forward.1} parent=1 // pred_region
      %s149 = ssub.s32 32, 32
      %150 = vsyncadd [#allocation18], %s149
      %s151 = sshll.u32 [#allocation17], 4
      %s152 = int_to_ptr.vmem [resolvable:$true] %s151
      %157 = dma.hbm_to_vmem [thread:$0]  %s13, 32, %s152, [#allocation18], 16, 16, 1
    $region57: #{transformer_forward.1} parent=1 // pred_fallthru
      _
    // Predicated region
    $region58: #{transformer_forward.1} parent=1 // pred_check
      _
    $region59: #{transformer_forward.1} parent=1 // pred_check_branch
      %159 = sbr.rel (0) target = $region61
    $region60: #{transformer_forward.1} parent=1 // pred_region
      %s161 = ssub.s32 32, 32
      %162 = vsyncadd [#allocation18], %s161
      %s163 = sshll.u32 [#allocation19], 4
      %s164 = int_to_ptr.vmem [resolvable:$true] %s163
      %169 = dma.hbm_to_vmem [thread:$0]  %s14, 32, %s164, [#allocation18], 16, 16, 1
    $region61: #{transformer_forward.1} parent=1 // pred_fallthru
      _
    // Predicated region
    $region62: #{transformer_forward.1} parent=1 // pred_check
      _
    $region63: #{transformer_forward.1} parent=1 // pred_check_branch
      %171 = sbr.rel (0) target = $region65
    $region64: #{transformer_forward.1} parent=1 // pred_region
      %s173 = ssub.s32 16, 16
      %174 = vsyncadd [#allocation21], %s173
      %s176 = sshll.u32 [#allocation20], 4
      %s177 = int_to_ptr.vmem [resolvable:$true] %s176
      %179 = dma.hbm_to_vmem [thread:$0]  %s15, 16, %s177, [#allocation21]
    $region65: #{transformer_forward.1} parent=1 // pred_fallthru
      _
    // Predicated region
    $region66: #{transformer_forward.1} parent=1 // pred_check
      _
    $region67: #{transformer_forward.1} parent=1 // pred_check_branch
      %181 = sbr.rel (0) target = $region69
    $region68: #{transformer_forward.1} parent=1 // pred_region
      %s183 = ssub.s32 16, 16
      %184 = vsyncadd [#allocation21], %s183
      %s186 = sshll.u32 [#allocation22], 4
      %s187 = int_to_ptr.vmem [resolvable:$true] %s186
      %189 = dma.hbm_to_vmem [thread:$0]  %s16, 16, %s187, [#allocation21]
    $region69: #{transformer_forward.1} parent=1 // pred_fallthru
      _
    // Predicated region
    $region70: #{transformer_forward.1} parent=1 // pred_check
      _
    $region71: #{transformer_forward.1} parent=1 // pred_check_branch
      %191 = sbr.rel (0) target = $region73
    $region72: #{transformer_forward.1} parent=1 // pred_region
      %192 = dma.done [#allocation3], 256
    $region73: #{transformer_forward.1} parent=1 // pred_fallthru
      _
    // Predicated region
    $region74: #{transformer_forward.1} parent=1 // pred_check
      _
    $region75: #{transformer_forward.1} parent=1 // pred_check_branch
      %194 = sbr.rel (0) target = $region77
    $region76: #{transformer_forward.1} parent=1 // pred_region
      %195 = dma.done [#allocation6], 12288
    $region77: #{transformer_forward.1} parent=1 // pred_fallthru
      _
    // Predicated region
    $region78: #{transformer_forward.1} parent=1 // pred_check
      _
    $region79: #{transformer_forward.1} parent=1 // pred_check_branch
      %197 = sbr.rel (0) target = $region81
    $region80: #{transformer_forward.1} parent=1 // pred_region
      %198 = dma.done [#allocation6], 96
    $region81: #{transformer_forward.1} parent=1 // pred_fallthru
      _
    // Predicated region
    $region82: #{transformer_forward.1} parent=1 // pred_check
      _
    $region83: #{transformer_forward.1} parent=1 // pred_check_branch
      %200 = sbr.rel (0) target = $region85
    $region84: #{transformer_forward.1} parent=1 // pred_region
      %201 = dma.done [#allocation9], 32
    $region85: #{transformer_forward.1} parent=1 // pred_fallthru
      _
    // Predicated region
    $region86: #{transformer_forward.1} parent=1 // pred_check
      _
    $region87: #{transformer_forward.1} parent=1 // pred_check_branch
      %203 = sbr.rel (0) target = $region89
    $region88: #{transformer_forward.1} parent=1 // pred_region
      %204 = dma.done [#allocation9], 32
    $region89: #{transformer_forward.1} parent=1 // pred_fallthru
      _
    // Predicated region
    $region90: #{transformer_forward.1} parent=1 // pred_check
      _
    $region91: #{transformer_forward.1} parent=1 // pred_check_branch
      %206 = sbr.rel (0) target = $region93
    $region92: #{transformer_forward.1} parent=1 // pred_region
      %207 = dma.done [#allocation12], 32
    $region93: #{transformer_forward.1} parent=1 // pred_fallthru
      _
    // Predicated region
    $region94: #{transformer_forward.1} parent=1 // pred_check
      _
    $region95: #{transformer_forward.1} parent=1 // pred_check_branch
      %209 = sbr.rel (0) target = $region97
    $region96: #{transformer_forward.1} parent=1 // pred_region
      %210 = dma.done [#allocation12], 8192
    $region97: #{transformer_forward.1} parent=1 // pred_fallthru
      _
    // Predicated region
    $region98: #{transformer_forward.1} parent=1 // pred_check
      _
    $region99: #{transformer_forward.1} parent=1 // pred_check_branch
      %212 = sbr.rel (0) target = $region101
    $region100: #{transformer_forward.1} parent=1 // pred_region
      %213 = dma.done [#allocation15], 8192
    $region101: #{transformer_forward.1} parent=1 // pred_fallthru
      _
    // Predicated region
    $region102: #{transformer_forward.1} parent=1 // pred_check
      _
    $region103: #{transformer_forward.1} parent=1 // pred_check_branch
      %215 = sbr.rel (0) target = $region105
    $region104: #{transformer_forward.1} parent=1 // pred_region
      %216 = dma.done [#allocation15], 32
    $region105: #{transformer_forward.1} parent=1 // pred_fallthru
      _
    // Predicated region
    $region106: #{transformer_forward.1} parent=1 // pred_check
      _
    $region107: #{transformer_forward.1} parent=1 // pred_check_branch
      %218 = sbr.rel (0) target = $region109
    $region108: #{transformer_forward.1} parent=1 // pred_region
      %219 = dma.done [#allocation18], 32
    $region109: #{transformer_forward.1} parent=1 // pred_fallthru
      _
    // Predicated region
    $region110: #{transformer_forward.1} parent=1 // pred_check
      _
    $region111: #{transformer_forward.1} parent=1 // pred_check_branch
      %221 = sbr.rel (0) target = $region113
    $region112: #{transformer_forward.1} parent=1 // pred_region
      %222 = dma.done [#allocation18], 32
    $region113: #{transformer_forward.1} parent=1 // pred_fallthru
      _
    // Predicated region
    $region114: #{transformer_forward.1} parent=1 // pred_check
      _
    $region115: #{transformer_forward.1} parent=1 // pred_check_branch
      %224 = sbr.rel (0) target = $region117
    $region116: #{transformer_forward.1} parent=1 // pred_region
      %225 = dma.done [#allocation21], 16
    $region117: #{transformer_forward.1} parent=1 // pred_fallthru
      _
    // Predicated region
    $region118: #{transformer_forward.1} parent=1 // pred_check
      _
    $region119: #{transformer_forward.1} parent=1 // pred_check_branch
      %227 = sbr.rel (0) target = $region121
    $region120: #{transformer_forward.1} parent=1 // pred_region
      %228 = dma.done [#allocation21], 16
    $region121: #{transformer_forward.1} parent=1 // pred_fallthru
      _
    %v229 = vld [vmem:[#allocation2] sm:$0xff]
    %v230 = vld [vmem:[#allocation2 + $0x8] sm:$0xff]
    %v231 = vld [vmem:[%s1] sm:$0xff]
    %v232 = vadd.f32 %v229, %v231
    %v233 = vadd.f32 %v230, %v231
    %v234 = vld [vmem:[%s2] sm:$0xff]
    %v235 = vld [vmem:[%s2 + $0x8] sm:$0xff]
    %v236 = vadd.f32 %v232, %v234
    %v237 = vadd.f32 %v233, %v235
    %v238 = vld [vmem:[#allocation5] sm:$0xff]
    %v239 = vld [vmem:[#allocation5 + $0x8] sm:$0xff]
    %v240 = vld [vmem:[#allocation5 + $0x10] sm:$0xff]
    %v241 = vld [vmem:[#allocation5 + $0x18] sm:$0xff]
    %v242 = vld [vmem:[#allocation5 + $0x20] sm:$0xff]
    %v243 = vld [vmem:[#allocation5 + $0x28] sm:$0xff]
    %v244 = vld [vmem:[#allocation5 + $0x30] sm:$0xff]
    %v245 = vld [vmem:[#allocation5 + $0x38] sm:$0xff]
    %v246 = vld [vmem:[#allocation5 + $0x40] sm:$0xff]
    %v247 = vld [vmem:[#allocation5 + $0x48] sm:$0xff]
    %v248 = vld [vmem:[#allocation5 + $0x50] sm:$0xff]
    %v249 = vld [vmem:[#allocation5 + $0x58] sm:$0xff]
    %v250 = vld [vmem:[#allocation5 + $0x60] sm:$0xff]
    %v251 = vld [vmem:[#allocation5 + $0x68] sm:$0xff]
    %v252 = vld [vmem:[#allocation5 + $0x70] sm:$0xff]
    %v253 = vld [vmem:[#allocation5 + $0x78] sm:$0xff]
    %v254 = vld [vmem:[#allocation5 + $0x80] sm:$0xff]
    %v255 = vld [vmem:[#allocation5 + $0x88] sm:$0xff]
    %v256 = vld [vmem:[#allocation5 + $0x90] sm:$0xff]
    %v257 = vld [vmem:[#allocation5 + $0x98] sm:$0xff]
    %v258 = vld [vmem:[#allocation5 + $0xa0] sm:$0xff]
    %v259 = vld [vmem:[#allocation5 + $0xa8] sm:$0xff]
    %v260 = vld [vmem:[#allocation5 + $0xb0] sm:$0xff]
    %v261 = vld [vmem:[#allocation5 + $0xb8] sm:$0xff]
    %v262 = vld [vmem:[#allocation5 + $0xc0] sm:$0xff]
    %v263 = vld [vmem:[#allocation5 + $0xc8] sm:$0xff]
    %v264 = vld [vmem:[#allocation5 + $0xd0] sm:$0xff]
    %v265 = vld [vmem:[#allocation5 + $0xd8] sm:$0xff]
    %v266 = vld [vmem:[#allocation5 + $0xe0] sm:$0xff]
    %v267 = vld [vmem:[#allocation5 + $0xe8] sm:$0xff]
    %v268 = vld [vmem:[#allocation5 + $0xf0] sm:$0xff]
    %v269 = vld [vmem:[#allocation5 + $0xf8] sm:$0xff]
    %v270 = vld [vmem:[#allocation5 + $0x100] sm:$0xff]
    %v271 = vld [vmem:[#allocation5 + $0x108] sm:$0xff]
    %v272 = vld [vmem:[#allocation5 + $0x110] sm:$0xff]
    %v273 = vld [vmem:[#allocation5 + $0x118] sm:$0xff]
    %v274 = vld [vmem:[#allocation5 + $0x120] sm:$0xff]
    %v275 = vld [vmem:[#allocation5 + $0x128] sm:$0xff]
    %v276 = vld [vmem:[#allocation5 + $0x130] sm:$0xff]
    %v277 = vld [vmem:[#allocation5 + $0x138] sm:$0xff]
    %v278 = vld [vmem:[#allocation5 + $0x140] sm:$0xff]
    %v279 = vld [vmem:[#allocation5 + $0x148] sm:$0xff]
    %v280 = vld [vmem:[#allocation5 + $0x150] sm:$0xff]
    %v281 = vld [vmem:[#allocation5 + $0x158] sm:$0xff]
    %v282 = vld [vmem:[#allocation5 + $0x160] sm:$0xff]
    %v283 = vld [vmem:[#allocation5 + $0x168] sm:$0xff]
    %v284 = vld [vmem:[#allocation5 + $0x170] sm:$0xff]
    %v285 = vld [vmem:[#allocation5 + $0x178] sm:$0xff]
    %v286 = vld [vmem:[#allocation7] sm:$0x7]
    %v287 = vld [vmem:[%s5] sm:$0xff]
    %v288 = vld [vmem:[%s5 + $0x8] sm:$0xff]
    %v289 = vld [vmem:[%s5 + $0x10] sm:$0xff]
    %v290 = vld [vmem:[%s5 + $0x18] sm:$0xff]
    %v291 = vld [vmem:[%s5 + $0x20] sm:$0xff]
    %v292 = vld [vmem:[%s5 + $0x28] sm:$0xff]
    %v293 = vld [vmem:[%s5 + $0x30] sm:$0xff]
    %v294 = vld [vmem:[%s5 + $0x38] sm:$0xff]
    %v295 = vld [vmem:[%s5 + $0x40] sm:$0xff]
    %v296 = vld [vmem:[%s5 + $0x48] sm:$0xff]
    %v297 = vld [vmem:[%s5 + $0x50] sm:$0xff]
    %v298 = vld [vmem:[%s5 + $0x58] sm:$0xff]
    %v299 = vld [vmem:[%s5 + $0x60] sm:$0xff]
    %v300 = vld [vmem:[%s5 + $0x68] sm:$0xff]
    %v301 = vld [vmem:[%s5 + $0x70] sm:$0xff]
    %v302 = vld [vmem:[%s5 + $0x78] sm:$0xff]
    %v303 = vld [vmem:[#allocation8] sm:$0x1]
    %v304 = vld [vmem:[#allocation10] sm:$0x1]
    %v305 = vld [vmem:[#allocation11] sm:$0x1]
    %v306 = vld [vmem:[#allocation13] sm:$0xff]
    %v307 = vld [vmem:[#allocation13 + $0x8] sm:$0xff]
    %v308 = vld [vmem:[#allocation13 + $0x10] sm:$0xff]
    %v309 = vld [vmem:[#allocation13 + $0x18] sm:$0xff]
    %v310 = vld [vmem:[#allocation13 + $0x20] sm:$0xff]
    %v311 = vld [vmem:[#allocation13 + $0x28] sm:$0xff]
    %v312 = vld [vmem:[#allocation13 + $0x30] sm:$0xff]
    %v313 = vld [vmem:[#allocation13 + $0x38] sm:$0xff]
    %v314 = vld [vmem:[#allocation13 + $0x40] sm:$0xff]
    %v315 = vld [vmem:[#allocation13 + $0x48] sm:$0xff]
    %v316 = vld [vmem:[#allocation13 + $0x50] sm:$0xff]
    %v317 = vld [vmem:[#allocation13 + $0x58] sm:$0xff]
    %v318 = vld [vmem:[#allocation13 + $0x60] sm:$0xff]
    %v319 = vld [vmem:[#allocation13 + $0x68] sm:$0xff]
    %v320 = vld [vmem:[#allocation13 + $0x70] sm:$0xff]
    %v321 = vld [vmem:[#allocation13 + $0x78] sm:$0xff]
    %v322 = vld [vmem:[#allocation13 + $0x80] sm:$0xff]
    %v323 = vld [vmem:[#allocation13 + $0x88] sm:$0xff]
    %v324 = vld [vmem:[#allocation13 + $0x90] sm:$0xff]
    %v325 = vld [vmem:[#allocation13 + $0x98] sm:$0xff]
    %v326 = vld [vmem:[#allocation13 + $0xa0] sm:$0xff]
    %v327 = vld [vmem:[#allocation13 + $0xa8] sm:$0xff]
    %v328 = vld [vmem:[#allocation13 + $0xb0] sm:$0xff]
    %v329 = vld [vmem:[#allocation13 + $0xb8] sm:$0xff]
    %v330 = vld [vmem:[#allocation13 + $0xc0] sm:$0xff]
    %v331 = vld [vmem:[#allocation13 + $0xc8] sm:$0xff]
    %v332 = vld [vmem:[#allocation13 + $0xd0] sm:$0xff]
    %v333 = vld [vmem:[#allocation13 + $0xd8] sm:$0xff]
    %v334 = vld [vmem:[#allocation13 + $0xe0] sm:$0xff]
    %v335 = vld [vmem:[#allocation13 + $0xe8] sm:$0xff]
    %v336 = vld [vmem:[#allocation13 + $0xf0] sm:$0xff]
    %v337 = vld [vmem:[#allocation13 + $0xf8] sm:$0xff]
    %v338 = vld [vmem:[%s10] sm:$0x3]
    %v339 = vld [vmem:[#allocation14] sm:$0xff]
    %v340 = vld [vmem:[#allocation14 + $0x8] sm:$0xff]
    %v341 = vld [vmem:[#allocation14 + $0x10] sm:$0xff]
    %v342 = vld [vmem:[#allocation14 + $0x18] sm:$0xff]
    %v343 = vld [vmem:[#allocation14 + $0x20] sm:$0xff]
    %v344 = vld [vmem:[#allocation14 + $0x28] sm:$0xff]
    %v345 = vld [vmem:[#allocation14 + $0x30] sm:$0xff]
    %v346 = vld [vmem:[#allocation14 + $0x38] sm:$0xff]
    %v347 = vld [vmem:[#allocation14 + $0x40] sm:$0xff]
    %v348 = vld [vmem:[#allocation14 + $0x48] sm:$0xff]
    %v349 = vld [vmem:[#allocation14 + $0x50] sm:$0xff]
    %v350 = vld [vmem:[#allocation14 + $0x58] sm:$0xff]
    %v351 = vld [vmem:[#allocation14 + $0x60] sm:$0xff]
    %v352 = vld [vmem:[#allocation14 + $0x68] sm:$0xff]
    %v353 = vld [vmem:[#allocation14 + $0x70] sm:$0xff]
    %v354 = vld [vmem:[#allocation14 + $0x78] sm:$0xff]
    %v355 = vld [vmem:[#allocation14 + $0x80] sm:$0xff]
    %v356 = vld [vmem:[#allocation14 + $0x88] sm:$0xff]
    %v357 = vld [vmem:[#allocation14 + $0x90] sm:$0xff]
    %v358 = vld [vmem:[#allocation14 + $0x98] sm:$0xff]
    %v359 = vld [vmem:[#allocation14 + $0xa0] sm:$0xff]
    %v360 = vld [vmem:[#allocation14 + $0xa8] sm:$0xff]
    %v361 = vld [vmem:[#allocation14 + $0xb0] sm:$0xff]
    %v362 = vld [vmem:[#allocation14 + $0xb8] sm:$0xff]
    %v363 = vld [vmem:[#allocation14 + $0xc0] sm:$0xff]
    %v364 = vld [vmem:[#allocation14 + $0xc8] sm:$0xff]
    %v365 = vld [vmem:[#allocation14 + $0xd0] sm:$0xff]
    %v366 = vld [vmem:[#allocation14 + $0xd8] sm:$0xff]
    %v367 = vld [vmem:[#allocation14 + $0xe0] sm:$0xff]
    %v368 = vld [vmem:[#allocation14 + $0xe8] sm:$0xff]
    %v369 = vld [vmem:[#allocation14 + $0xf0] sm:$0xff]
    %v370 = vld [vmem:[#allocation14 + $0xf8] sm:$0xff]
    %v371 = vld [vmem:[#allocation16] sm:$0x1]
    %v372 = vld [vmem:[#allocation17] sm:$0x1]
    %v373 = vld [vmem:[#allocation19] sm:$0x1]
    %v375 = vlaneseq
    %v376 = vshrl.u32 %v375, 7
    %v377 = vsub.s32 0, %v376
    %v378 = vrot.slane %v286, %v377
    %v379 = vlaneseq
    %v380 = vshrl.u32 %v379, 7
    %v381 = vsub.s32 1, %v380
    %v382 = vrot.slane %v286, %v381
    %v383 = vlaneseq
    %v384 = vshrl.u32 %v383, 7
    %v385 = vsub.s32 2, %v384
    %v386 = vrot.slane %v286, %v385
    %390 = vmatprep.subr.mxu0 %v239
    %391 = vmatpush1.msra.mxu0 %v238
    %392 = vmatprep.subr.mxu0 %v242
    %393 = vmatpush1.msra.mxu0 %v241
    %394 = vmatprep.subr.mxu0 %v245
    %395 = vmatpush1.msra.mxu0 %v244
    %396 = vmatprep.subr.mxu0 %v248
    %397 = vmatpush1.msra.mxu0 %v247
    %398 = vmatprep.subr.mxu0 %v251
    %399 = vmatpush1.msra.mxu0 %v250
    %400 = vmatprep.subr.mxu0 %v254
    %401 = vmatpush1.msra.mxu0 %v253
    %402 = vmatprep.subr.mxu0 %v257
    %403 = vmatpush1.msra.mxu0 %v256
    %404 = vmatprep.subr.mxu0 %v260
    %405 = vmatpush1.msra.mxu0 %v259
    %406 = vmatprep.subr.mxu0 %v263
    %407 = vmatpush1.msra.mxu0 %v262
    %408 = vmatprep.subr.mxu0 %v266
    %409 = vmatpush1.msra.mxu0 %v265
    %410 = vmatprep.subr.mxu0 %v269
    %411 = vmatpush1.msra.mxu0 %v268
    %412 = vmatprep.subr.mxu0 %v272
    %413 = vmatpush1.msra.mxu0 %v271
    %414 = vmatprep.subr.mxu0 %v275
    %415 = vmatpush1.msra.mxu0 %v274
    %416 = vmatprep.subr.mxu0 %v278
    %417 = vmatpush1.msra.mxu0 %v277
    %418 = vmatprep.subr.mxu0 %v281
    %419 = vmatpush1.msra.mxu0 %v280
    %420 = vmatprep.subr.mxu0 %v284
    %421 = vmatpush1.msra.mxu0 %v283
    %422 = vmatprep.subr.mxu0 0.0
    %423 = vmatpush1.msra.mxu0 0.0
    %424 = vmatprep.subr.mxu0 0.0
    %425 = vmatpush1.msra.mxu0 0.0
    %426 = vmatprep.subr.mxu0 0.0
    %427 = vmatpush1.msra.mxu0 0.0
    %428 = vmatprep.subr.mxu0 0.0
    %429 = vmatpush1.msra.mxu0 0.0
    %430 = vmatprep.subr.mxu0 0.0
    %431 = vmatpush1.msra.mxu0 0.0
    %432 = vmatprep.subr.mxu0 0.0
    %433 = vmatpush1.msra.mxu0 0.0
    %434 = vmatprep.subr.mxu0 0.0
    %435 = vmatpush1.msra.mxu0 0.0
    %436 = vmatprep.subr.mxu0 0.0
    %437 = vmatpush1.msra.mxu0 0.0
    %438 = vmatprep.subr.mxu0 0.0
    %439 = vmatpush1.msra.mxu0 0.0
    %440 = vmatprep.subr.mxu0 0.0
    %441 = vmatpush1.msra.mxu0 0.0
    %442 = vmatprep.subr.mxu0 0.0
    %443 = vmatpush1.msra.mxu0 0.0
    %444 = vmatprep.subr.mxu0 0.0
    %445 = vmatpush1.msra.mxu0 0.0
    %446 = vmatprep.subr.mxu0 0.0
    %447 = vmatpush1.msra.mxu0 0.0
    %448 = vmatprep.subr.mxu0 0.0
    %449 = vmatpush1.msra.mxu0 0.0
    %450 = vmatprep.subr.mxu0 0.0
    %451 = vmatpush1.msra.mxu0 0.0
    %452 = vmatprep.subr.mxu0 0.0
    %453 = vmatpush1.msra.mxu0 0.0
    %454 = vmatprep.mubr.f32.mxu0 0.0
    %455 = vmatmul.mubr.f32.gmra.mrb[0].mxu0 %v236
    %v456 = vpop.f32.mrb[0].mxu0
    %v457 = vadd.f32 %v378, %v456
    %v458 = vpop.f32.mrb[0].mxu0
    %v459 = vadd.f32 %v382, %v458
    %460 = vmatprep.mubr.f32.mxu0 0.0
    %461 = vmatmul.mubr.f32.gmra.mrb[0].mxu0 %v237
    %v462 = vpop.f32.mrb[0].mxu0
    %v463 = vadd.f32 %v378, %v462
    %v464 = vpop.f32.mrb[0].mxu0
    %v465 = vadd.f32 %v382, %v464
    %466 = vdwg.mxu0
    %467 = vmatprep.subr.mxu0 0.0
    %468 = vmatpush1.msra.mxu0 %v240
    %469 = vmatprep.subr.mxu0 0.0
    %470 = vmatpush1.msra.mxu0 %v243
    %471 = vmatprep.subr.mxu0 0.0
    %472 = vmatpush1.msra.mxu0 %v246
    %473 = vmatprep.subr.mxu0 0.0
    %474 = vmatpush1.msra.mxu0 %v249
    %475 = vmatprep.subr.mxu0 0.0
    %476 = vmatpush1.msra.mxu0 %v252
    %477 = vmatprep.subr.mxu0 0.0
    %478 = vmatpush1.msra.mxu0 %v255
    %479 = vmatprep.subr.mxu0 0.0
    %480 = vmatpush1.msra.mxu0 %v258
    %481 = vmatprep.subr.mxu0 0.0
    %482 = vmatpush1.msra.mxu0 %v261
    %483 = vmatprep.subr.mxu0 0.0
    %484 = vmatpush1.msra.mxu0 %v264
    %485 = vmatprep.subr.mxu0 0.0
    %486 = vmatpush1.msra.mxu0 %v267
    %487 = vmatprep.subr.mxu0 0.0
    %488 = vmatpush1.msra.mxu0 %v270
    %489 = vmatprep.subr.mxu0 0.0
    %490 = vmatpush1.msra.mxu0 %v273
    %491 = vmatprep.subr.mxu0 0.0
    %492 = vmatpush1.msra.mxu0 %v276
    %493 = vmatprep.subr.mxu0 0.0
    %494 = vmatpush1.msra.mxu0 %v279
    %495 = vmatprep.subr.mxu0 0.0
    %496 = vmatpush1.msra.mxu0 %v282
    %497 = vmatprep.subr.mxu0 0.0
    %498 = vmatpush1.msra.mxu0 %v285
    %499 = vmatprep.subr.mxu0 0.0
    %500 = vmatpush1.msra.mxu0 0.0
    %501 = vmatprep.subr.mxu0 0.0
    %502 = vmatpush1.msra.mxu0 0.0
    %503 = vmatprep.subr.mxu0 0.0
    %504 = vmatpush1.msra.mxu0 0.0
    %505 = vmatprep.subr.mxu0 0.0
    %506 = vmatpush1.msra.mxu0 0.0
    %507 = vmatprep.subr.mxu0 0.0
    %508 = vmatpush1.msra.mxu0 0.0
    %509 = vmatprep.subr.mxu0 0.0
    %510 = vmatpush1.msra.mxu0 0.0
    %511 = vmatprep.subr.mxu0 0.0
    %512 = vmatpush1.msra.mxu0 0.0
    %513 = vmatprep.subr.mxu0 0.0
    %514 = vmatpush1.msra.mxu0 0.0
    %515 = vmatprep.subr.mxu0 0.0
    %516 = vmatpush1.msra.mxu0 0.0
    %517 = vmatprep.subr.mxu0 0.0
    %518 = vmatpush1.msra.mxu0 0.0
    %519 = vmatprep.subr.mxu0 0.0
    %520 = vmatpush1.msra.mxu0 0.0
    %521 = vmatprep.subr.mxu0 0.0
    %522 = vmatpush1.msra.mxu0 0.0
    %523 = vmatprep.subr.mxu0 0.0
    %524 = vmatpush1.msra.mxu0 0.0
    %525 = vmatprep.subr.mxu0 0.0
    %526 = vmatpush1.msra.mxu0 0.0
    %527 = vmatprep.subr.mxu0 0.0
    %528 = vmatpush1.msra.mxu0 0.0
    %529 = vmatprep.subr.mxu0 0.0
    %530 = vmatpush1.msra.mxu0 0.0
    %531 = vmatprep.mubr.f32.mxu0 0.0
    %532 = vmatmul.mubr.f32.gmra.mrb[0].mxu0 %v236
    %v533 = vpop.f32.mrb[0].mxu0
    %v534 = vadd.f32 %v386, %v533
    %v535 = vpop.f32.mrb[0].mxu0
    %536 = vmatprep.mubr.f32.mxu0 0.0
    %537 = vmatmul.mubr.f32.gmra.mrb[0].mxu0 %v237
    %v538 = vpop.f32.mrb[0].mxu0
    %v539 = vadd.f32 %v386, %v538
    %v540 = vpop.f32.mrb[0].mxu0
    %541 = vdwg.mxu0
    %vm542 = vcmask 261120
    %v544 = vsel %vm542, %v457, 0
    %v547 = vsel %vm542, %v459, 0
    %549 = vmatprep.subr.mxu0 0.0
    %550 = vmatpush1.xpose.msra.mxu0 %v547
    %551 = vmatprep.subr.mxu0 0.0
    %552 = vmatpush1.xpose.msra.mxu0 0.0
    %553 = vmatprep.subr.mxu0 0.0
    %554 = vmatpush1.xpose.msra.mxu0 0.0
    %555 = vmatprep.subr.mxu0 0.0
    %556 = vmatpush1.xpose.msra.mxu0 0.0
    %557 = vmatprep.subr.mxu0 0.0
    %558 = vmatpush1.xpose.msra.mxu0 0.0
    %559 = vmatprep.subr.mxu0 0.0
    %560 = vmatpush1.xpose.msra.mxu0 0.0
    %561 = vmatprep.subr.mxu0 0.0
    %562 = vmatpush1.xpose.msra.mxu0 0.0
    %563 = vmatprep.subr.mxu0 0.0
    %564 = vmatpush1.xpose.msra.mxu0 0.0
    %565 = vmatprep.subr.mxu0 0.0
    %566 = vmatpush1.xpose.msra.mxu0 0.0
    %567 = vmatprep.subr.mxu0 0.0
    %568 = vmatpush1.xpose.msra.mxu0 0.0
    %569 = vmatprep.subr.mxu0 0.0
    %570 = vmatpush1.xpose.msra.mxu0 0.0
    %571 = vmatprep.subr.mxu0 0.0
    %572 = vmatpush1.xpose.msra.mxu0 0.0
    %573 = vmatprep.subr.mxu0 0.0
    %574 = vmatpush1.xpose.msra.mxu0 0.0
    %575 = vmatprep.subr.mxu0 0.0
    %576 = vmatpush1.xpose.msra.mxu0 0.0
    %577 = vmatprep.subr.mxu0 0.0
    %578 = vmatpush1.xpose.msra.mxu0 0.0
    %579 = vmatprep.subr.mxu0 0.0
    %580 = vmatpush1.xpose.msra.mxu0 0.0
    %581 = vmatprep.subr.mxu0 0.0
    %582 = vmatpush1.xpose.msra.mxu0 0.0
    %583 = vmatprep.subr.mxu0 0.0
    %584 = vmatpush1.xpose.msra.mxu0 0.0
    %585 = vmatprep.subr.mxu0 0.0
    %586 = vmatpush1.xpose.msra.mxu0 0.0
    %587 = vmatprep.subr.mxu0 0.0
    %588 = vmatpush1.xpose.msra.mxu0 0.0
    %589 = vmatprep.subr.mxu0 0.0
    %590 = vmatpush1.xpose.msra.mxu0 0.0
    %591 = vmatprep.subr.mxu0 0.0
    %592 = vmatpush1.xpose.msra.mxu0 0.0
    %593 = vmatprep.subr.mxu0 0.0
    %594 = vmatpush1.xpose.msra.mxu0 0.0
    %595 = vmatprep.subr.mxu0 0.0
    %596 = vmatpush1.xpose.msra.mxu0 0.0
    %597 = vmatprep.subr.mxu0 0.0
    %598 = vmatpush1.xpose.msra.mxu0 0.0
    %599 = vmatprep.subr.mxu0 0.0
    %600 = vmatpush1.xpose.msra.mxu0 0.0
    %601 = vmatprep.subr.mxu0 0.0
    %602 = vmatpush1.xpose.msra.mxu0 0.0
    %603 = vmatprep.subr.mxu0 0.0
    %604 = vmatpush1.xpose.msra.mxu0 0.0
    %605 = vmatprep.subr.mxu0 0.0
    %606 = vmatpush1.xpose.msra.mxu0 0.0
    %607 = vmatprep.subr.mxu0 0.0
    %608 = vmatpush1.xpose.msra.mxu0 0.0
    %609 = vmatprep.subr.mxu0 0.0
    %610 = vmatpush1.xpose.msra.mxu0 0.0
    %611 = vmatprep.subr.mxu0 0.0
    %612 = vmatpush1.xpose.msra.mxu0 0.0
    %613 = vmatprep.mubr.f32.mxu0 0.0
    %614 = vmatmul.mubr.f32.gmra.mrb[0].mxu0 %v544
    %v615 = vpop.f32.mrb[0].mxu0
    %v616 = vadd.f32 0.0, %v615
    %v617 = vpop.f32.mrb[0].mxu0
    %618 = vdwg.mxu0
    %v620 = vsel %vm542, %v463, 0
    %v623 = vsel %vm542, %v465, 0
    %625 = vmatprep.subr.mxu0 0.0
    %626 = vmatpush1.xpose.msra.mxu0 %v623
    %627 = vmatprep.subr.mxu0 0.0
    %628 = vmatpush1.xpose.msra.mxu0 0.0
    %629 = vmatprep.subr.mxu0 0.0
    %630 = vmatpush1.xpose.msra.mxu0 0.0
    %631 = vmatprep.subr.mxu0 0.0
    %632 = vmatpush1.xpose.msra.mxu0 0.0
    %633 = vmatprep.subr.mxu0 0.0
    %634 = vmatpush1.xpose.msra.mxu0 0.0
    %635 = vmatprep.subr.mxu0 0.0
    %636 = vmatpush1.xpose.msra.mxu0 0.0
    %637 = vmatprep.subr.mxu0 0.0
    %638 = vmatpush1.xpose.msra.mxu0 0.0
    %639 = vmatprep.subr.mxu0 0.0
    %640 = vmatpush1.xpose.msra.mxu0 0.0
    %641 = vmatprep.subr.mxu0 0.0
    %642 = vmatpush1.xpose.msra.mxu0 0.0
    %643 = vmatprep.subr.mxu0 0.0
    %644 = vmatpush1.xpose.msra.mxu0 0.0
    %645 = vmatprep.subr.mxu0 0.0
    %646 = vmatpush1.xpose.msra.mxu0 0.0
    %647 = vmatprep.subr.mxu0 0.0
    %648 = vmatpush1.xpose.msra.mxu0 0.0
    %649 = vmatprep.subr.mxu0 0.0
    %650 = vmatpush1.xpose.msra.mxu0 0.0
    %651 = vmatprep.subr.mxu0 0.0
    %652 = vmatpush1.xpose.msra.mxu0 0.0
    %653 = vmatprep.subr.mxu0 0.0
    %654 = vmatpush1.xpose.msra.mxu0 0.0
    %655 = vmatprep.subr.mxu0 0.0
    %656 = vmatpush1.xpose.msra.mxu0 0.0
    %657 = vmatprep.subr.mxu0 0.0
    %658 = vmatpush1.xpose.msra.mxu0 0.0
    %659 = vmatprep.subr.mxu0 0.0
    %660 = vmatpush1.xpose.msra.mxu0 0.0
    %661 = vmatprep.subr.mxu0 0.0
    %662 = vmatpush1.xpose.msra.mxu0 0.0
    %663 = vmatprep.subr.mxu0 0.0
    %664 = vmatpush1.xpose.msra.mxu0 0.0
    %665 = vmatprep.subr.mxu0 0.0
    %666 = vmatpush1.xpose.msra.mxu0 0.0
    %667 = vmatprep.subr.mxu0 0.0
    %668 = vmatpush1.xpose.msra.mxu0 0.0
    %669 = vmatprep.subr.mxu0 0.0
    %670 = vmatpush1.xpose.msra.mxu0 0.0
    %671 = vmatprep.subr.mxu0 0.0
    %672 = vmatpush1.xpose.msra.mxu0 0.0
    %673 = vmatprep.subr.mxu0 0.0
    %674 = vmatpush1.xpose.msra.mxu0 0.0
    %675 = vmatprep.subr.mxu0 0.0
    %676 = vmatpush1.xpose.msra.mxu0 0.0
    %677 = vmatprep.subr.mxu0 0.0
    %678 = vmatpush1.xpose.msra.mxu0 0.0
    %679 = vmatprep.subr.mxu0 0.0
    %680 = vmatpush1.xpose.msra.mxu0 0.0
    %681 = vmatprep.subr.mxu0 0.0
    %682 = vmatpush1.xpose.msra.mxu0 0.0
    %683 = vmatprep.subr.mxu0 0.0
    %684 = vmatpush1.xpose.msra.mxu0 0.0
    %685 = vmatprep.subr.mxu0 0.0
    %686 = vmatpush1.xpose.msra.mxu0 0.0
    %687 = vmatprep.subr.mxu0 0.0
    %688 = vmatpush1.xpose.msra.mxu0 0.0
    %689 = vmatprep.mubr.f32.mxu0 0.0
    %690 = vmatmul.mubr.f32.gmra.mrb[0].mxu0 %v620
    %v691 = vpop.f32.mrb[0].mxu0
    %v692 = vadd.f32 0.0, %v691
    %v693 = vpop.f32.mrb[0].mxu0
    %694 = vdwg.mxu0
    %v695 = vmul.f32 %v616, 0.17677669
    %v696 = vmul.f32 %v692, 0.17677669
    %vm697 = vcmask 64512
    %v698 = vsel %vm697, %v695, -inf
    %699 = vmax.xlane.f32.xlu0 %v698
    %v700 = vpop.xlane.xlu0 %699
    %v701 = vsel %vm697, %v696, -inf
    %702 = vmax.xlane.f32.xlu0 %v701
    %v703 = vpop.xlane.xlu0 %702
    %v704 = vsub.f32 %v695, %v700
    %v705 = vsub.f32 %v696, %v703
    %v706 = vmul.f32 %v704, 1.442695
    %v707 = vpow.pop %v706
    %v708 = vmul.f32 %v705, 1.442695
    %v709 = vpow.pop %v708
    %v710 = vsel %vm697, %v707, 0.0
    %711 = vadd.xlane.f32.xlu0 %v710
    %v712 = vpop.xlane.xlu0 %711
    %v713 = vsel %vm697, %v709, 0.0
    %714 = vadd.xlane.f32.xlu0 %v713
    %v715 = vpop.xlane.xlu0 %714
    %v716 = vrcp.pop %v712
    %v717 = vrcp.pop %v715
    %v718 = vmul.f32 %v707, %v716
    %v719 = vmul.f32 %v709, %v717
    %v721 = vsel %vm697, %v718, 0
    %723 = vmatprep.subr.mxu0 0.0
    %724 = vmatpush1.msra.mxu0 %v534
    %725 = vmatprep.subr.mxu0 0.0
    %726 = vmatpush1.msra.mxu0 0.0
    %727 = vmatprep.subr.mxu0 0.0
    %728 = vmatpush1.msra.mxu0 0.0
    %729 = vmatprep.subr.mxu0 0.0
    %730 = vmatpush1.msra.mxu0 0.0
    %731 = vmatprep.subr.mxu0 0.0
    %732 = vmatpush1.msra.mxu0 0.0
    %733 = vmatprep.subr.mxu0 0.0
    %734 = vmatpush1.msra.mxu0 0.0
    %735 = vmatprep.subr.mxu0 0.0
    %736 = vmatpush1.msra.mxu0 0.0
    %737 = vmatprep.subr.mxu0 0.0
    %738 = vmatpush1.msra.mxu0 0.0
    %739 = vmatprep.subr.mxu0 0.0
    %740 = vmatpush1.msra.mxu0 0.0
    %741 = vmatprep.subr.mxu0 0.0
    %742 = vmatpush1.msra.mxu0 0.0
    %743 = vmatprep.subr.mxu0 0.0
    %744 = vmatpush1.msra.mxu0 0.0
    %745 = vmatprep.subr.mxu0 0.0
    %746 = vmatpush1.msra.mxu0 0.0
    %747 = vmatprep.subr.mxu0 0.0
    %748 = vmatpush1.msra.mxu0 0.0
    %749 = vmatprep.subr.mxu0 0.0
    %750 = vmatpush1.msra.mxu0 0.0
    %751 = vmatprep.subr.mxu0 0.0
    %752 = vmatpush1.msra.mxu0 0.0
    %753 = vmatprep.subr.mxu0 0.0
    %754 = vmatpush1.msra.mxu0 0.0
    %755 = vmatprep.subr.mxu0 0.0
    %756 = vmatpush1.msra.mxu0 0.0
    %757 = vmatprep.subr.mxu0 0.0
    %758 = vmatpush1.msra.mxu0 0.0
    %759 = vmatprep.subr.mxu0 0.0
    %760 = vmatpush1.msra.mxu0 0.0
    %761 = vmatprep.subr.mxu0 0.0
    %762 = vmatpush1.msra.mxu0 0.0
    %763 = vmatprep.subr.mxu0 0.0
    %764 = vmatpush1.msra.mxu0 0.0
    %765 = vmatprep.subr.mxu0 0.0
    %766 = vmatpush1.msra.mxu0 0.0
    %767 = vmatprep.subr.mxu0 0.0
    %768 = vmatpush1.msra.mxu0 0.0
    %769 = vmatprep.subr.mxu0 0.0
    %770 = vmatpush1.msra.mxu0 0.0
    %771 = vmatprep.subr.mxu0 0.0
    %772 = vmatpush1.msra.mxu0 0.0
    %773 = vmatprep.subr.mxu0 0.0
    %774 = vmatpush1.msra.mxu0 0.0
    %775 = vmatprep.subr.mxu0 0.0
    %776 = vmatpush1.msra.mxu0 0.0
    %777 = vmatprep.subr.mxu0 0.0
    %778 = vmatpush1.msra.mxu0 0.0
    %779 = vmatprep.subr.mxu0 0.0
    %780 = vmatpush1.msra.mxu0 0.0
    %781 = vmatprep.subr.mxu0 0.0
    %782 = vmatpush1.msra.mxu0 0.0
    %783 = vmatprep.subr.mxu0 0.0
    %784 = vmatpush1.msra.mxu0 0.0
    %785 = vmatprep.subr.mxu0 0.0
    %786 = vmatpush1.msra.mxu0 0.0
    %787 = vmatprep.mubr.f32.mxu0 0.0
    %788 = vmatmul.mubr.f32.gmra.mrb[0].mxu0 %v721
    %v789 = vpop.f32.mrb[0].mxu0
    %v790 = vadd.f32 0.0, %v789
    %v791 = vpop.f32.mrb[0].mxu0
    %792 = vdwg.mxu0
    %v794 = vsel %vm697, %v719, 0
    %796 = vmatprep.subr.mxu0 0.0
    %797 = vmatpush1.msra.mxu0 %v539
    %798 = vmatprep.subr.mxu0 0.0
    %799 = vmatpush1.msra.mxu0 0.0
    %800 = vmatprep.subr.mxu0 0.0
    %801 = vmatpush1.msra.mxu0 0.0
    %802 = vmatprep.subr.mxu0 0.0
    %803 = vmatpush1.msra.mxu0 0.0
    %804 = vmatprep.subr.mxu0 0.0
    %805 = vmatpush1.msra.mxu0 0.0
    %806 = vmatprep.subr.mxu0 0.0
    %807 = vmatpush1.msra.mxu0 0.0
    %808 = vmatprep.subr.mxu0 0.0
    %809 = vmatpush1.msra.mxu0 0.0
    %810 = vmatprep.subr.mxu0 0.0
    %811 = vmatpush1.msra.mxu0 0.0
    %812 = vmatprep.subr.mxu0 0.0
    %813 = vmatpush1.msra.mxu0 0.0
    %814 = vmatprep.subr.mxu0 0.0
    %815 = vmatpush1.msra.mxu0 0.0
    %816 = vmatprep.subr.mxu0 0.0
    %817 = vmatpush1.msra.mxu0 0.0
    %818 = vmatprep.subr.mxu0 0.0
    %819 = vmatpush1.msra.mxu0 0.0
    %820 = vmatprep.subr.mxu0 0.0
    %821 = vmatpush1.msra.mxu0 0.0
    %822 = vmatprep.subr.mxu0 0.0
    %823 = vmatpush1.msra.mxu0 0.0
    %824 = vmatprep.subr.mxu0 0.0
    %825 = vmatpush1.msra.mxu0 0.0
    %826 = vmatprep.subr.mxu0 0.0
    %827 = vmatpush1.msra.mxu0 0.0
    %828 = vmatprep.subr.mxu0 0.0
    %829 = vmatpush1.msra.mxu0 0.0
    %830 = vmatprep.subr.mxu0 0.0
    %831 = vmatpush1.msra.mxu0 0.0
    %832 = vmatprep.subr.mxu0 0.0
    %833 = vmatpush1.msra.mxu0 0.0
    %834 = vmatprep.subr.mxu0 0.0
    %835 = vmatpush1.msra.mxu0 0.0
    %836 = vmatprep.subr.mxu0 0.0
    %837 = vmatpush1.msra.mxu0 0.0
    %838 = vmatprep.subr.mxu0 0.0
    %839 = vmatpush1.msra.mxu0 0.0
    %840 = vmatprep.subr.mxu0 0.0
    %841 = vmatpush1.msra.mxu0 0.0
    %842 = vmatprep.subr.mxu0 0.0
    %843 = vmatpush1.msra.mxu0 0.0
    %844 = vmatprep.subr.mxu0 0.0
    %845 = vmatpush1.msra.mxu0 0.0
    %846 = vmatprep.subr.mxu0 0.0
    %847 = vmatpush1.msra.mxu0 0.0
    %848 = vmatprep.subr.mxu0 0.0
    %849 = vmatpush1.msra.mxu0 0.0
    %850 = vmatprep.subr.mxu0 0.0
    %851 = vmatpush1.msra.mxu0 0.0
    %852 = vmatprep.subr.mxu0 0.0
    %853 = vmatpush1.msra.mxu0 0.0
    %854 = vmatprep.subr.mxu0 0.0
    %855 = vmatpush1.msra.mxu0 0.0
    %856 = vmatprep.subr.mxu0 0.0
    %857 = vmatpush1.msra.mxu0 0.0
    %858 = vmatprep.subr.mxu0 0.0
    %859 = vmatpush1.msra.mxu0 0.0
    %860 = vmatprep.mubr.f32.mxu0 0.0
    %861 = vmatmul.mubr.f32.gmra.mrb[0].mxu0 %v794
    %v862 = vpop.f32.mrb[0].mxu0
    %v863 = vadd.f32 0.0, %v862
    %v864 = vpop.f32.mrb[0].mxu0
    %865 = vdwg.mxu0
    %866 = vrot.lane.b32.xlu0 %v457, 96
    %v867 = vpop.permute.xlu0 %866
    %868 = vrot.lane.b32.xlu0 %v459, 96
    %v869 = vpop.permute.xlu0 %868
    %v870 = vsel %vm542, %v867, 0
    %v872 = vsel %vm542, %v869, 0
    %874 = vmatprep.subr.mxu0 0.0
    %875 = vmatpush1.xpose.msra.mxu0 %v872
    %876 = vmatprep.subr.mxu0 0.0
    %877 = vmatpush1.xpose.msra.mxu0 0.0
    %878 = vmatprep.subr.mxu0 0.0
    %879 = vmatpush1.xpose.msra.mxu0 0.0
    %880 = vmatprep.subr.mxu0 0.0
    %881 = vmatpush1.xpose.msra.mxu0 0.0
    %882 = vmatprep.subr.mxu0 0.0
    %883 = vmatpush1.xpose.msra.mxu0 0.0
    %884 = vmatprep.subr.mxu0 0.0
    %885 = vmatpush1.xpose.msra.mxu0 0.0
    %886 = vmatprep.subr.mxu0 0.0
    %887 = vmatpush1.xpose.msra.mxu0 0.0
    %888 = vmatprep.subr.mxu0 0.0
    %889 = vmatpush1.xpose.msra.mxu0 0.0
    %890 = vmatprep.subr.mxu0 0.0
    %891 = vmatpush1.xpose.msra.mxu0 0.0
    %892 = vmatprep.subr.mxu0 0.0
    %893 = vmatpush1.xpose.msra.mxu0 0.0
    %894 = vmatprep.subr.mxu0 0.0
    %895 = vmatpush1.xpose.msra.mxu0 0.0
    %896 = vmatprep.subr.mxu0 0.0
    %897 = vmatpush1.xpose.msra.mxu0 0.0
    %898 = vmatprep.subr.mxu0 0.0
    %899 = vmatpush1.xpose.msra.mxu0 0.0
    %900 = vmatprep.subr.mxu0 0.0
    %901 = vmatpush1.xpose.msra.mxu0 0.0
    %902 = vmatprep.subr.mxu0 0.0
    %903 = vmatpush1.xpose.msra.mxu0 0.0
    %904 = vmatprep.subr.mxu0 0.0
    %905 = vmatpush1.xpose.msra.mxu0 0.0
    %906 = vmatprep.subr.mxu0 0.0
    %907 = vmatpush1.xpose.msra.mxu0 0.0
    %908 = vmatprep.subr.mxu0 0.0
    %909 = vmatpush1.xpose.msra.mxu0 0.0
    %910 = vmatprep.subr.mxu0 0.0
    %911 = vmatpush1.xpose.msra.mxu0 0.0
    %912 = vmatprep.subr.mxu0 0.0
    %913 = vmatpush1.xpose.msra.mxu0 0.0
    %914 = vmatprep.subr.mxu0 0.0
    %915 = vmatpush1.xpose.msra.mxu0 0.0
    %916 = vmatprep.subr.mxu0 0.0
    %917 = vmatpush1.xpose.msra.mxu0 0.0
    %918 = vmatprep.subr.mxu0 0.0
    %919 = vmatpush1.xpose.msra.mxu0 0.0
    %920 = vmatprep.subr.mxu0 0.0
    %921 = vmatpush1.xpose.msra.mxu0 0.0
    %922 = vmatprep.subr.mxu0 0.0
    %923 = vmatpush1.xpose.msra.mxu0 0.0
    %924 = vmatprep.subr.mxu0 0.0
    %925 = vmatpush1.xpose.msra.mxu0 0.0
    %926 = vmatprep.subr.mxu0 0.0
    %927 = vmatpush1.xpose.msra.mxu0 0.0
    %928 = vmatprep.subr.mxu0 0.0
    %929 = vmatpush1.xpose.msra.mxu0 0.0
    %930 = vmatprep.subr.mxu0 0.0
    %931 = vmatpush1.xpose.msra.mxu0 0.0
    %932 = vmatprep.subr.mxu0 0.0
    %933 = vmatpush1.xpose.msra.mxu0 0.0
    %934 = vmatprep.subr.mxu0 0.0
    %935 = vmatpush1.xpose.msra.mxu0 0.0
    %936 = vmatprep.subr.mxu0 0.0
    %937 = vmatpush1.xpose.msra.mxu0 0.0
    %938 = vmatprep.mubr.f32.mxu0 0.0
    %939 = vmatmul.mubr.f32.gmra.mrb[0].mxu0 %v870
    %v940 = vpop.f32.mrb[0].mxu0
    %v941 = vadd.f32 0.0, %v940
    %v942 = vpop.f32.mrb[0].mxu0
    %943 = vdwg.mxu0
    %944 = vrot.lane.b32.xlu0 %v463, 96
    %v945 = vpop.permute.xlu0 %944
    %946 = vrot.lane.b32.xlu0 %v465, 96
    %v947 = vpop.permute.xlu0 %946
    %v948 = vsel %vm542, %v945, 0
    %v950 = vsel %vm542, %v947, 0
    %952 = vmatprep.subr.mxu0 0.0
    %953 = vmatpush1.xpose.msra.mxu0 %v950
    %954 = vmatprep.subr.mxu0 0.0
    %955 = vmatpush1.xpose.msra.mxu0 0.0
    %956 = vmatprep.subr.mxu0 0.0
    %957 = vmatpush1.xpose.msra.mxu0 0.0
    %958 = vmatprep.subr.mxu0 0.0
    %959 = vmatpush1.xpose.msra.mxu0 0.0
    %960 = vmatprep.subr.mxu0 0.0
    %961 = vmatpush1.xpose.msra.mxu0 0.0
    %962 = vmatprep.subr.mxu0 0.0
    %963 = vmatpush1.xpose.msra.mxu0 0.0
    %964 = vmatprep.subr.mxu0 0.0
    %965 = vmatpush1.xpose.msra.mxu0 0.0
    %966 = vmatprep.subr.mxu0 0.0
    %967 = vmatpush1.xpose.msra.mxu0 0.0
    %968 = vmatprep.subr.mxu0 0.0
    %969 = vmatpush1.xpose.msra.mxu0 0.0
    %970 = vmatprep.subr.mxu0 0.0
    %971 = vmatpush1.xpose.msra.mxu0 0.0
    %972 = vmatprep.subr.mxu0 0.0
    %973 = vmatpush1.xpose.msra.mxu0 0.0
    %974 = vmatprep.subr.mxu0 0.0
    %975 = vmatpush1.xpose.msra.mxu0 0.0
    %976 = vmatprep.subr.mxu0 0.0
    %977 = vmatpush1.xpose.msra.mxu0 0.0
    %978 = vmatprep.subr.mxu0 0.0
    %979 = vmatpush1.xpose.msra.mxu0 0.0
    %980 = vmatprep.subr.mxu0 0.0
    %981 = vmatpush1.xpose.msra.mxu0 0.0
    %982 = vmatprep.subr.mxu0 0.0
    %983 = vmatpush1.xpose.msra.mxu0 0.0
    %984 = vmatprep.subr.mxu0 0.0
    %985 = vmatpush1.xpose.msra.mxu0 0.0
    %986 = vmatprep.subr.mxu0 0.0
    %987 = vmatpush1.xpose.msra.mxu0 0.0
    %988 = vmatprep.subr.mxu0 0.0
    %989 = vmatpush1.xpose.msra.mxu0 0.0
    %990 = vmatprep.subr.mxu0 0.0
    %991 = vmatpush1.xpose.msra.mxu0 0.0
    %992 = vmatprep.subr.mxu0 0.0
    %993 = vmatpush1.xpose.msra.mxu0 0.0
    %994 = vmatprep.subr.mxu0 0.0
    %995 = vmatpush1.xpose.msra.mxu0 0.0
    %996 = vmatprep.subr.mxu0 0.0
    %997 = vmatpush1.xpose.msra.mxu0 0.0
    %998 = vmatprep.subr.mxu0 0.0
    %999 = vmatpush1.xpose.msra.mxu0 0.0
    %1000 = vmatprep.subr.mxu0 0.0
    %1001 = vmatpush1.xpose.msra.mxu0 0.0
    %1002 = vmatprep.subr.mxu0 0.0
    %1003 = vmatpush1.xpose.msra.mxu0 0.0
    %1004 = vmatprep.subr.mxu0 0.0
    %1005 = vmatpush1.xpose.msra.mxu0 0.0
    %1006 = vmatprep.subr.mxu0 0.0
    %1007 = vmatpush1.xpose.msra.mxu0 0.0
    %1008 = vmatprep.subr.mxu0 0.0
    %1009 = vmatpush1.xpose.msra.mxu0 0.0
    %1010 = vmatprep.subr.mxu0 0.0
    %1011 = vmatpush1.xpose.msra.mxu0 0.0
    %1012 = vmatprep.subr.mxu0 0.0
    %1013 = vmatpush1.xpose.msra.mxu0 0.0
    %1014 = vmatprep.subr.mxu0 0.0
    %1015 = vmatpush1.xpose.msra.mxu0 0.0
    %1016 = vmatprep.mubr.f32.mxu0 0.0
    %1017 = vmatmul.mubr.f32.gmra.mrb[0].mxu0 %v948
    %v1018 = vpop.f32.mrb[0].mxu0
    %v1019 = vadd.f32 0.0, %v1018
    %v1020 = vpop.f32.mrb[0].mxu0
    %1021 = vdwg.mxu0
    %v1022 = vmul.f32 %v941, 0.17677669
    %v1023 = vmul.f32 %v1019, 0.17677669
    %v1024 = vsel %vm697, %v1022, -inf
    %1025 = vmax.xlane.f32.xlu0 %v1024
    %v1026 = vpop.xlane.xlu0 %1025
    %v1027 = vsel %vm697, %v1023, -inf
    %1028 = vmax.xlane.f32.xlu0 %v1027
    %v1029 = vpop.xlane.xlu0 %1028
    %v1030 = vsub.f32 %v1022, %v1026
    %v1031 = vsub.f32 %v1023, %v1029
    %v1032 = vmul.f32 %v1030, 1.442695
    %v1033 = vpow.pop %v1032
    %v1034 = vmul.f32 %v1031, 1.442695
    %v1035 = vpow.pop %v1034
    %v1036 = vsel %vm697, %v1033, 0.0
    %1037 = vadd.xlane.f32.xlu0 %v1036
    %v1038 = vpop.xlane.xlu0 %1037
    %v1039 = vsel %vm697, %v1035, 0.0
    %1040 = vadd.xlane.f32.xlu0 %v1039
    %v1041 = vpop.xlane.xlu0 %1040
    %v1042 = vrcp.pop %v1038
    %v1043 = vrcp.pop %v1041
    %v1044 = vmul.f32 %v1033, %v1042
    %v1045 = vmul.f32 %v1035, %v1043
    %1047 = vrot.lane.b32.xlu0 %v534, 96
    %v1048 = vpop.permute.xlu0 %1047
    %v1051 = vsel %vm697, %v1044, 0
    %1053 = vmatprep.subr.mxu0 0.0
    %1054 = vmatpush1.msra.mxu0 %v1048
    %1055 = vmatprep.subr.mxu0 0.0
    %1056 = vmatpush1.msra.mxu0 0.0
    %1057 = vmatprep.subr.mxu0 0.0
    %1058 = vmatpush1.msra.mxu0 0.0
    %1059 = vmatprep.subr.mxu0 0.0
    %1060 = vmatpush1.msra.mxu0 0.0
    %1061 = vmatprep.subr.mxu0 0.0
    %1062 = vmatpush1.msra.mxu0 0.0
    %1063 = vmatprep.subr.mxu0 0.0
    %1064 = vmatpush1.msra.mxu0 0.0
    %1065 = vmatprep.subr.mxu0 0.0
    %1066 = vmatpush1.msra.mxu0 0.0
    %1067 = vmatprep.subr.mxu0 0.0
    %1068 = vmatpush1.msra.mxu0 0.0
    %1069 = vmatprep.subr.mxu0 0.0
    %1070 = vmatpush1.msra.mxu0 0.0
    %1071 = vmatprep.subr.mxu0 0.0
    %1072 = vmatpush1.msra.mxu0 0.0
    %1073 = vmatprep.subr.mxu0 0.0
    %1074 = vmatpush1.msra.mxu0 0.0
    %1075 = vmatprep.subr.mxu0 0.0
    %1076 = vmatpush1.msra.mxu0 0.0
    %1077 = vmatprep.subr.mxu0 0.0
    %1078 = vmatpush1.msra.mxu0 0.0
    %1079 = vmatprep.subr.mxu0 0.0
    %1080 = vmatpush1.msra.mxu0 0.0
    %1081 = vmatprep.subr.mxu0 0.0
    %1082 = vmatpush1.msra.mxu0 0.0
    %1083 = vmatprep.subr.mxu0 0.0
    %1084 = vmatpush1.msra.mxu0 0.0
    %1085 = vmatprep.subr.mxu0 0.0
    %1086 = vmatpush1.msra.mxu0 0.0
    %1087 = vmatprep.subr.mxu0 0.0
    %1088 = vmatpush1.msra.mxu0 0.0
    %1089 = vmatprep.subr.mxu0 0.0
    %1090 = vmatpush1.msra.mxu0 0.0
    %1091 = vmatprep.subr.mxu0 0.0
    %1092 = vmatpush1.msra.mxu0 0.0
    %1093 = vmatprep.subr.mxu0 0.0
    %1094 = vmatpush1.msra.mxu0 0.0
    %1095 = vmatprep.subr.mxu0 0.0
    %1096 = vmatpush1.msra.mxu0 0.0
    %1097 = vmatprep.subr.mxu0 0.0
    %1098 = vmatpush1.msra.mxu0 0.0
    %1099 = vmatprep.subr.mxu0 0.0
    %1100 = vmatpush1.msra.mxu0 0.0
    %1101 = vmatprep.subr.mxu0 0.0
    %1102 = vmatpush1.msra.mxu0 0.0
    %1103 = vmatprep.subr.mxu0 0.0
    %1104 = vmatpush1.msra.mxu0 0.0
    %1105 = vmatprep.subr.mxu0 0.0
    %1106 = vmatpush1.msra.mxu0 0.0
    %1107 = vmatprep.subr.mxu0 0.0
    %1108 = vmatpush1.msra.mxu0 0.0
    %1109 = vmatprep.subr.mxu0 0.0
    %1110 = vmatpush1.msra.mxu0 0.0
    %1111 = vmatprep.subr.mxu0 0.0
    %1112 = vmatpush1.msra.mxu0 0.0
    %1113 = vmatprep.subr.mxu0 0.0
    %1114 = vmatpush1.msra.mxu0 0.0
    %1115 = vmatprep.subr.mxu0 0.0
    %1116 = vmatpush1.msra.mxu0 0.0
    %1117 = vmatprep.mubr.f32.mxu0 0.0
    %1118 = vmatmul.mubr.f32.gmra.mrb[0].mxu0 %v1051
    %v1119 = vpop.f32.mrb[0].mxu0
    %v1120 = vadd.f32 0.0, %v1119
    %v1121 = vpop.f32.mrb[0].mxu0
    %1122 = vdwg.mxu0
    %1124 = vrot.lane.b32.xlu0 %v539, 96
    %v1125 = vpop.permute.xlu0 %1124
    %v1128 = vsel %vm697, %v1045, 0
    %1130 = vmatprep.subr.mxu0 0.0
    %1131 = vmatpush1.msra.mxu0 %v1125
    %1132 = vmatprep.subr.mxu0 0.0
    %1133 = vmatpush1.msra.mxu0 0.0
    %1134 = vmatprep.subr.mxu0 0.0
    %1135 = vmatpush1.msra.mxu0 0.0
    %1136 = vmatprep.subr.mxu0 0.0
    %1137 = vmatpush1.msra.mxu0 0.0
    %1138 = vmatprep.subr.mxu0 0.0
    %1139 = vmatpush1.msra.mxu0 0.0
    %1140 = vmatprep.subr.mxu0 0.0
    %1141 = vmatpush1.msra.mxu0 0.0
    %1142 = vmatprep.subr.mxu0 0.0
    %1143 = vmatpush1.msra.mxu0 0.0
    %1144 = vmatprep.subr.mxu0 0.0
    %1145 = vmatpush1.msra.mxu0 0.0
    %1146 = vmatprep.subr.mxu0 0.0
    %1147 = vmatpush1.msra.mxu0 0.0
    %1148 = vmatprep.subr.mxu0 0.0
    %1149 = vmatpush1.msra.mxu0 0.0
    %1150 = vmatprep.subr.mxu0 0.0
    %1151 = vmatpush1.msra.mxu0 0.0
    %1152 = vmatprep.subr.mxu0 0.0
    %1153 = vmatpush1.msra.mxu0 0.0
    %1154 = vmatprep.subr.mxu0 0.0
    %1155 = vmatpush1.msra.mxu0 0.0
    %1156 = vmatprep.subr.mxu0 0.0
    %1157 = vmatpush1.msra.mxu0 0.0
    %1158 = vmatprep.subr.mxu0 0.0
    %1159 = vmatpush1.msra.mxu0 0.0
    %1160 = vmatprep.subr.mxu0 0.0
    %1161 = vmatpush1.msra.mxu0 0.0
    %1162 = vmatprep.subr.mxu0 0.0
    %1163 = vmatpush1.msra.mxu0 0.0
    %1164 = vmatprep.subr.mxu0 0.0
    %1165 = vmatpush1.msra.mxu0 0.0
    %1166 = vmatprep.subr.mxu0 0.0
    %1167 = vmatpush1.msra.mxu0 0.0
    %1168 = vmatprep.subr.mxu0 0.0
    %1169 = vmatpush1.msra.mxu0 0.0
    %1170 = vmatprep.subr.mxu0 0.0
    %1171 = vmatpush1.msra.mxu0 0.0
    %1172 = vmatprep.subr.mxu0 0.0
    %1173 = vmatpush1.msra.mxu0 0.0
    %1174 = vmatprep.subr.mxu0 0.0
    %1175 = vmatpush1.msra.mxu0 0.0
    %1176 = vmatprep.subr.mxu0 0.0
    %1177 = vmatpush1.msra.mxu0 0.0
    %1178 = vmatprep.subr.mxu0 0.0
    %1179 = vmatpush1.msra.mxu0 0.0
    %1180 = vmatprep.subr.mxu0 0.0
    %1181 = vmatpush1.msra.mxu0 0.0
    %1182 = vmatprep.subr.mxu0 0.0
    %1183 = vmatpush1.msra.mxu0 0.0
    %1184 = vmatprep.subr.mxu0 0.0
    %1185 = vmatpush1.msra.mxu0 0.0
    %1186 = vmatprep.subr.mxu0 0.0
    %1187 = vmatpush1.msra.mxu0 0.0
    %1188 = vmatprep.subr.mxu0 0.0
    %1189 = vmatpush1.msra.mxu0 0.0
    %1190 = vmatprep.subr.mxu0 0.0
    %1191 = vmatpush1.msra.mxu0 0.0
    %1192 = vmatprep.subr.mxu0 0.0
    %1193 = vmatpush1.msra.mxu0 0.0
    %1194 = vmatprep.mubr.f32.mxu0 0.0
    %1195 = vmatmul.mubr.f32.gmra.mrb[0].mxu0 %v1128
    %v1196 = vpop.f32.mrb[0].mxu0
    %v1197 = vadd.f32 0.0, %v1196
    %v1198 = vpop.f32.mrb[0].mxu0
    %1199 = vdwg.mxu0
    %1200 = vrot.lane.b32.xlu0 %v457, 64
    %v1201 = vpop.permute.xlu0 %1200
    %1202 = vrot.lane.b32.xlu0 %v459, 64
    %v1203 = vpop.permute.xlu0 %1202
    %v1204 = vsel %vm542, %v1201, 0
    %v1206 = vsel %vm542, %v1203, 0
    %1208 = vmatprep.subr.mxu0 0.0
    %1209 = vmatpush1.xpose.msra.mxu0 %v1206
    %1210 = vmatprep.subr.mxu0 0.0
    %1211 = vmatpush1.xpose.msra.mxu0 0.0
    %1212 = vmatprep.subr.mxu0 0.0
    %1213 = vmatpush1.xpose.msra.mxu0 0.0
    %1214 = vmatprep.subr.mxu0 0.0
    %1215 = vmatpush1.xpose.msra.mxu0 0.0
    %1216 = vmatprep.subr.mxu0 0.0
    %1217 = vmatpush1.xpose.msra.mxu0 0.0
    %1218 = vmatprep.subr.mxu0 0.0
    %1219 = vmatpush1.xpose.msra.mxu0 0.0
    %1220 = vmatprep.subr.mxu0 0.0
    %1221 = vmatpush1.xpose.msra.mxu0 0.0
    %1222 = vmatprep.subr.mxu0 0.0
    %1223 = vmatpush1.xpose.msra.mxu0 0.0
    %1224 = vmatprep.subr.mxu0 0.0
    %1225 = vmatpush1.xpose.msra.mxu0 0.0
    %1226 = vmatprep.subr.mxu0 0.0
    %1227 = vmatpush1.xpose.msra.mxu0 0.0
    %1228 = vmatprep.subr.mxu0 0.0
    %1229 = vmatpush1.xpose.msra.mxu0 0.0
    %1230 = vmatprep.subr.mxu0 0.0
    %1231 = vmatpush1.xpose.msra.mxu0 0.0
    %1232 = vmatprep.subr.mxu0 0.0
    %1233 = vmatpush1.xpose.msra.mxu0 0.0
    %1234 = vmatprep.subr.mxu0 0.0
    %1235 = vmatpush1.xpose.msra.mxu0 0.0
    %1236 = vmatprep.subr.mxu0 0.0
    %1237 = vmatpush1.xpose.msra.mxu0 0.0
    %1238 = vmatprep.subr.mxu0 0.0
    %1239 = vmatpush1.xpose.msra.mxu0 0.0
    %1240 = vmatprep.subr.mxu0 0.0
    %1241 = vmatpush1.xpose.msra.mxu0 0.0
    %1242 = vmatprep.subr.mxu0 0.0
    %1243 = vmatpush1.xpose.msra.mxu0 0.0
    %1244 = vmatprep.subr.mxu0 0.0
    %1245 = vmatpush1.xpose.msra.mxu0 0.0
    %1246 = vmatprep.subr.mxu0 0.0
    %1247 = vmatpush1.xpose.msra.mxu0 0.0
    %1248 = vmatprep.subr.mxu0 0.0
    %1249 = vmatpush1.xpose.msra.mxu0 0.0
    %1250 = vmatprep.subr.mxu0 0.0
    %1251 = vmatpush1.xpose.msra.mxu0 0.0
    %1252 = vmatprep.subr.mxu0 0.0
    %1253 = vmatpush1.xpose.msra.mxu0 0.0
    %1254 = vmatprep.subr.mxu0 0.0
    %1255 = vmatpush1.xpose.msra.mxu0 0.0
    %1256 = vmatprep.subr.mxu0 0.0
    %1257 = vmatpush1.xpose.msra.mxu0 0.0
    %1258 = vmatprep.subr.mxu0 0.0
    %1259 = vmatpush1.xpose.msra.mxu0 0.0
    %1260 = vmatprep.subr.mxu0 0.0
    %1261 = vmatpush1.xpose.msra.mxu0 0.0
    %1262 = vmatprep.subr.mxu0 0.0
    %1263 = vmatpush1.xpose.msra.mxu0 0.0
    %1264 = vmatprep.subr.mxu0 0.0
    %1265 = vmatpush1.xpose.msra.mxu0 0.0
    %1266 = vmatprep.subr.mxu0 0.0
    %1267 = vmatpush1.xpose.msra.mxu0 0.0
    %1268 = vmatprep.subr.mxu0 0.0
    %1269 = vmatpush1.xpose.msra.mxu0 0.0
    %1270 = vmatprep.subr.mxu0 0.0
    %1271 = vmatpush1.xpose.msra.mxu0 0.0
    %1272 = vmatprep.mubr.f32.mxu0 0.0
    %1273 = vmatmul.mubr.f32.gmra.mrb[0].mxu0 %v1204
    %v1274 = vpop.f32.mrb[0].mxu0
    %v1275 = vadd.f32 0.0, %v1274
    %v1276 = vpop.f32.mrb[0].mxu0
    %1277 = vdwg.mxu0
    %1278 = vrot.lane.b32.xlu0 %v463, 64
    %v1279 = vpop.permute.xlu0 %1278
    %1280 = vrot.lane.b32.xlu0 %v465, 64
    %v1281 = vpop.permute.xlu0 %1280
    %v1282 = vsel %vm542, %v1279, 0
    %v1284 = vsel %vm542, %v1281, 0
    %1286 = vmatprep.subr.mxu0 0.0
    %1287 = vmatpush1.xpose.msra.mxu0 %v1284
    %1288 = vmatprep.subr.mxu0 0.0
    %1289 = vmatpush1.xpose.msra.mxu0 0.0
    %1290 = vmatprep.subr.mxu0 0.0
    %1291 = vmatpush1.xpose.msra.mxu0 0.0
    %1292 = vmatprep.subr.mxu0 0.0
    %1293 = vmatpush1.xpose.msra.mxu0 0.0
    %1294 = vmatprep.subr.mxu0 0.0
    %1295 = vmatpush1.xpose.msra.mxu0 0.0
    %1296 = vmatprep.subr.mxu0 0.0
    %1297 = vmatpush1.xpose.msra.mxu0 0.0
    %1298 = vmatprep.subr.mxu0 0.0
    %1299 = vmatpush1.xpose.msra.mxu0 0.0
    %1300 = vmatprep.subr.mxu0 0.0
    %1301 = vmatpush1.xpose.msra.mxu0 0.0
    %1302 = vmatprep.subr.mxu0 0.0
    %1303 = vmatpush1.xpose.msra.mxu0 0.0
    %1304 = vmatprep.subr.mxu0 0.0
    %1305 = vmatpush1.xpose.msra.mxu0 0.0
    %1306 = vmatprep.subr.mxu0 0.0
    %1307 = vmatpush1.xpose.msra.mxu0 0.0
    %1308 = vmatprep.subr.mxu0 0.0
    %1309 = vmatpush1.xpose.msra.mxu0 0.0
    %1310 = vmatprep.subr.mxu0 0.0
    %1311 = vmatpush1.xpose.msra.mxu0 0.0
    %1312 = vmatprep.subr.mxu0 0.0
    %1313 = vmatpush1.xpose.msra.mxu0 0.0
    %1314 = vmatprep.subr.mxu0 0.0
    %1315 = vmatpush1.xpose.msra.mxu0 0.0
    %1316 = vmatprep.subr.mxu0 0.0
    %1317 = vmatpush1.xpose.msra.mxu0 0.0
    %1318 = vmatprep.subr.mxu0 0.0
    %1319 = vmatpush1.xpose.msra.mxu0 0.0
    %1320 = vmatprep.subr.mxu0 0.0
    %1321 = vmatpush1.xpose.msra.mxu0 0.0
    %1322 = vmatprep.subr.mxu0 0.0
    %1323 = vmatpush1.xpose.msra.mxu0 0.0
    %1324 = vmatprep.subr.mxu0 0.0
    %1325 = vmatpush1.xpose.msra.mxu0 0.0
    %1326 = vmatprep.subr.mxu0 0.0
    %1327 = vmatpush1.xpose.msra.mxu0 0.0
    %1328 = vmatprep.subr.mxu0 0.0
    %1329 = vmatpush1.xpose.msra.mxu0 0.0
    %1330 = vmatprep.subr.mxu0 0.0
    %1331 = vmatpush1.xpose.msra.mxu0 0.0
    %1332 = vmatprep.subr.mxu0 0.0
    %1333 = vmatpush1.xpose.msra.mxu0 0.0
    %1334 = vmatprep.subr.mxu0 0.0
    %1335 = vmatpush1.xpose.msra.mxu0 0.0
    %1336 = vmatprep.subr.mxu0 0.0
    %1337 = vmatpush1.xpose.msra.mxu0 0.0
    %1338 = vmatprep.subr.mxu0 0.0
    %1339 = vmatpush1.xpose.msra.mxu0 0.0
    %1340 = vmatprep.subr.mxu0 0.0
    %1341 = vmatpush1.xpose.msra.mxu0 0.0
    %1342 = vmatprep.subr.mxu0 0.0
    %1343 = vmatpush1.xpose.msra.mxu0 0.0
    %1344 = vmatprep.subr.mxu0 0.0
    %1345 = vmatpush1.xpose.msra.mxu0 0.0
    %1346 = vmatprep.subr.mxu0 0.0
    %1347 = vmatpush1.xpose.msra.mxu0 0.0
    %1348 = vmatprep.subr.mxu0 0.0
    %1349 = vmatpush1.xpose.msra.mxu0 0.0
    %1350 = vmatprep.mubr.f32.mxu0 0.0
    %1351 = vmatmul.mubr.f32.gmra.mrb[0].mxu0 %v1282
    %v1352 = vpop.f32.mrb[0].mxu0
    %v1353 = vadd.f32 0.0, %v1352
    %v1354 = vpop.f32.mrb[0].mxu0
    %1355 = vdwg.mxu0
    %v1356 = vmul.f32 %v1275, 0.17677669
    %v1357 = vmul.f32 %v1353, 0.17677669
    %v1358 = vsel %vm697, %v1356, -inf
    %1359 = vmax.xlane.f32.xlu0 %v1358
    %v1360 = vpop.xlane.xlu0 %1359
    %v1361 = vsel %vm697, %v1357, -inf
    %1362 = vmax.xlane.f32.xlu0 %v1361
    %v1363 = vpop.xlane.xlu0 %1362
    %v1364 = vsub.f32 %v1356, %v1360
    %v1365 = vsub.f32 %v1357, %v1363
    %v1366 = vmul.f32 %v1364, 1.442695
    %v1367 = vpow.pop %v1366
    %v1368 = vmul.f32 %v1365, 1.442695
    %v1369 = vpow.pop %v1368
    %v1370 = vsel %vm697, %v1367, 0.0
    %1371 = vadd.xlane.f32.xlu0 %v1370
    %v1372 = vpop.xlane.xlu0 %1371
    %v1373 = vsel %vm697, %v1369, 0.0
    %1374 = vadd.xlane.f32.xlu0 %v1373
    %v1375 = vpop.xlane.xlu0 %1374
    %v1376 = vrcp.pop %v1372
    %v1377 = vrcp.pop %v1375
    %v1378 = vmul.f32 %v1367, %v1376
    %v1379 = vmul.f32 %v1369, %v1377
    %1380 = vrot.lane.b32.xlu0 %v534, 64
    %v1381 = vpop.permute.xlu0 %1380
    %v1384 = vsel %vm697, %v1378, 0
    %1386 = vmatprep.subr.mxu0 0.0
    %1387 = vmatpush1.msra.mxu0 %v1381
    %1388 = vmatprep.subr.mxu0 0.0
    %1389 = vmatpush1.msra.mxu0 0.0
    %1390 = vmatprep.subr.mxu0 0.0
    %1391 = vmatpush1.msra.mxu0 0.0
    %1392 = vmatprep.subr.mxu0 0.0
    %1393 = vmatpush1.msra.mxu0 0.0
    %1394 = vmatprep.subr.mxu0 0.0
    %1395 = vmatpush1.msra.mxu0 0.0
    %1396 = vmatprep.subr.mxu0 0.0
    %1397 = vmatpush1.msra.mxu0 0.0
    %1398 = vmatprep.subr.mxu0 0.0
    %1399 = vmatpush1.msra.mxu0 0.0
    %1400 = vmatprep.subr.mxu0 0.0
    %1401 = vmatpush1.msra.mxu0 0.0
    %1402 = vmatprep.subr.mxu0 0.0
    %1403 = vmatpush1.msra.mxu0 0.0
    %1404 = vmatprep.subr.mxu0 0.0
    %1405 = vmatpush1.msra.mxu0 0.0
    %1406 = vmatprep.subr.mxu0 0.0
    %1407 = vmatpush1.msra.mxu0 0.0
    %1408 = vmatprep.subr.mxu0 0.0
    %1409 = vmatpush1.msra.mxu0 0.0
    %1410 = vmatprep.subr.mxu0 0.0
    %1411 = vmatpush1.msra.mxu0 0.0
    %1412 = vmatprep.subr.mxu0 0.0
    %1413 = vmatpush1.msra.mxu0 0.0
    %1414 = vmatprep.subr.mxu0 0.0
    %1415 = vmatpush1.msra.mxu0 0.0
    %1416 = vmatprep.subr.mxu0 0.0
    %1417 = vmatpush1.msra.mxu0 0.0
    %1418 = vmatprep.subr.mxu0 0.0
    %1419 = vmatpush1.msra.mxu0 0.0
    %1420 = vmatprep.subr.mxu0 0.0
    %1421 = vmatpush1.msra.mxu0 0.0
    %1422 = vmatprep.subr.mxu0 0.0
    %1423 = vmatpush1.msra.mxu0 0.0
    %1424 = vmatprep.subr.mxu0 0.0
    %1425 = vmatpush1.msra.mxu0 0.0
    %1426 = vmatprep.subr.mxu0 0.0
    %1427 = vmatpush1.msra.mxu0 0.0
    %1428 = vmatprep.subr.mxu0 0.0
    %1429 = vmatpush1.msra.mxu0 0.0
    %1430 = vmatprep.subr.mxu0 0.0
    %1431 = vmatpush1.msra.mxu0 0.0
    %1432 = vmatprep.subr.mxu0 0.0
    %1433 = vmatpush1.msra.mxu0 0.0
    %1434 = vmatprep.subr.mxu0 0.0
    %1435 = vmatpush1.msra.mxu0 0.0
    %1436 = vmatprep.subr.mxu0 0.0
    %1437 = vmatpush1.msra.mxu0 0.0
    %1438 = vmatprep.subr.mxu0 0.0
    %1439 = vmatpush1.msra.mxu0 0.0
    %1440 = vmatprep.subr.mxu0 0.0
    %1441 = vmatpush1.msra.mxu0 0.0
    %1442 = vmatprep.subr.mxu0 0.0
    %1443 = vmatpush1.msra.mxu0 0.0
    %1444 = vmatprep.subr.mxu0 0.0
    %1445 = vmatpush1.msra.mxu0 0.0
    %1446 = vmatprep.subr.mxu0 0.0
    %1447 = vmatpush1.msra.mxu0 0.0
    %1448 = vmatprep.subr.mxu0 0.0
    %1449 = vmatpush1.msra.mxu0 0.0
    %1450 = vmatprep.mubr.f32.mxu0 0.0
    %1451 = vmatmul.mubr.f32.gmra.mrb[0].mxu0 %v1384
    %v1452 = vpop.f32.mrb[0].mxu0
    %v1453 = vadd.f32 0.0, %v1452
    %v1454 = vpop.f32.mrb[0].mxu0
    %1455 = vdwg.mxu0
    %1456 = vrot.lane.b32.xlu0 %v539, 64
    %v1457 = vpop.permute.xlu0 %1456
    %v1460 = vsel %vm697, %v1379, 0
    %1462 = vmatprep.subr.mxu0 0.0
    %1463 = vmatpush1.msra.mxu0 %v1457
    %1464 = vmatprep.subr.mxu0 0.0
    %1465 = vmatpush1.msra.mxu0 0.0
    %1466 = vmatprep.subr.mxu0 0.0
    %1467 = vmatpush1.msra.mxu0 0.0
    %1468 = vmatprep.subr.mxu0 0.0
    %1469 = vmatpush1.msra.mxu0 0.0
    %1470 = vmatprep.subr.mxu0 0.0
    %1471 = vmatpush1.msra.mxu0 0.0
    %1472 = vmatprep.subr.mxu0 0.0
    %1473 = vmatpush1.msra.mxu0 0.0
    %1474 = vmatprep.subr.mxu0 0.0
    %1475 = vmatpush1.msra.mxu0 0.0
    %1476 = vmatprep.subr.mxu0 0.0
    %1477 = vmatpush1.msra.mxu0 0.0
    %1478 = vmatprep.subr.mxu0 0.0
    %1479 = vmatpush1.msra.mxu0 0.0
    %1480 = vmatprep.subr.mxu0 0.0
    %1481 = vmatpush1.msra.mxu0 0.0
    %1482 = vmatprep.subr.mxu0 0.0
    %1483 = vmatpush1.msra.mxu0 0.0
    %1484 = vmatprep.subr.mxu0 0.0
    %1485 = vmatpush1.msra.mxu0 0.0
    %1486 = vmatprep.subr.mxu0 0.0
    %1487 = vmatpush1.msra.mxu0 0.0
    %1488 = vmatprep.subr.mxu0 0.0
    %1489 = vmatpush1.msra.mxu0 0.0
    %1490 = vmatprep.subr.mxu0 0.0
    %1491 = vmatpush1.msra.mxu0 0.0
    %1492 = vmatprep.subr.mxu0 0.0
    %1493 = vmatpush1.msra.mxu0 0.0
    %1494 = vmatprep.subr.mxu0 0.0
    %1495 = vmatpush1.msra.mxu0 0.0
    %1496 = vmatprep.subr.mxu0 0.0
    %1497 = vmatpush1.msra.mxu0 0.0
    %1498 = vmatprep.subr.mxu0 0.0
    %1499 = vmatpush1.msra.mxu0 0.0
    %1500 = vmatprep.subr.mxu0 0.0
    %1501 = vmatpush1.msra.mxu0 0.0
    %1502 = vmatprep.subr.mxu0 0.0
    %1503 = vmatpush1.msra.mxu0 0.0
    %1504 = vmatprep.subr.mxu0 0.0
    %1505 = vmatpush1.msra.mxu0 0.0
    %1506 = vmatprep.subr.mxu0 0.0
    %1507 = vmatpush1.msra.mxu0 0.0
    %1508 = vmatprep.subr.mxu0 0.0
    %1509 = vmatpush1.msra.mxu0 0.0
    %1510 = vmatprep.subr.mxu0 0.0
    %1511 = vmatpush1.msra.mxu0 0.0
    %1512 = vmatprep.subr.mxu0 0.0
    %1513 = vmatpush1.msra.mxu0 0.0
    %1514 = vmatprep.subr.mxu0 0.0
    %1515 = vmatpush1.msra.mxu0 0.0
    %1516 = vmatprep.subr.mxu0 0.0
    %1517 = vmatpush1.msra.mxu0 0.0
    %1518 = vmatprep.subr.mxu0 0.0
    %1519 = vmatpush1.msra.mxu0 0.0
    %1520 = vmatprep.subr.mxu0 0.0
    %1521 = vmatpush1.msra.mxu0 0.0
    %1522 = vmatprep.subr.mxu0 0.0
    %1523 = vmatpush1.msra.mxu0 0.0
    %1524 = vmatprep.subr.mxu0 0.0
    %1525 = vmatpush1.msra.mxu0 0.0
    %1526 = vmatprep.mubr.f32.mxu0 0.0
    %1527 = vmatmul.mubr.f32.gmra.mrb[0].mxu0 %v1460
    %v1528 = vpop.f32.mrb[0].mxu0
    %v1529 = vadd.f32 0.0, %v1528
    %v1530 = vpop.f32.mrb[0].mxu0
    %1531 = vdwg.mxu0
    %1532 = vrot.lane.b32.xlu0 %v457, 32
    %v1533 = vpop.permute.xlu0 %1532
    %1534 = vrot.lane.b32.xlu0 %v459, 32
    %v1535 = vpop.permute.xlu0 %1534
    %v1536 = vsel %vm542, %v1533, 0
    %v1538 = vsel %vm542, %v1535, 0
    %1540 = vmatprep.subr.mxu0 0.0
    %1541 = vmatpush1.xpose.msra.mxu0 %v1538
    %1542 = vmatprep.subr.mxu0 0.0
    %1543 = vmatpush1.xpose.msra.mxu0 0.0
    %1544 = vmatprep.subr.mxu0 0.0
    %1545 = vmatpush1.xpose.msra.mxu0 0.0
    %1546 = vmatprep.subr.mxu0 0.0
    %1547 = vmatpush1.xpose.msra.mxu0 0.0
    %1548 = vmatprep.subr.mxu0 0.0
    %1549 = vmatpush1.xpose.msra.mxu0 0.0
    %1550 = vmatprep.subr.mxu0 0.0
    %1551 = vmatpush1.xpose.msra.mxu0 0.0
    %1552 = vmatprep.subr.mxu0 0.0
    %1553 = vmatpush1.xpose.msra.mxu0 0.0
    %1554 = vmatprep.subr.mxu0 0.0
    %1555 = vmatpush1.xpose.msra.mxu0 0.0
    %1556 = vmatprep.subr.mxu0 0.0
    %1557 = vmatpush1.xpose.msra.mxu0 0.0
    %1558 = vmatprep.subr.mxu0 0.0
    %1559 = vmatpush1.xpose.msra.mxu0 0.0
    %1560 = vmatprep.subr.mxu0 0.0
    %1561 = vmatpush1.xpose.msra.mxu0 0.0
    %1562 = vmatprep.subr.mxu0 0.0
    %1563 = vmatpush1.xpose.msra.mxu0 0.0
    %1564 = vmatprep.subr.mxu0 0.0
    %1565 = vmatpush1.xpose.msra.mxu0 0.0
    %1566 = vmatprep.subr.mxu0 0.0
    %1567 = vmatpush1.xpose.msra.mxu0 0.0
    %1568 = vmatprep.subr.mxu0 0.0
    %1569 = vmatpush1.xpose.msra.mxu0 0.0
    %1570 = vmatprep.subr.mxu0 0.0
    %1571 = vmatpush1.xpose.msra.mxu0 0.0
    %1572 = vmatprep.subr.mxu0 0.0
    %1573 = vmatpush1.xpose.msra.mxu0 0.0
    %1574 = vmatprep.subr.mxu0 0.0
    %1575 = vmatpush1.xpose.msra.mxu0 0.0
    %1576 = vmatprep.subr.mxu0 0.0
    %1577 = vmatpush1.xpose.msra.mxu0 0.0
    %1578 = vmatprep.subr.mxu0 0.0
    %1579 = vmatpush1.xpose.msra.mxu0 0.0
    %1580 = vmatprep.subr.mxu0 0.0
    %1581 = vmatpush1.xpose.msra.mxu0 0.0
    %1582 = vmatprep.subr.mxu0 0.0
    %1583 = vmatpush1.xpose.msra.mxu0 0.0
    %1584 = vmatprep.subr.mxu0 0.0
    %1585 = vmatpush1.xpose.msra.mxu0 0.0
    %1586 = vmatprep.subr.mxu0 0.0
    %1587 = vmatpush1.xpose.msra.mxu0 0.0
    %1588 = vmatprep.subr.mxu0 0.0
    %1589 = vmatpush1.xpose.msra.mxu0 0.0
    %1590 = vmatprep.subr.mxu0 0.0
    %1591 = vmatpush1.xpose.msra.mxu0 0.0
    %1592 = vmatprep.subr.mxu0 0.0
    %1593 = vmatpush1.xpose.msra.mxu0 0.0
    %1594 = vmatprep.subr.mxu0 0.0
    %1595 = vmatpush1.xpose.msra.mxu0 0.0
    %1596 = vmatprep.subr.mxu0 0.0
    %1597 = vmatpush1.xpose.msra.mxu0 0.0
    %1598 = vmatprep.subr.mxu0 0.0
    %1599 = vmatpush1.xpose.msra.mxu0 0.0
    %1600 = vmatprep.subr.mxu0 0.0
    %1601 = vmatpush1.xpose.msra.mxu0 0.0
    %1602 = vmatprep.subr.mxu0 0.0
    %1603 = vmatpush1.xpose.msra.mxu0 0.0
    %1604 = vmatprep.mubr.f32.mxu0 0.0
    %1605 = vmatmul.mubr.f32.gmra.mrb[0].mxu0 %v1536
    %v1606 = vpop.f32.mrb[0].mxu0
    %v1607 = vadd.f32 0.0, %v1606
    %v1608 = vpop.f32.mrb[0].mxu0
    %1609 = vdwg.mxu0
    %1610 = vrot.lane.b32.xlu0 %v463, 32
    %v1611 = vpop.permute.xlu0 %1610
    %1612 = vrot.lane.b32.xlu0 %v465, 32
    %v1613 = vpop.permute.xlu0 %1612
    %v1614 = vsel %vm542, %v1611, 0
    %v1616 = vsel %vm542, %v1613, 0
    %1618 = vmatprep.subr.mxu0 0.0
    %1619 = vmatpush1.xpose.msra.mxu0 %v1616
    %1620 = vmatprep.subr.mxu0 0.0
    %1621 = vmatpush1.xpose.msra.mxu0 0.0
    %1622 = vmatprep.subr.mxu0 0.0
    %1623 = vmatpush1.xpose.msra.mxu0 0.0
    %1624 = vmatprep.subr.mxu0 0.0
    %1625 = vmatpush1.xpose.msra.mxu0 0.0
    %1626 = vmatprep.subr.mxu0 0.0
    %1627 = vmatpush1.xpose.msra.mxu0 0.0
    %1628 = vmatprep.subr.mxu0 0.0
    %1629 = vmatpush1.xpose.msra.mxu0 0.0
    %1630 = vmatprep.subr.mxu0 0.0
    %1631 = vmatpush1.xpose.msra.mxu0 0.0
    %1632 = vmatprep.subr.mxu0 0.0
    %1633 = vmatpush1.xpose.msra.mxu0 0.0
    %1634 = vmatprep.subr.mxu0 0.0
    %1635 = vmatpush1.xpose.msra.mxu0 0.0
    %1636 = vmatprep.subr.mxu0 0.0
    %1637 = vmatpush1.xpose.msra.mxu0 0.0
    %1638 = vmatprep.subr.mxu0 0.0
    %1639 = vmatpush1.xpose.msra.mxu0 0.0
    %1640 = vmatprep.subr.mxu0 0.0
    %1641 = vmatpush1.xpose.msra.mxu0 0.0
    %1642 = vmatprep.subr.mxu0 0.0
    %1643 = vmatpush1.xpose.msra.mxu0 0.0
    %1644 = vmatprep.subr.mxu0 0.0
    %1645 = vmatpush1.xpose.msra.mxu0 0.0
    %1646 = vmatprep.subr.mxu0 0.0
    %1647 = vmatpush1.xpose.msra.mxu0 0.0
    %1648 = vmatprep.subr.mxu0 0.0
    %1649 = vmatpush1.xpose.msra.mxu0 0.0
    %1650 = vmatprep.subr.mxu0 0.0
    %1651 = vmatpush1.xpose.msra.mxu0 0.0
    %1652 = vmatprep.subr.mxu0 0.0
    %1653 = vmatpush1.xpose.msra.mxu0 0.0
    %1654 = vmatprep.subr.mxu0 0.0
    %1655 = vmatpush1.xpose.msra.mxu0 0.0
    %1656 = vmatprep.subr.mxu0 0.0
    %1657 = vmatpush1.xpose.msra.mxu0 0.0
    %1658 = vmatprep.subr.mxu0 0.0
    %1659 = vmatpush1.xpose.msra.mxu0 0.0
    %1660 = vmatprep.subr.mxu0 0.0
    %1661 = vmatpush1.xpose.msra.mxu0 0.0
    %1662 = vmatprep.subr.mxu0 0.0
    %1663 = vmatpush1.xpose.msra.mxu0 0.0
    %1664 = vmatprep.subr.mxu0 0.0
    %1665 = vmatpush1.xpose.msra.mxu0 0.0
    %1666 = vmatprep.subr.mxu0 0.0
    %1667 = vmatpush1.xpose.msra.mxu0 0.0
    %1668 = vmatprep.subr.mxu0 0.0
    %1669 = vmatpush1.xpose.msra.mxu0 0.0
    %1670 = vmatprep.subr.mxu0 0.0
    %1671 = vmatpush1.xpose.msra.mxu0 0.0
    %1672 = vmatprep.subr.mxu0 0.0
    %1673 = vmatpush1.xpose.msra.mxu0 0.0
    %1674 = vmatprep.subr.mxu0 0.0
    %1675 = vmatpush1.xpose.msra.mxu0 0.0
    %1676 = vmatprep.subr.mxu0 0.0
    %1677 = vmatpush1.xpose.msra.mxu0 0.0
    %1678 = vmatprep.subr.mxu0 0.0
    %1679 = vmatpush1.xpose.msra.mxu0 0.0
    %1680 = vmatprep.subr.mxu0 0.0
    %1681 = vmatpush1.xpose.msra.mxu0 0.0
    %1682 = vmatprep.mubr.f32.mxu0 0.0
    %1683 = vmatmul.mubr.f32.gmra.mrb[0].mxu0 %v1614
    %v1684 = vpop.f32.mrb[0].mxu0
    %v1685 = vadd.f32 0.0, %v1684
    %v1686 = vpop.f32.mrb[0].mxu0
    %1687 = vdwg.mxu0
    %v1688 = vmul.f32 %v1607, 0.17677669
    %v1689 = vmul.f32 %v1685, 0.17677669
    %v1690 = vsel %vm697, %v1688, -inf
    %1691 = vmax.xlane.f32.xlu0 %v1690
    %v1692 = vpop.xlane.xlu0 %1691
    %v1693 = vsel %vm697, %v1689, -inf
    %1694 = vmax.xlane.f32.xlu0 %v1693
    %v1695 = vpop.xlane.xlu0 %1694
    %v1696 = vsub.f32 %v1688, %v1692
    %v1697 = vsub.f32 %v1689, %v1695
    %v1698 = vmul.f32 %v1696, 1.442695
    %v1699 = vpow.pop %v1698
    %v1700 = vmul.f32 %v1697, 1.442695
    %v1701 = vpow.pop %v1700
    %v1702 = vsel %vm697, %v1699, 0.0
    %1703 = vadd.xlane.f32.xlu0 %v1702
    %v1704 = vpop.xlane.xlu0 %1703
    %v1705 = vsel %vm697, %v1701, 0.0
    %1706 = vadd.xlane.f32.xlu0 %v1705
    %v1707 = vpop.xlane.xlu0 %1706
    %v1708 = vrcp.pop %v1704
    %v1709 = vrcp.pop %v1707
    %v1710 = vmul.f32 %v1699, %v1708
    %v1711 = vmul.f32 %v1701, %v1709
    %1712 = vrot.lane.b32.xlu0 %v534, 32
    %v1713 = vpop.permute.xlu0 %1712
    %v1716 = vsel %vm697, %v1710, 0
    %1718 = vmatprep.subr.mxu0 0.0
    %1719 = vmatpush1.msra.mxu0 %v1713
    %1720 = vmatprep.subr.mxu0 0.0
    %1721 = vmatpush1.msra.mxu0 0.0
    %1722 = vmatprep.subr.mxu0 0.0
    %1723 = vmatpush1.msra.mxu0 0.0
    %1724 = vmatprep.subr.mxu0 0.0
    %1725 = vmatpush1.msra.mxu0 0.0
    %1726 = vmatprep.subr.mxu0 0.0
    %1727 = vmatpush1.msra.mxu0 0.0
    %1728 = vmatprep.subr.mxu0 0.0
    %1729 = vmatpush1.msra.mxu0 0.0
    %1730 = vmatprep.subr.mxu0 0.0
    %1731 = vmatpush1.msra.mxu0 0.0
    %1732 = vmatprep.subr.mxu0 0.0
    %1733 = vmatpush1.msra.mxu0 0.0
    %1734 = vmatprep.subr.mxu0 0.0
    %1735 = vmatpush1.msra.mxu0 0.0
    %1736 = vmatprep.subr.mxu0 0.0
    %1737 = vmatpush1.msra.mxu0 0.0
    %1738 = vmatprep.subr.mxu0 0.0
    %1739 = vmatpush1.msra.mxu0 0.0
    %1740 = vmatprep.subr.mxu0 0.0
    %1741 = vmatpush1.msra.mxu0 0.0
    %1742 = vmatprep.subr.mxu0 0.0
    %1743 = vmatpush1.msra.mxu0 0.0
    %1744 = vmatprep.subr.mxu0 0.0
    %1745 = vmatpush1.msra.mxu0 0.0
    %1746 = vmatprep.subr.mxu0 0.0
    %1747 = vmatpush1.msra.mxu0 0.0
    %1748 = vmatprep.subr.mxu0 0.0
    %1749 = vmatpush1.msra.mxu0 0.0
    %1750 = vmatprep.subr.mxu0 0.0
    %1751 = vmatpush1.msra.mxu0 0.0
    %1752 = vmatprep.subr.mxu0 0.0
    %1753 = vmatpush1.msra.mxu0 0.0
    %1754 = vmatprep.subr.mxu0 0.0
    %1755 = vmatpush1.msra.mxu0 0.0
    %1756 = vmatprep.subr.mxu0 0.0
    %1757 = vmatpush1.msra.mxu0 0.0
    %1758 = vmatprep.subr.mxu0 0.0
    %1759 = vmatpush1.msra.mxu0 0.0
    %1760 = vmatprep.subr.mxu0 0.0
    %1761 = vmatpush1.msra.mxu0 0.0
    %1762 = vmatprep.subr.mxu0 0.0
    %1763 = vmatpush1.msra.mxu0 0.0
    %1764 = vmatprep.subr.mxu0 0.0
    %1765 = vmatpush1.msra.mxu0 0.0
    %1766 = vmatprep.subr.mxu0 0.0
    %1767 = vmatpush1.msra.mxu0 0.0
    %1768 = vmatprep.subr.mxu0 0.0
    %1769 = vmatpush1.msra.mxu0 0.0
    %1770 = vmatprep.subr.mxu0 0.0
    %1771 = vmatpush1.msra.mxu0 0.0
    %1772 = vmatprep.subr.mxu0 0.0
    %1773 = vmatpush1.msra.mxu0 0.0
    %1774 = vmatprep.subr.mxu0 0.0
    %1775 = vmatpush1.msra.mxu0 0.0
    %1776 = vmatprep.subr.mxu0 0.0
    %1777 = vmatpush1.msra.mxu0 0.0
    %1778 = vmatprep.subr.mxu0 0.0
    %1779 = vmatpush1.msra.mxu0 0.0
    %1780 = vmatprep.subr.mxu0 0.0
    %1781 = vmatpush1.msra.mxu0 0.0
    %1782 = vmatprep.mubr.f32.mxu0 0.0
    %1783 = vmatmul.mubr.f32.gmra.mrb[0].mxu0 %v1716
    %v1784 = vpop.f32.mrb[0].mxu0
    %v1785 = vadd.f32 0.0, %v1784
    %v1786 = vpop.f32.mrb[0].mxu0
    %1787 = vdwg.mxu0
    %1788 = vrot.lane.b32.xlu0 %v539, 32
    %v1789 = vpop.permute.xlu0 %1788
    %v1792 = vsel %vm697, %v1711, 0
    %1794 = vmatprep.subr.mxu0 0.0
    %1795 = vmatpush1.msra.mxu0 %v1789
    %1796 = vmatprep.subr.mxu0 0.0
    %1797 = vmatpush1.msra.mxu0 0.0
    %1798 = vmatprep.subr.mxu0 0.0
    %1799 = vmatpush1.msra.mxu0 0.0
    %1800 = vmatprep.subr.mxu0 0.0
    %1801 = vmatpush1.msra.mxu0 0.0
    %1802 = vmatprep.subr.mxu0 0.0
    %1803 = vmatpush1.msra.mxu0 0.0
    %1804 = vmatprep.subr.mxu0 0.0
    %1805 = vmatpush1.msra.mxu0 0.0
    %1806 = vmatprep.subr.mxu0 0.0
    %1807 = vmatpush1.msra.mxu0 0.0
    %1808 = vmatprep.subr.mxu0 0.0
    %1809 = vmatpush1.msra.mxu0 0.0
    %1810 = vmatprep.subr.mxu0 0.0
    %1811 = vmatpush1.msra.mxu0 0.0
    %1812 = vmatprep.subr.mxu0 0.0
    %1813 = vmatpush1.msra.mxu0 0.0
    %1814 = vmatprep.subr.mxu0 0.0
    %1815 = vmatpush1.msra.mxu0 0.0
    %1816 = vmatprep.subr.mxu0 0.0
    %1817 = vmatpush1.msra.mxu0 0.0
    %1818 = vmatprep.subr.mxu0 0.0
    %1819 = vmatpush1.msra.mxu0 0.0
    %1820 = vmatprep.subr.mxu0 0.0
    %1821 = vmatpush1.msra.mxu0 0.0
    %1822 = vmatprep.subr.mxu0 0.0
    %1823 = vmatpush1.msra.mxu0 0.0
    %1824 = vmatprep.subr.mxu0 0.0
    %1825 = vmatpush1.msra.mxu0 0.0
    %1826 = vmatprep.subr.mxu0 0.0
    %1827 = vmatpush1.msra.mxu0 0.0
    %1828 = vmatprep.subr.mxu0 0.0
    %1829 = vmatpush1.msra.mxu0 0.0
    %1830 = vmatprep.subr.mxu0 0.0
    %1831 = vmatpush1.msra.mxu0 0.0
    %1832 = vmatprep.subr.mxu0 0.0
    %1833 = vmatpush1.msra.mxu0 0.0
    %1834 = vmatprep.subr.mxu0 0.0
    %1835 = vmatpush1.msra.mxu0 0.0
    %1836 = vmatprep.subr.mxu0 0.0
    %1837 = vmatpush1.msra.mxu0 0.0
    %1838 = vmatprep.subr.mxu0 0.0
    %1839 = vmatpush1.msra.mxu0 0.0
    %1840 = vmatprep.subr.mxu0 0.0
    %1841 = vmatpush1.msra.mxu0 0.0
    %1842 = vmatprep.subr.mxu0 0.0
    %1843 = vmatpush1.msra.mxu0 0.0
    %1844 = vmatprep.subr.mxu0 0.0
    %1845 = vmatpush1.msra.mxu0 0.0
    %1846 = vmatprep.subr.mxu0 0.0
    %1847 = vmatpush1.msra.mxu0 0.0
    %1848 = vmatprep.subr.mxu0 0.0
    %1849 = vmatpush1.msra.mxu0 0.0
    %1850 = vmatprep.subr.mxu0 0.0
    %1851 = vmatpush1.msra.mxu0 0.0
    %1852 = vmatprep.subr.mxu0 0.0
    %1853 = vmatpush1.msra.mxu0 0.0
    %1854 = vmatprep.subr.mxu0 0.0
    %1855 = vmatpush1.msra.mxu0 0.0
    %1856 = vmatprep.subr.mxu0 0.0
    %1857 = vmatpush1.msra.mxu0 0.0
    %1858 = vmatprep.mubr.f32.mxu0 0.0
    %1859 = vmatmul.mubr.f32.gmra.mrb[0].mxu0 %v1792
    %v1860 = vpop.f32.mrb[0].mxu0
    %v1861 = vadd.f32 0.0, %v1860
    %v1862 = vpop.f32.mrb[0].mxu0
    %1863 = vdwg.mxu0
    %1866 = vrot.lane.b32.xlu0 %v1120, 32
    %v1867 = vpop.permute.xlu0 %1866
    %1868 = vrot.lane.b32.xlu0 %v1197, 32
    %v1869 = vpop.permute.xlu0 %1868
    %1874 = vrot.lane.b32.xlu0 %v1453, 64
    %v1875 = vpop.permute.xlu0 %1874
    %1876 = vrot.lane.b32.xlu0 %v1529, 64
    %v1877 = vpop.permute.xlu0 %1876
    %1882 = vrot.lane.b32.xlu0 %v1785, 96
    %v1883 = vpop.permute.xlu0 %1882
    %1884 = vrot.lane.b32.xlu0 %v1861, 96
    %v1885 = vpop.permute.xlu0 %1884
    %v1888 = vsel %vm542, %v790, %v1867
    %v1889 = vsel %vm542, %v863, %v1869
    %vm1890 = vcmask 523264
    %v1891 = vsel %vm1890, %v1888, %v1875
    %v1892 = vsel %vm1890, %v1889, %v1877
    %vm1893 = vcmask 785408
    %v1894 = vsel %vm1893, %v1891, %v1883
    %v1895 = vsel %vm1893, %v1892, %v1885
    %v1897 = vlaneseq
    %v1898 = vshrl.u32 %v1897, 7
    %v1899 = vsub.s32 0, %v1898
    %v1900 = vrot.slane %v303, %v1899
    %1902 = vmatprep.subr.mxu0 0.0
    %1903 = vmatpush1.msra.mxu0 %v287
    %1904 = vmatprep.subr.mxu0 0.0
    %1905 = vmatpush1.msra.mxu0 %v288
    %1906 = vmatprep.subr.mxu0 0.0
    %1907 = vmatpush1.msra.mxu0 %v289
    %1908 = vmatprep.subr.mxu0 0.0
    %1909 = vmatpush1.msra.mxu0 %v290
    %1910 = vmatprep.subr.mxu0 0.0
    %1911 = vmatpush1.msra.mxu0 %v291
    %1912 = vmatprep.subr.mxu0 0.0
    %1913 = vmatpush1.msra.mxu0 %v292
    %1914 = vmatprep.subr.mxu0 0.0
    %1915 = vmatpush1.msra.mxu0 %v293
    %1916 = vmatprep.subr.mxu0 0.0
    %1917 = vmatpush1.msra.mxu0 %v294
    %1918 = vmatprep.subr.mxu0 0.0
    %1919 = vmatpush1.msra.mxu0 %v295
    %1920 = vmatprep.subr.mxu0 0.0
    %1921 = vmatpush1.msra.mxu0 %v296
    %1922 = vmatprep.subr.mxu0 0.0
    %1923 = vmatpush1.msra.mxu0 %v297
    %1924 = vmatprep.subr.mxu0 0.0
    %1925 = vmatpush1.msra.mxu0 %v298
    %1926 = vmatprep.subr.mxu0 0.0
    %1927 = vmatpush1.msra.mxu0 %v299
    %1928 = vmatprep.subr.mxu0 0.0
    %1929 = vmatpush1.msra.mxu0 %v300
    %1930 = vmatprep.subr.mxu0 0.0
    %1931 = vmatpush1.msra.mxu0 %v301
    %1932 = vmatprep.subr.mxu0 0.0
    %1933 = vmatpush1.msra.mxu0 %v302
    %1934 = vmatprep.subr.mxu0 0.0
    %1935 = vmatpush1.msra.mxu0 0.0
    %1936 = vmatprep.subr.mxu0 0.0
    %1937 = vmatpush1.msra.mxu0 0.0
    %1938 = vmatprep.subr.mxu0 0.0
    %1939 = vmatpush1.msra.mxu0 0.0
    %1940 = vmatprep.subr.mxu0 0.0
    %1941 = vmatpush1.msra.mxu0 0.0
    %1942 = vmatprep.subr.mxu0 0.0
    %1943 = vmatpush1.msra.mxu0 0.0
    %1944 = vmatprep.subr.mxu0 0.0
    %1945 = vmatpush1.msra.mxu0 0.0
    %1946 = vmatprep.subr.mxu0 0.0
    %1947 = vmatpush1.msra.mxu0 0.0
    %1948 = vmatprep.subr.mxu0 0.0
    %1949 = vmatpush1.msra.mxu0 0.0
    %1950 = vmatprep.subr.mxu0 0.0
    %1951 = vmatpush1.msra.mxu0 0.0
    %1952 = vmatprep.subr.mxu0 0.0
    %1953 = vmatpush1.msra.mxu0 0.0
    %1954 = vmatprep.subr.mxu0 0.0
    %1955 = vmatpush1.msra.mxu0 0.0
    %1956 = vmatprep.subr.mxu0 0.0
    %1957 = vmatpush1.msra.mxu0 0.0
    %1958 = vmatprep.subr.mxu0 0.0
    %1959 = vmatpush1.msra.mxu0 0.0
    %1960 = vmatprep.subr.mxu0 0.0
    %1961 = vmatpush1.msra.mxu0 0.0
    %1962 = vmatprep.subr.mxu0 0.0
    %1963 = vmatpush1.msra.mxu0 0.0
    %1964 = vmatprep.subr.mxu0 0.0
    %1965 = vmatpush1.msra.mxu0 0.0
    %1966 = vmatprep.mubr.f32.mxu0 0.0
    %1967 = vmatmul.mubr.f32.gmra.mrb[0].mxu0 %v1894
    %v1968 = vpop.f32.mrb[0].mxu0
    %v1969 = vadd.f32 %v1900, %v1968
    %v1970 = vpop.f32.mrb[0].mxu0
    %1971 = vmatprep.mubr.f32.mxu0 0.0
    %1972 = vmatmul.mubr.f32.gmra.mrb[0].mxu0 %v1895
    %v1973 = vpop.f32.mrb[0].mxu0
    %v1974 = vadd.f32 %v1900, %v1973
    %v1975 = vpop.f32.mrb[0].mxu0
    %1976 = vdwg.mxu0
    %v1977 = vadd.f32 %v236, %v1969
    %v1978 = vadd.f32 %v237, %v1974
    %1979 = vadd.xlane.f32.xlu0 %v1977
    %v1980 = vpop.xlane.xlu0 %1979
    %1981 = vadd.xlane.f32.xlu0 %v1978
    %v1982 = vpop.xlane.xlu0 %1981
    %v1983 = vrcp.pop 128.0
    %v1984 = vmul.f32 %v1980, %v1983
    %v1985 = vmul.f32 %v1982, %v1983
    %v1986 = vsub.f32 %v1977, %v1984
    %v1987 = vsub.f32 %v1978, %v1985
    %v1988 = vmul.f32 %v1986, %v1986
    %v1989 = vmul.f32 %v1987, %v1987
    %1990 = vadd.xlane.f32.xlu0 %v1988
    %v1991 = vpop.xlane.xlu0 %1990
    %1992 = vadd.xlane.f32.xlu0 %v1989
    %v1993 = vpop.xlane.xlu0 %1992
    %v1994 = vmul.f32 %v1991, %v1983
    %v1995 = vmul.f32 %v1993, %v1983
    %v1996 = vadd.f32 %v1994, 1e-05
    %v1997 = vadd.f32 %v1995, 1e-05
    %v1998 = vrsqrt.pop %v1996
    %v1999 = vrsqrt.pop %v1997
    %v2000 = vmul.f32 %v1986, %v1998
    %v2001 = vmul.f32 %v1987, %v1999
    %v2003 = vlaneseq
    %v2004 = vshrl.u32 %v2003, 7
    %v2005 = vsub.s32 0, %v2004
    %v2006 = vrot.slane %v304, %v2005
    %v2008 = vmul.f32 %v2000, %v2006
    %v2009 = vmul.f32 %v2001, %v2006
    %v2011 = vlaneseq
    %v2012 = vshrl.u32 %v2011, 7
    %v2013 = vsub.s32 0, %v2012
    %v2014 = vrot.slane %v305, %v2013
    %v2016 = vadd.f32 %v2008, %v2014
    %v2017 = vadd.f32 %v2009, %v2014
    %v2019 = vlaneseq
    %v2020 = vshrl.u32 %v2019, 7
    %v2021 = vsub.s32 0, %v2020
    %v2022 = vrot.slane %v338, %v2021
    %v2023 = vlaneseq
    %v2024 = vshrl.u32 %v2023, 7
    %v2025 = vsub.s32 1, %v2024
    %v2026 = vrot.slane %v338, %v2025
    %2029 = vmatprep.subr.mxu0 %v307
    %2030 = vmatpush1.msra.mxu0 %v306
    %2031 = vmatprep.subr.mxu0 %v309
    %2032 = vmatpush1.msra.mxu0 %v308
    %2033 = vmatprep.subr.mxu0 %v311
    %2034 = vmatpush1.msra.mxu0 %v310
    %2035 = vmatprep.subr.mxu0 %v313
    %2036 = vmatpush1.msra.mxu0 %v312
    %2037 = vmatprep.subr.mxu0 %v315
    %2038 = vmatpush1.msra.mxu0 %v314
    %2039 = vmatprep.subr.mxu0 %v317
    %2040 = vmatpush1.msra.mxu0 %v316
    %2041 = vmatprep.subr.mxu0 %v319
    %2042 = vmatpush1.msra.mxu0 %v318
    %2043 = vmatprep.subr.mxu0 %v321
    %2044 = vmatpush1.msra.mxu0 %v320
    %2045 = vmatprep.subr.mxu0 %v323
    %2046 = vmatpush1.msra.mxu0 %v322
    %2047 = vmatprep.subr.mxu0 %v325
    %2048 = vmatpush1.msra.mxu0 %v324
    %2049 = vmatprep.subr.mxu0 %v327
    %2050 = vmatpush1.msra.mxu0 %v326
    %2051 = vmatprep.subr.mxu0 %v329
    %2052 = vmatpush1.msra.mxu0 %v328
    %2053 = vmatprep.subr.mxu0 %v331
    %2054 = vmatpush1.msra.mxu0 %v330
    %2055 = vmatprep.subr.mxu0 %v333
    %2056 = vmatpush1.msra.mxu0 %v332
    %2057 = vmatprep.subr.mxu0 %v335
    %2058 = vmatpush1.msra.mxu0 %v334
    %2059 = vmatprep.subr.mxu0 %v337
    %2060 = vmatpush1.msra.mxu0 %v336
    %2061 = vmatprep.subr.mxu0 0.0
    %2062 = vmatpush1.msra.mxu0 0.0
    %2063 = vmatprep.subr.mxu0 0.0
    %2064 = vmatpush1.msra.mxu0 0.0
    %2065 = vmatprep.subr.mxu0 0.0
    %2066 = vmatpush1.msra.mxu0 0.0
    %2067 = vmatprep.subr.mxu0 0.0
    %2068 = vmatpush1.msra.mxu0 0.0
    %2069 = vmatprep.subr.mxu0 0.0
    %2070 = vmatpush1.msra.mxu0 0.0
    %2071 = vmatprep.subr.mxu0 0.0
    %2072 = vmatpush1.msra.mxu0 0.0
    %2073 = vmatprep.subr.mxu0 0.0
    %2074 = vmatpush1.msra.mxu0 0.0
    %2075 = vmatprep.subr.mxu0 0.0
    %2076 = vmatpush1.msra.mxu0 0.0
    %2077 = vmatprep.subr.mxu0 0.0
    %2078 = vmatpush1.msra.mxu0 0.0
    %2079 = vmatprep.subr.mxu0 0.0
    %2080 = vmatpush1.msra.mxu0 0.0
    %2081 = vmatprep.subr.mxu0 0.0
    %2082 = vmatpush1.msra.mxu0 0.0
    %2083 = vmatprep.subr.mxu0 0.0
    %2084 = vmatpush1.msra.mxu0 0.0
    %2085 = vmatprep.subr.mxu0 0.0
    %2086 = vmatpush1.msra.mxu0 0.0
    %2087 = vmatprep.subr.mxu0 0.0
    %2088 = vmatpush1.msra.mxu0 0.0
    %2089 = vmatprep.subr.mxu0 0.0
    %2090 = vmatpush1.msra.mxu0 0.0
    %2091 = vmatprep.subr.mxu0 0.0
    %2092 = vmatpush1.msra.mxu0 0.0
    %2093 = vmatprep.mubr.f32.mxu0 0.0
    %2094 = vmatmul.mubr.f32.gmra.mrb[0].mxu0 %v2016
    %v2095 = vpop.f32.mrb[0].mxu0
    %v2096 = vadd.f32 %v2022, %v2095
    %v2097 = vpop.f32.mrb[0].mxu0
    %v2098 = vadd.f32 %v2026, %v2097
    %2099 = vmatprep.mubr.f32.mxu0 0.0
    %2100 = vmatmul.mubr.f32.gmra.mrb[0].mxu0 %v2017
    %v2101 = vpop.f32.mrb[0].mxu0
    %v2102 = vadd.f32 %v2022, %v2101
    %v2103 = vpop.f32.mrb[0].mxu0
    %v2104 = vadd.f32 %v2026, %v2103
    %2105 = vdwg.mxu0
    %v2106 = vmax.f32 %v2096, 0.0
    %v2107 = vmax.f32 %v2098, 0.0
    %v2108 = vmax.f32 %v2102, 0.0
    %v2109 = vmax.f32 %v2104, 0.0
    %v2111 = vlaneseq
    %v2112 = vshrl.u32 %v2111, 7
    %v2113 = vsub.s32 0, %v2112
    %v2114 = vrot.slane %v371, %v2113
    %2116 = vmatprep.subr.mxu0 0.0
    %2117 = vmatpush1.msra.mxu0 %v339
    %2118 = vmatprep.subr.mxu0 0.0
    %2119 = vmatpush1.msra.mxu0 %v340
    %2120 = vmatprep.subr.mxu0 0.0
    %2121 = vmatpush1.msra.mxu0 %v341
    %2122 = vmatprep.subr.mxu0 0.0
    %2123 = vmatpush1.msra.mxu0 %v342
    %2124 = vmatprep.subr.mxu0 0.0
    %2125 = vmatpush1.msra.mxu0 %v343
    %2126 = vmatprep.subr.mxu0 0.0
    %2127 = vmatpush1.msra.mxu0 %v344
    %2128 = vmatprep.subr.mxu0 0.0
    %2129 = vmatpush1.msra.mxu0 %v345
    %2130 = vmatprep.subr.mxu0 0.0
    %2131 = vmatpush1.msra.mxu0 %v346
    %2132 = vmatprep.subr.mxu0 0.0
    %2133 = vmatpush1.msra.mxu0 %v347
    %2134 = vmatprep.subr.mxu0 0.0
    %2135 = vmatpush1.msra.mxu0 %v348
    %2136 = vmatprep.subr.mxu0 0.0
    %2137 = vmatpush1.msra.mxu0 %v349
    %2138 = vmatprep.subr.mxu0 0.0
    %2139 = vmatpush1.msra.mxu0 %v350
    %2140 = vmatprep.subr.mxu0 0.0
    %2141 = vmatpush1.msra.mxu0 %v351
    %2142 = vmatprep.subr.mxu0 0.0
    %2143 = vmatpush1.msra.mxu0 %v352
    %2144 = vmatprep.subr.mxu0 0.0
    %2145 = vmatpush1.msra.mxu0 %v353
    %2146 = vmatprep.subr.mxu0 0.0
    %2147 = vmatpush1.msra.mxu0 %v354
    %2148 = vmatprep.subr.mxu0 0.0
    %2149 = vmatpush1.msra.mxu0 %v355
    %2150 = vmatprep.subr.mxu0 0.0
    %2151 = vmatpush1.msra.mxu0 %v356
    %2152 = vmatprep.subr.mxu0 0.0
    %2153 = vmatpush1.msra.mxu0 %v357
    %2154 = vmatprep.subr.mxu0 0.0
    %2155 = vmatpush1.msra.mxu0 %v358
    %2156 = vmatprep.subr.mxu0 0.0
    %2157 = vmatpush1.msra.mxu0 %v359
    %2158 = vmatprep.subr.mxu0 0.0
    %2159 = vmatpush1.msra.mxu0 %v360
    %2160 = vmatprep.subr.mxu0 0.0
    %2161 = vmatpush1.msra.mxu0 %v361
    %2162 = vmatprep.subr.mxu0 0.0
    %2163 = vmatpush1.msra.mxu0 %v362
    %2164 = vmatprep.subr.mxu0 0.0
    %2165 = vmatpush1.msra.mxu0 %v363
    %2166 = vmatprep.subr.mxu0 0.0
    %2167 = vmatpush1.msra.mxu0 %v364
    %2168 = vmatprep.subr.mxu0 0.0
    %2169 = vmatpush1.msra.mxu0 %v365
    %2170 = vmatprep.subr.mxu0 0.0
    %2171 = vmatpush1.msra.mxu0 %v366
    %2172 = vmatprep.subr.mxu0 0.0
    %2173 = vmatpush1.msra.mxu0 %v367
    %2174 = vmatprep.subr.mxu0 0.0
    %2175 = vmatpush1.msra.mxu0 %v368
    %2176 = vmatprep.subr.mxu0 0.0
    %2177 = vmatpush1.msra.mxu0 %v369
    %2178 = vmatprep.subr.mxu0 0.0
    %2179 = vmatpush1.msra.mxu0 %v370
    %2180 = vmatprep.mubr.f32.mxu0 %v2107
    %2181 = vmatmul.mubr.f32.gmra.mrb[0].mxu0 %v2106
    %v2182 = vpop.f32.mrb[0].mxu0
    %v2183 = vadd.f32 %v2114, %v2182
    %v2184 = vpop.f32.mrb[0].mxu0
    %2185 = vmatprep.mubr.f32.mxu0 %v2109
    %2186 = vmatmul.mubr.f32.gmra.mrb[0].mxu0 %v2108
    %v2187 = vpop.f32.mrb[0].mxu0
    %v2188 = vadd.f32 %v2114, %v2187
    %v2189 = vpop.f32.mrb[0].mxu0
    %2190 = vdwg.mxu0
    %v2191 = vadd.f32 %v2016, %v2183
    %v2192 = vadd.f32 %v2017, %v2188
    %2193 = vadd.xlane.f32.xlu0 %v2191
    %v2194 = vpop.xlane.xlu0 %2193
    %2195 = vadd.xlane.f32.xlu0 %v2192
    %v2196 = vpop.xlane.xlu0 %2195
    %v2197 = vmul.f32 %v2194, %v1983
    %v2198 = vmul.f32 %v2196, %v1983
    %v2199 = vsub.f32 %v2191, %v2197
    %v2200 = vsub.f32 %v2192, %v2198
    %v2201 = vmul.f32 %v2199, %v2199
    %v2202 = vmul.f32 %v2200, %v2200
    %2203 = vadd.xlane.f32.xlu0 %v2201
    %v2204 = vpop.xlane.xlu0 %2203
    %2205 = vadd.xlane.f32.xlu0 %v2202
    %v2206 = vpop.xlane.xlu0 %2205
    %v2207 = vmul.f32 %v2204, %v1983
    %v2208 = vmul.f32 %v2206, %v1983
    %v2209 = vadd.f32 %v2207, 1e-05
    %v2210 = vadd.f32 %v2208, 1e-05
    %v2211 = vrsqrt.pop %v2209
    %v2212 = vrsqrt.pop %v2210
    %v2213 = vmul.f32 %v2199, %v2211
    %v2214 = vmul.f32 %v2200, %v2212
    %v2216 = vlaneseq
    %v2217 = vshrl.u32 %v2216, 7
    %v2218 = vsub.s32 0, %v2217
    %v2219 = vrot.slane %v372, %v2218
    %v2221 = vmul.f32 %v2213, %v2219
    %v2222 = vmul.f32 %v2214, %v2219
    %v2224 = vlaneseq
    %v2225 = vshrl.u32 %v2224, 7
    %v2226 = vsub.s32 0, %v2225
    %v2227 = vrot.slane %v373, %v2226
    %v2229 = vadd.f32 %v2221, %v2227
    %v2230 = vadd.f32 %v2222, %v2227
    %s2231 = scalar_lea.vmem [#allocation5], 384
    %v2232 = vld [vmem:[%s2231] sm:$0xff]
    %v2233 = vld [vmem:[%s2231 + $0x8] sm:$0xff]
    %v2234 = vld [vmem:[%s2231 + $0x10] sm:$0xff]
    %v2235 = vld [vmem:[%s2231 + $0x18] sm:$0xff]
    %v2236 = vld [vmem:[%s2231 + $0x20] sm:$0xff]
    %v2237 = vld [vmem:[%s2231 + $0x28] sm:$0xff]
    %v2238 = vld [vmem:[%s2231 + $0x30] sm:$0xff]
    %v2239 = vld [vmem:[%s2231 + $0x38] sm:$0xff]
    %v2240 = vld [vmem:[%s2231 + $0x40] sm:$0xff]
    %v2241 = vld [vmem:[%s2231 + $0x48] sm:$0xff]
    %v2242 = vld [vmem:[%s2231 + $0x50] sm:$0xff]
    %v2243 = vld [vmem:[%s2231 + $0x58] sm:$0xff]
    %v2244 = vld [vmem:[%s2231 + $0x60] sm:$0xff]
    %v2245 = vld [vmem:[%s2231 + $0x68] sm:$0xff]
    %v2246 = vld [vmem:[%s2231 + $0x70] sm:$0xff]
    %v2247 = vld [vmem:[%s2231 + $0x78] sm:$0xff]
    %v2248 = vld [vmem:[%s2231 + $0x80] sm:$0xff]
    %v2249 = vld [vmem:[%s2231 + $0x88] sm:$0xff]
    %v2250 = vld [vmem:[%s2231 + $0x90] sm:$0xff]
    %v2251 = vld [vmem:[%s2231 + $0x98] sm:$0xff]
    %v2252 = vld [vmem:[%s2231 + $0xa0] sm:$0xff]
    %v2253 = vld [vmem:[%s2231 + $0xa8] sm:$0xff]
    %v2254 = vld [vmem:[%s2231 + $0xb0] sm:$0xff]
    %v2255 = vld [vmem:[%s2231 + $0xb8] sm:$0xff]
    %v2256 = vld [vmem:[%s2231 + $0xc0] sm:$0xff]
    %v2257 = vld [vmem:[%s2231 + $0xc8] sm:$0xff]
    %v2258 = vld [vmem:[%s2231 + $0xd0] sm:$0xff]
    %v2259 = vld [vmem:[%s2231 + $0xd8] sm:$0xff]
    %v2260 = vld [vmem:[%s2231 + $0xe0] sm:$0xff]
    %v2261 = vld [vmem:[%s2231 + $0xe8] sm:$0xff]
    %v2262 = vld [vmem:[%s2231 + $0xf0] sm:$0xff]
    %v2263 = vld [vmem:[%s2231 + $0xf8] sm:$0xff]
    %v2264 = vld [vmem:[%s2231 + $0x100] sm:$0xff]
    %v2265 = vld [vmem:[%s2231 + $0x108] sm:$0xff]
    %v2266 = vld [vmem:[%s2231 + $0x110] sm:$0xff]
    %v2267 = vld [vmem:[%s2231 + $0x118] sm:$0xff]
    %v2268 = vld [vmem:[%s2231 + $0x120] sm:$0xff]
    %v2269 = vld [vmem:[%s2231 + $0x128] sm:$0xff]
    %v2270 = vld [vmem:[%s2231 + $0x130] sm:$0xff]
    %v2271 = vld [vmem:[%s2231 + $0x138] sm:$0xff]
    %v2272 = vld [vmem:[%s2231 + $0x140] sm:$0xff]
    %v2273 = vld [vmem:[%s2231 + $0x148] sm:$0xff]
    %v2274 = vld [vmem:[%s2231 + $0x150] sm:$0xff]
    %v2275 = vld [vmem:[%s2231 + $0x158] sm:$0xff]
    %v2276 = vld [vmem:[%s2231 + $0x160] sm:$0xff]
    %v2277 = vld [vmem:[%s2231 + $0x168] sm:$0xff]
    %v2278 = vld [vmem:[%s2231 + $0x170] sm:$0xff]
    %v2279 = vld [vmem:[%s2231 + $0x178] sm:$0xff]
    %s2280 = scalar_lea.vmem [#allocation7], 3
    %v2281 = vld [vmem:[%s2280] sm:$0x7]
    %s2282 = scalar_lea.vmem %s5, 128
    %v2283 = vld [vmem:[%s2282] sm:$0xff]
    %v2284 = vld [vmem:[%s2282 + $0x8] sm:$0xff]
    %v2285 = vld [vmem:[%s2282 + $0x10] sm:$0xff]
    %v2286 = vld [vmem:[%s2282 + $0x18] sm:$0xff]
    %v2287 = vld [vmem:[%s2282 + $0x20] sm:$0xff]
    %v2288 = vld [vmem:[%s2282 + $0x28] sm:$0xff]
    %v2289 = vld [vmem:[%s2282 + $0x30] sm:$0xff]
    %v2290 = vld [vmem:[%s2282 + $0x38] sm:$0xff]
    %v2291 = vld [vmem:[%s2282 + $0x40] sm:$0xff]
    %v2292 = vld [vmem:[%s2282 + $0x48] sm:$0xff]
    %v2293 = vld [vmem:[%s2282 + $0x50] sm:$0xff]
    %v2294 = vld [vmem:[%s2282 + $0x58] sm:$0xff]
    %v2295 = vld [vmem:[%s2282 + $0x60] sm:$0xff]
    %v2296 = vld [vmem:[%s2282 + $0x68] sm:$0xff]
    %v2297 = vld [vmem:[%s2282 + $0x70] sm:$0xff]
    %v2298 = vld [vmem:[%s2282 + $0x78] sm:$0xff]
    %s2299 = scalar_lea.vmem [#allocation8], 1
    %v2300 = vld [vmem:[%s2299] sm:$0x1]
    %s2301 = scalar_lea.vmem [#allocation10], 1
    %v2302 = vld [vmem:[%s2301] sm:$0x1]
    %s2303 = scalar_lea.vmem [#allocation11], 1
    %v2304 = vld [vmem:[%s2303] sm:$0x1]
    %s2305 = scalar_lea.vmem [#allocation13], 256
    %v2306 = vld [vmem:[%s2305] sm:$0xff]
    %v2307 = vld [vmem:[%s2305 + $0x8] sm:$0xff]
    %v2308 = vld [vmem:[%s2305 + $0x10] sm:$0xff]
    %v2309 = vld [vmem:[%s2305 + $0x18] sm:$0xff]
    %v2310 = vld [vmem:[%s2305 + $0x20] sm:$0xff]
    %v2311 = vld [vmem:[%s2305 + $0x28] sm:$0xff]
    %v2312 = vld [vmem:[%s2305 + $0x30] sm:$0xff]
    %v2313 = vld [vmem:[%s2305 + $0x38] sm:$0xff]
    %v2314 = vld [vmem:[%s2305 + $0x40] sm:$0xff]
    %v2315 = vld [vmem:[%s2305 + $0x48] sm:$0xff]
    %v2316 = vld [vmem:[%s2305 + $0x50] sm:$0xff]
    %v2317 = vld [vmem:[%s2305 + $0x58] sm:$0xff]
    %v2318 = vld [vmem:[%s2305 + $0x60] sm:$0xff]
    %v2319 = vld [vmem:[%s2305 + $0x68] sm:$0xff]
    %v2320 = vld [vmem:[%s2305 + $0x70] sm:$0xff]
    %v2321 = vld [vmem:[%s2305 + $0x78] sm:$0xff]
    %v2322 = vld [vmem:[%s2305 + $0x80] sm:$0xff]
    %v2323 = vld [vmem:[%s2305 + $0x88] sm:$0xff]
    %v2324 = vld [vmem:[%s2305 + $0x90] sm:$0xff]
    %v2325 = vld [vmem:[%s2305 + $0x98] sm:$0xff]
    %v2326 = vld [vmem:[%s2305 + $0xa0] sm:$0xff]
    %v2327 = vld [vmem:[%s2305 + $0xa8] sm:$0xff]
    %v2328 = vld [vmem:[%s2305 + $0xb0] sm:$0xff]
    %v2329 = vld [vmem:[%s2305 + $0xb8] sm:$0xff]
    %v2330 = vld [vmem:[%s2305 + $0xc0] sm:$0xff]
    %v2331 = vld [vmem:[%s2305 + $0xc8] sm:$0xff]
    %v2332 = vld [vmem:[%s2305 + $0xd0] sm:$0xff]
    %v2333 = vld [vmem:[%s2305 + $0xd8] sm:$0xff]
    %v2334 = vld [vmem:[%s2305 + $0xe0] sm:$0xff]
    %v2335 = vld [vmem:[%s2305 + $0xe8] sm:$0xff]
    %v2336 = vld [vmem:[%s2305 + $0xf0] sm:$0xff]
    %v2337 = vld [vmem:[%s2305 + $0xf8] sm:$0xff]
    %s2338 = scalar_lea.vmem %s10, 2
    %v2339 = vld [vmem:[%s2338] sm:$0x3]
    %s2340 = scalar_lea.vmem [#allocation14], 256
    %v2341 = vld [vmem:[%s2340] sm:$0xff]
    %v2342 = vld [vmem:[%s2340 + $0x8] sm:$0xff]
    %v2343 = vld [vmem:[%s2340 + $0x10] sm:$0xff]
    %v2344 = vld [vmem:[%s2340 + $0x18] sm:$0xff]
    %v2345 = vld [vmem:[%s2340 + $0x20] sm:$0xff]
    %v2346 = vld [vmem:[%s2340 + $0x28] sm:$0xff]
    %v2347 = vld [vmem:[%s2340 + $0x30] sm:$0xff]
    %v2348 = vld [vmem:[%s2340 + $0x38] sm:$0xff]
    %v2349 = vld [vmem:[%s2340 + $0x40] sm:$0xff]
    %v2350 = vld [vmem:[%s2340 + $0x48] sm:$0xff]
    %v2351 = vld [vmem:[%s2340 + $0x50] sm:$0xff]
    %v2352 = vld [vmem:[%s2340 + $0x58] sm:$0xff]
    %v2353 = vld [vmem:[%s2340 + $0x60] sm:$0xff]
    %v2354 = vld [vmem:[%s2340 + $0x68] sm:$0xff]
    %v2355 = vld [vmem:[%s2340 + $0x70] sm:$0xff]
    %v2356 = vld [vmem:[%s2340 + $0x78] sm:$0xff]
    %v2357 = vld [vmem:[%s2340 + $0x80] sm:$0xff]
    %v2358 = vld [vmem:[%s2340 + $0x88] sm:$0xff]
    %v2359 = vld [vmem:[%s2340 + $0x90] sm:$0xff]
    %v2360 = vld [vmem:[%s2340 + $0x98] sm:$0xff]
    %v2361 = vld [vmem:[%s2340 + $0xa0] sm:$0xff]
    %v2362 = vld [vmem:[%s2340 + $0xa8] sm:$0xff]
    %v2363 = vld [vmem:[%s2340 + $0xb0] sm:$0xff]
    %v2364 = vld [vmem:[%s2340 + $0xb8] sm:$0xff]
    %v2365 = vld [vmem:[%s2340 + $0xc0] sm:$0xff]
    %v2366 = vld [vmem:[%s2340 + $0xc8] sm:$0xff]
    %v2367 = vld [vmem:[%s2340 + $0xd0] sm:$0xff]
    %v2368 = vld [vmem:[%s2340 + $0xd8] sm:$0xff]
    %v2369 = vld [vmem:[%s2340 + $0xe0] sm:$0xff]
    %v2370 = vld [vmem:[%s2340 + $0xe8] sm:$0xff]
    %v2371 = vld [vmem:[%s2340 + $0xf0] sm:$0xff]
    %v2372 = vld [vmem:[%s2340 + $0xf8] sm:$0xff]
    %s2373 = scalar_lea.vmem [#allocation16], 1
    %v2374 = vld [vmem:[%s2373] sm:$0x1]
    %s2375 = scalar_lea.vmem [#allocation17], 1
    %v2376 = vld [vmem:[%s2375] sm:$0x1]
    %s2377 = scalar_lea.vmem [#allocation19], 1
    %v2378 = vld [vmem:[%s2377] sm:$0x1]
    %v2380 = vlaneseq
    %v2381 = vshrl.u32 %v2380, 7
    %v2382 = vsub.s32 0, %v2381
    %v2383 = vrot.slane %v2281, %v2382
    %v2384 = vlaneseq
    %v2385 = vshrl.u32 %v2384, 7
    %v2386 = vsub.s32 1, %v2385
    %v2387 = vrot.slane %v2281, %v2386
    %v2388 = vlaneseq
    %v2389 = vshrl.u32 %v2388, 7
    %v2390 = vsub.s32 2, %v2389
    %v2391 = vrot.slane %v2281, %v2390
    %2395 = vmatprep.subr.mxu0 %v2233
    %2396 = vmatpush1.msra.mxu0 %v2232
    %2397 = vmatprep.subr.mxu0 %v2236
    %2398 = vmatpush1.msra.mxu0 %v2235
    %2399 = vmatprep.subr.mxu0 %v2239
    %2400 = vmatpush1.msra.mxu0 %v2238
    %2401 = vmatprep.subr.mxu0 %v2242
    %2402 = vmatpush1.msra.mxu0 %v2241
    %2403 = vmatprep.subr.mxu0 %v2245
    %2404 = vmatpush1.msra.mxu0 %v2244
    %2405 = vmatprep.subr.mxu0 %v2248
    %2406 = vmatpush1.msra.mxu0 %v2247
    %2407 = vmatprep.subr.mxu0 %v2251
    %2408 = vmatpush1.msra.mxu0 %v2250
    %2409 = vmatprep.subr.mxu0 %v2254
    %2410 = vmatpush1.msra.mxu0 %v2253
    %2411 = vmatprep.subr.mxu0 %v2257
    %2412 = vmatpush1.msra.mxu0 %v2256
    %2413 = vmatprep.subr.mxu0 %v2260
    %2414 = vmatpush1.msra.mxu0 %v2259
    %2415 = vmatprep.subr.mxu0 %v2263
    %2416 = vmatpush1.msra.mxu0 %v2262
    %2417 = vmatprep.subr.mxu0 %v2266
    %2418 = vmatpush1.msra.mxu0 %v2265
    %2419 = vmatprep.subr.mxu0 %v2269
    %2420 = vmatpush1.msra.mxu0 %v2268
    %2421 = vmatprep.subr.mxu0 %v2272
    %2422 = vmatpush1.msra.mxu0 %v2271
    %2423 = vmatprep.subr.mxu0 %v2275
    %2424 = vmatpush1.msra.mxu0 %v2274
    %2425 = vmatprep.subr.mxu0 %v2278
    %2426 = vmatpush1.msra.mxu0 %v2277
    %2427 = vmatprep.subr.mxu0 0.0
    %2428 = vmatpush1.msra.mxu0 0.0
    %2429 = vmatprep.subr.mxu0 0.0
    %2430 = vmatpush1.msra.mxu0 0.0
    %2431 = vmatprep.subr.mxu0 0.0
    %2432 = vmatpush1.msra.mxu0 0.0
    %2433 = vmatprep.subr.mxu0 0.0
    %2434 = vmatpush1.msra.mxu0 0.0
    %2435 = vmatprep.subr.mxu0 0.0
    %2436 = vmatpush1.msra.mxu0 0.0
    %2437 = vmatprep.subr.mxu0 0.0
    %2438 = vmatpush1.msra.mxu0 0.0
    %2439 = vmatprep.subr.mxu0 0.0
    %2440 = vmatpush1.msra.mxu0 0.0
    %2441 = vmatprep.subr.mxu0 0.0
    %2442 = vmatpush1.msra.mxu0 0.0
    %2443 = vmatprep.subr.mxu0 0.0
    %2444 = vmatpush1.msra.mxu0 0.0
    %2445 = vmatprep.subr.mxu0 0.0
    %2446 = vmatpush1.msra.mxu0 0.0
    %2447 = vmatprep.subr.mxu0 0.0
    %2448 = vmatpush1.msra.mxu0 0.0
    %2449 = vmatprep.subr.mxu0 0.0
    %2450 = vmatpush1.msra.mxu0 0.0
    %2451 = vmatprep.subr.mxu0 0.0
    %2452 = vmatpush1.msra.mxu0 0.0
    %2453 = vmatprep.subr.mxu0 0.0
    %2454 = vmatpush1.msra.mxu0 0.0
    %2455 = vmatprep.subr.mxu0 0.0
    %2456 = vmatpush1.msra.mxu0 0.0
    %2457 = vmatprep.subr.mxu0 0.0
    %2458 = vmatpush1.msra.mxu0 0.0
    %2459 = vmatprep.mubr.f32.mxu0 0.0
    %2460 = vmatmul.mubr.f32.gmra.mrb[0].mxu0 %v2229
    %v2461 = vpop.f32.mrb[0].mxu0
    %v2462 = vadd.f32 %v2383, %v2461
    %v2463 = vpop.f32.mrb[0].mxu0
    %v2464 = vadd.f32 %v2387, %v2463
    %2465 = vmatprep.mubr.f32.mxu0 0.0
    %2466 = vmatmul.mubr.f32.gmra.mrb[0].mxu0 %v2230
    %v2467 = vpop.f32.mrb[0].mxu0
    %v2468 = vadd.f32 %v2383, %v2467
    %v2469 = vpop.f32.mrb[0].mxu0
    %v2470 = vadd.f32 %v2387, %v2469
    %2471 = vdwg.mxu0
    %2472 = vmatprep.subr.mxu0 0.0
    %2473 = vmatpush1.msra.mxu0 %v2234
    %2474 = vmatprep.subr.mxu0 0.0
    %2475 = vmatpush1.msra.mxu0 %v2237
    %2476 = vmatprep.subr.mxu0 0.0
    %2477 = vmatpush1.msra.mxu0 %v2240
    %2478 = vmatprep.subr.mxu0 0.0
    %2479 = vmatpush1.msra.mxu0 %v2243
    %2480 = vmatprep.subr.mxu0 0.0
    %2481 = vmatpush1.msra.mxu0 %v2246
    %2482 = vmatprep.subr.mxu0 0.0
    %2483 = vmatpush1.msra.mxu0 %v2249
    %2484 = vmatprep.subr.mxu0 0.0
    %2485 = vmatpush1.msra.mxu0 %v2252
    %2486 = vmatprep.subr.mxu0 0.0
    %2487 = vmatpush1.msra.mxu0 %v2255
    %2488 = vmatprep.subr.mxu0 0.0
    %2489 = vmatpush1.msra.mxu0 %v2258
    %2490 = vmatprep.subr.mxu0 0.0
    %2491 = vmatpush1.msra.mxu0 %v2261
    %2492 = vmatprep.subr.mxu0 0.0
    %2493 = vmatpush1.msra.mxu0 %v2264
    %2494 = vmatprep.subr.mxu0 0.0
    %2495 = vmatpush1.msra.mxu0 %v2267
    %2496 = vmatprep.subr.mxu0 0.0
    %2497 = vmatpush1.msra.mxu0 %v2270
    %2498 = vmatprep.subr.mxu0 0.0
    %2499 = vmatpush1.msra.mxu0 %v2273
    %2500 = vmatprep.subr.mxu0 0.0
    %2501 = vmatpush1.msra.mxu0 %v2276
    %2502 = vmatprep.subr.mxu0 0.0
    %2503 = vmatpush1.msra.mxu0 %v2279
    %2504 = vmatprep.subr.mxu0 0.0
    %2505 = vmatpush1.msra.mxu0 0.0
    %2506 = vmatprep.subr.mxu0 0.0
    %2507 = vmatpush1.msra.mxu0 0.0
    %2508 = vmatprep.subr.mxu0 0.0
    %2509 = vmatpush1.msra.mxu0 0.0
    %2510 = vmatprep.subr.mxu0 0.0
    %2511 = vmatpush1.msra.mxu0 0.0
    %2512 = vmatprep.subr.mxu0 0.0
    %2513 = vmatpush1.msra.mxu0 0.0
    %2514 = vmatprep.subr.mxu0 0.0
    %2515 = vmatpush1.msra.mxu0 0.0
    %2516 = vmatprep.subr.mxu0 0.0
    %2517 = vmatpush1.msra.mxu0 0.0
    %2518 = vmatprep.subr.mxu0 0.0
    %2519 = vmatpush1.msra.mxu0 0.0
    %2520 = vmatprep.subr.mxu0 0.0
    %2521 = vmatpush1.msra.mxu0 0.0
    %2522 = vmatprep.subr.mxu0 0.0
    %2523 = vmatpush1.msra.mxu0 0.0
    %2524 = vmatprep.subr.mxu0 0.0
    %2525 = vmatpush1.msra.mxu0 0.0
    %2526 = vmatprep.subr.mxu0 0.0
    %2527 = vmatpush1.msra.mxu0 0.0
    %2528 = vmatprep.subr.mxu0 0.0
    %2529 = vmatpush1.msra.mxu0 0.0
    %2530 = vmatprep.subr.mxu0 0.0
    %2531 = vmatpush1.msra.mxu0 0.0
    %2532 = vmatprep.subr.mxu0 0.0
    %2533 = vmatpush1.msra.mxu0 0.0
    %2534 = vmatprep.subr.mxu0 0.0
    %2535 = vmatpush1.msra.mxu0 0.0
    %2536 = vmatprep.mubr.f32.mxu0 0.0
    %2537 = vmatmul.mubr.f32.gmra.mrb[0].mxu0 %v2229
    %v2538 = vpop.f32.mrb[0].mxu0
    %v2539 = vadd.f32 %v2391, %v2538
    %v2540 = vpop.f32.mrb[0].mxu0
    %2541 = vmatprep.mubr.f32.mxu0 0.0
    %2542 = vmatmul.mubr.f32.gmra.mrb[0].mxu0 %v2230
    %v2543 = vpop.f32.mrb[0].mxu0
    %v2544 = vadd.f32 %v2391, %v2543
    %v2545 = vpop.f32.mrb[0].mxu0
    %2546 = vdwg.mxu0
    %v2548 = vsel %vm542, %v2462, 0
    %v2551 = vsel %vm542, %v2464, 0
    %2553 = vmatprep.subr.mxu0 0.0
    %2554 = vmatpush1.xpose.msra.mxu0 %v2551
    %2555 = vmatprep.subr.mxu0 0.0
    %2556 = vmatpush1.xpose.msra.mxu0 0.0
    %2557 = vmatprep.subr.mxu0 0.0
    %2558 = vmatpush1.xpose.msra.mxu0 0.0
    %2559 = vmatprep.subr.mxu0 0.0
    %2560 = vmatpush1.xpose.msra.mxu0 0.0
    %2561 = vmatprep.subr.mxu0 0.0
    %2562 = vmatpush1.xpose.msra.mxu0 0.0
    %2563 = vmatprep.subr.mxu0 0.0
    %2564 = vmatpush1.xpose.msra.mxu0 0.0
    %2565 = vmatprep.subr.mxu0 0.0
    %2566 = vmatpush1.xpose.msra.mxu0 0.0
    %2567 = vmatprep.subr.mxu0 0.0
    %2568 = vmatpush1.xpose.msra.mxu0 0.0
    %2569 = vmatprep.subr.mxu0 0.0
    %2570 = vmatpush1.xpose.msra.mxu0 0.0
    %2571 = vmatprep.subr.mxu0 0.0
    %2572 = vmatpush1.xpose.msra.mxu0 0.0
    %2573 = vmatprep.subr.mxu0 0.0
    %2574 = vmatpush1.xpose.msra.mxu0 0.0
    %2575 = vmatprep.subr.mxu0 0.0
    %2576 = vmatpush1.xpose.msra.mxu0 0.0
    %2577 = vmatprep.subr.mxu0 0.0
    %2578 = vmatpush1.xpose.msra.mxu0 0.0
    %2579 = vmatprep.subr.mxu0 0.0
    %2580 = vmatpush1.xpose.msra.mxu0 0.0
    %2581 = vmatprep.subr.mxu0 0.0
    %2582 = vmatpush1.xpose.msra.mxu0 0.0
    %2583 = vmatprep.subr.mxu0 0.0
    %2584 = vmatpush1.xpose.msra.mxu0 0.0
    %2585 = vmatprep.subr.mxu0 0.0
    %2586 = vmatpush1.xpose.msra.mxu0 0.0
    %2587 = vmatprep.subr.mxu0 0.0
    %2588 = vmatpush1.xpose.msra.mxu0 0.0
    %2589 = vmatprep.subr.mxu0 0.0
    %2590 = vmatpush1.xpose.msra.mxu0 0.0
    %2591 = vmatprep.subr.mxu0 0.0
    %2592 = vmatpush1.xpose.msra.mxu0 0.0
    %2593 = vmatprep.subr.mxu0 0.0
    %2594 = vmatpush1.xpose.msra.mxu0 0.0
    %2595 = vmatprep.subr.mxu0 0.0
    %2596 = vmatpush1.xpose.msra.mxu0 0.0
    %2597 = vmatprep.subr.mxu0 0.0
    %2598 = vmatpush1.xpose.msra.mxu0 0.0
    %2599 = vmatprep.subr.mxu0 0.0
    %2600 = vmatpush1.xpose.msra.mxu0 0.0
    %2601 = vmatprep.subr.mxu0 0.0
    %2602 = vmatpush1.xpose.msra.mxu0 0.0
    %2603 = vmatprep.subr.mxu0 0.0
    %2604 = vmatpush1.xpose.msra.mxu0 0.0
    %2605 = vmatprep.subr.mxu0 0.0
    %2606 = vmatpush1.xpose.msra.mxu0 0.0
    %2607 = vmatprep.subr.mxu0 0.0
    %2608 = vmatpush1.xpose.msra.mxu0 0.0
    %2609 = vmatprep.subr.mxu0 0.0
    %2610 = vmatpush1.xpose.msra.mxu0 0.0
    %2611 = vmatprep.subr.mxu0 0.0
    %2612 = vmatpush1.xpose.msra.mxu0 0.0
    %2613 = vmatprep.subr.mxu0 0.0
    %2614 = vmatpush1.xpose.msra.mxu0 0.0
    %2615 = vmatprep.subr.mxu0 0.0
    %2616 = vmatpush1.xpose.msra.mxu0 0.0
    %2617 = vmatprep.mubr.f32.mxu0 0.0
    %2618 = vmatmul.mubr.f32.gmra.mrb[0].mxu0 %v2548
    %v2619 = vpop.f32.mrb[0].mxu0
    %v2620 = vadd.f32 0.0, %v2619
    %v2621 = vpop.f32.mrb[0].mxu0
    %2622 = vdwg.mxu0
    %v2624 = vsel %vm542, %v2468, 0
    %v2627 = vsel %vm542, %v2470, 0
    %2629 = vmatprep.subr.mxu0 0.0
    %2630 = vmatpush1.xpose.msra.mxu0 %v2627
    %2631 = vmatprep.subr.mxu0 0.0
    %2632 = vmatpush1.xpose.msra.mxu0 0.0
    %2633 = vmatprep.subr.mxu0 0.0
    %2634 = vmatpush1.xpose.msra.mxu0 0.0
    %2635 = vmatprep.subr.mxu0 0.0
    %2636 = vmatpush1.xpose.msra.mxu0 0.0
    %2637 = vmatprep.subr.mxu0 0.0
    %2638 = vmatpush1.xpose.msra.mxu0 0.0
    %2639 = vmatprep.subr.mxu0 0.0
    %2640 = vmatpush1.xpose.msra.mxu0 0.0
    %2641 = vmatprep.subr.mxu0 0.0
    %2642 = vmatpush1.xpose.msra.mxu0 0.0
    %2643 = vmatprep.subr.mxu0 0.0
    %2644 = vmatpush1.xpose.msra.mxu0 0.0
    %2645 = vmatprep.subr.mxu0 0.0
    %2646 = vmatpush1.xpose.msra.mxu0 0.0
    %2647 = vmatprep.subr.mxu0 0.0
    %2648 = vmatpush1.xpose.msra.mxu0 0.0
    %2649 = vmatprep.subr.mxu0 0.0
    %2650 = vmatpush1.xpose.msra.mxu0 0.0
    %2651 = vmatprep.subr.mxu0 0.0
    %2652 = vmatpush1.xpose.msra.mxu0 0.0
    %2653 = vmatprep.subr.mxu0 0.0
    %2654 = vmatpush1.xpose.msra.mxu0 0.0
    %2655 = vmatprep.subr.mxu0 0.0
    %2656 = vmatpush1.xpose.msra.mxu0 0.0
    %2657 = vmatprep.subr.mxu0 0.0
    %2658 = vmatpush1.xpose.msra.mxu0 0.0
    %2659 = vmatprep.subr.mxu0 0.0
    %2660 = vmatpush1.xpose.msra.mxu0 0.0
    %2661 = vmatprep.subr.mxu0 0.0
    %2662 = vmatpush1.xpose.msra.mxu0 0.0
    %2663 = vmatprep.subr.mxu0 0.0
    %2664 = vmatpush1.xpose.msra.mxu0 0.0
    %2665 = vmatprep.subr.mxu0 0.0
    %2666 = vmatpush1.xpose.msra.mxu0 0.0
    %2667 = vmatprep.subr.mxu0 0.0
    %2668 = vmatpush1.xpose.msra.mxu0 0.0
    %2669 = vmatprep.subr.mxu0 0.0
    %2670 = vmatpush1.xpose.msra.mxu0 0.0
    %2671 = vmatprep.subr.mxu0 0.0
    %2672 = vmatpush1.xpose.msra.mxu0 0.0
    %2673 = vmatprep.subr.mxu0 0.0
    %2674 = vmatpush1.xpose.msra.mxu0 0.0
    %2675 = vmatprep.subr.mxu0 0.0
    %2676 = vmatpush1.xpose.msra.mxu0 0.0
    %2677 = vmatprep.subr.mxu0 0.0
    %2678 = vmatpush1.xpose.msra.mxu0 0.0
    %2679 = vmatprep.subr.mxu0 0.0
    %2680 = vmatpush1.xpose.msra.mxu0 0.0
    %2681 = vmatprep.subr.mxu0 0.0
    %2682 = vmatpush1.xpose.msra.mxu0 0.0
    %2683 = vmatprep.subr.mxu0 0.0
    %2684 = vmatpush1.xpose.msra.mxu0 0.0
    %2685 = vmatprep.subr.mxu0 0.0
    %2686 = vmatpush1.xpose.msra.mxu0 0.0
    %2687 = vmatprep.subr.mxu0 0.0
    %2688 = vmatpush1.xpose.msra.mxu0 0.0
    %2689 = vmatprep.subr.mxu0 0.0
    %2690 = vmatpush1.xpose.msra.mxu0 0.0
    %2691 = vmatprep.subr.mxu0 0.0
    %2692 = vmatpush1.xpose.msra.mxu0 0.0
    %2693 = vmatprep.mubr.f32.mxu0 0.0
    %2694 = vmatmul.mubr.f32.gmra.mrb[0].mxu0 %v2624
    %v2695 = vpop.f32.mrb[0].mxu0
    %v2696 = vadd.f32 0.0, %v2695
    %v2697 = vpop.f32.mrb[0].mxu0
    %2698 = vdwg.mxu0
    %v2699 = vmul.f32 %v2620, 0.17677669
    %v2700 = vmul.f32 %v2696, 0.17677669
    %v2701 = vsel %vm697, %v2699, -inf
    %2702 = vmax.xlane.f32.xlu0 %v2701
    %v2703 = vpop.xlane.xlu0 %2702
    %v2704 = vsel %vm697, %v2700, -inf
    %2705 = vmax.xlane.f32.xlu0 %v2704
    %v2706 = vpop.xlane.xlu0 %2705
    %v2707 = vsub.f32 %v2699, %v2703
    %v2708 = vsub.f32 %v2700, %v2706
    %v2709 = vmul.f32 %v2707, 1.442695
    %v2710 = vpow.pop %v2709
    %v2711 = vmul.f32 %v2708, 1.442695
    %v2712 = vpow.pop %v2711
    %v2713 = vsel %vm697, %v2710, 0.0
    %2714 = vadd.xlane.f32.xlu0 %v2713
    %v2715 = vpop.xlane.xlu0 %2714
    %v2716 = vsel %vm697, %v2712, 0.0
    %2717 = vadd.xlane.f32.xlu0 %v2716
    %v2718 = vpop.xlane.xlu0 %2717
    %v2719 = vrcp.pop %v2715
    %v2720 = vrcp.pop %v2718
    %v2721 = vmul.f32 %v2710, %v2719
    %v2722 = vmul.f32 %v2712, %v2720
    %v2724 = vsel %vm697, %v2721, 0
    %2726 = vmatprep.subr.mxu0 0.0
    %2727 = vmatpush1.msra.mxu0 %v2539
    %2728 = vmatprep.subr.mxu0 0.0
    %2729 = vmatpush1.msra.mxu0 0.0
    %2730 = vmatprep.subr.mxu0 0.0
    %2731 = vmatpush1.msra.mxu0 0.0
    %2732 = vmatprep.subr.mxu0 0.0
    %2733 = vmatpush1.msra.mxu0 0.0
    %2734 = vmatprep.subr.mxu0 0.0
    %2735 = vmatpush1.msra.mxu0 0.0
    %2736 = vmatprep.subr.mxu0 0.0
    %2737 = vmatpush1.msra.mxu0 0.0
    %2738 = vmatprep.subr.mxu0 0.0
    %2739 = vmatpush1.msra.mxu0 0.0
    %2740 = vmatprep.subr.mxu0 0.0
    %2741 = vmatpush1.msra.mxu0 0.0
    %2742 = vmatprep.subr.mxu0 0.0
    %2743 = vmatpush1.msra.mxu0 0.0
    %2744 = vmatprep.subr.mxu0 0.0
    %2745 = vmatpush1.msra.mxu0 0.0
    %2746 = vmatprep.subr.mxu0 0.0
    %2747 = vmatpush1.msra.mxu0 0.0
    %2748 = vmatprep.subr.mxu0 0.0
    %2749 = vmatpush1.msra.mxu0 0.0
    %2750 = vmatprep.subr.mxu0 0.0
    %2751 = vmatpush1.msra.mxu0 0.0
    %2752 = vmatprep.subr.mxu0 0.0
    %2753 = vmatpush1.msra.mxu0 0.0
    %2754 = vmatprep.subr.mxu0 0.0
    %2755 = vmatpush1.msra.mxu0 0.0
    %2756 = vmatprep.subr.mxu0 0.0
    %2757 = vmatpush1.msra.mxu0 0.0
    %2758 = vmatprep.subr.mxu0 0.0
    %2759 = vmatpush1.msra.mxu0 0.0
    %2760 = vmatprep.subr.mxu0 0.0
    %2761 = vmatpush1.msra.mxu0 0.0
    %2762 = vmatprep.subr.mxu0 0.0
    %2763 = vmatpush1.msra.mxu0 0.0
    %2764 = vmatprep.subr.mxu0 0.0
    %2765 = vmatpush1.msra.mxu0 0.0
    %2766 = vmatprep.subr.mxu0 0.0
    %2767 = vmatpush1.msra.mxu0 0.0
    %2768 = vmatprep.subr.mxu0 0.0
    %2769 = vmatpush1.msra.mxu0 0.0
    %2770 = vmatprep.subr.mxu0 0.0
    %2771 = vmatpush1.msra.mxu0 0.0
    %2772 = vmatprep.subr.mxu0 0.0
    %2773 = vmatpush1.msra.mxu0 0.0
    %2774 = vmatprep.subr.mxu0 0.0
    %2775 = vmatpush1.msra.mxu0 0.0
    %2776 = vmatprep.subr.mxu0 0.0
    %2777 = vmatpush1.msra.mxu0 0.0
    %2778 = vmatprep.subr.mxu0 0.0
    %2779 = vmatpush1.msra.mxu0 0.0
    %2780 = vmatprep.subr.mxu0 0.0
    %2781 = vmatpush1.msra.mxu0 0.0
    %2782 = vmatprep.subr.mxu0 0.0
    %2783 = vmatpush1.msra.mxu0 0.0
    %2784 = vmatprep.subr.mxu0 0.0
    %2785 = vmatpush1.msra.mxu0 0.0
    %2786 = vmatprep.subr.mxu0 0.0
    %2787 = vmatpush1.msra.mxu0 0.0
    %2788 = vmatprep.subr.mxu0 0.0
    %2789 = vmatpush1.msra.mxu0 0.0
    %2790 = vmatprep.mubr.f32.mxu0 0.0
    %2791 = vmatmul.mubr.f32.gmra.mrb[0].mxu0 %v2724
    %v2792 = vpop.f32.mrb[0].mxu0
    %v2793 = vadd.f32 0.0, %v2792
    %v2794 = vpop.f32.mrb[0].mxu0
    %2795 = vdwg.mxu0
    %v2797 = vsel %vm697, %v2722, 0
    %2799 = vmatprep.subr.mxu0 0.0
    %2800 = vmatpush1.msra.mxu0 %v2544
    %2801 = vmatprep.subr.mxu0 0.0
    %2802 = vmatpush1.msra.mxu0 0.0
    %2803 = vmatprep.subr.mxu0 0.0
    %2804 = vmatpush1.msra.mxu0 0.0
    %2805 = vmatprep.subr.mxu0 0.0
    %2806 = vmatpush1.msra.mxu0 0.0
    %2807 = vmatprep.subr.mxu0 0.0
    %2808 = vmatpush1.msra.mxu0 0.0
    %2809 = vmatprep.subr.mxu0 0.0
    %2810 = vmatpush1.msra.mxu0 0.0
    %2811 = vmatprep.subr.mxu0 0.0
    %2812 = vmatpush1.msra.mxu0 0.0
    %2813 = vmatprep.subr.mxu0 0.0
    %2814 = vmatpush1.msra.mxu0 0.0
    %2815 = vmatprep.subr.mxu0 0.0
    %2816 = vmatpush1.msra.mxu0 0.0
    %2817 = vmatprep.subr.mxu0 0.0
    %2818 = vmatpush1.msra.mxu0 0.0
    %2819 = vmatprep.subr.mxu0 0.0
    %2820 = vmatpush1.msra.mxu0 0.0
    %2821 = vmatprep.subr.mxu0 0.0
    %2822 = vmatpush1.msra.mxu0 0.0
    %2823 = vmatprep.subr.mxu0 0.0
    %2824 = vmatpush1.msra.mxu0 0.0
    %2825 = vmatprep.subr.mxu0 0.0
    %2826 = vmatpush1.msra.mxu0 0.0
    %2827 = vmatprep.subr.mxu0 0.0
    %2828 = vmatpush1.msra.mxu0 0.0
    %2829 = vmatprep.subr.mxu0 0.0
    %2830 = vmatpush1.msra.mxu0 0.0
    %2831 = vmatprep.subr.mxu0 0.0
    %2832 = vmatpush1.msra.mxu0 0.0
    %2833 = vmatprep.subr.mxu0 0.0
    %2834 = vmatpush1.msra.mxu0 0.0
    %2835 = vmatprep.subr.mxu0 0.0
    %2836 = vmatpush1.msra.mxu0 0.0
    %2837 = vmatprep.subr.mxu0 0.0
    %2838 = vmatpush1.msra.mxu0 0.0
    %2839 = vmatprep.subr.mxu0 0.0
    %2840 = vmatpush1.msra.mxu0 0.0
    %2841 = vmatprep.subr.mxu0 0.0
    %2842 = vmatpush1.msra.mxu0 0.0
    %2843 = vmatprep.subr.mxu0 0.0
    %2844 = vmatpush1.msra.mxu0 0.0
    %2845 = vmatprep.subr.mxu0 0.0
    %2846 = vmatpush1.msra.mxu0 0.0
    %2847 = vmatprep.subr.mxu0 0.0
    %2848 = vmatpush1.msra.mxu0 0.0
    %2849 = vmatprep.subr.mxu0 0.0
    %2850 = vmatpush1.msra.mxu0 0.0
    %2851 = vmatprep.subr.mxu0 0.0
    %2852 = vmatpush1.msra.mxu0 0.0
    %2853 = vmatprep.subr.mxu0 0.0
    %2854 = vmatpush1.msra.mxu0 0.0
    %2855 = vmatprep.subr.mxu0 0.0
    %2856 = vmatpush1.msra.mxu0 0.0
    %2857 = vmatprep.subr.mxu0 0.0
    %2858 = vmatpush1.msra.mxu0 0.0
    %2859 = vmatprep.subr.mxu0 0.0
    %2860 = vmatpush1.msra.mxu0 0.0
    %2861 = vmatprep.subr.mxu0 0.0
    %2862 = vmatpush1.msra.mxu0 0.0
    %2863 = vmatprep.mubr.f32.mxu0 0.0
    %2864 = vmatmul.mubr.f32.gmra.mrb[0].mxu0 %v2797
    %v2865 = vpop.f32.mrb[0].mxu0
    %v2866 = vadd.f32 0.0, %v2865
    %v2867 = vpop.f32.mrb[0].mxu0
    %2868 = vdwg.mxu0
    %2869 = vrot.lane.b32.xlu0 %v2462, 96
    %v2870 = vpop.permute.xlu0 %2869
    %2871 = vrot.lane.b32.xlu0 %v2464, 96
    %v2872 = vpop.permute.xlu0 %2871
    %v2873 = vsel %vm542, %v2870, 0
    %v2875 = vsel %vm542, %v2872, 0
    %2877 = vmatprep.subr.mxu0 0.0
    %2878 = vmatpush1.xpose.msra.mxu0 %v2875
    %2879 = vmatprep.subr.mxu0 0.0
    %2880 = vmatpush1.xpose.msra.mxu0 0.0
    %2881 = vmatprep.subr.mxu0 0.0
    %2882 = vmatpush1.xpose.msra.mxu0 0.0
    %2883 = vmatprep.subr.mxu0 0.0
    %2884 = vmatpush1.xpose.msra.mxu0 0.0
    %2885 = vmatprep.subr.mxu0 0.0
    %2886 = vmatpush1.xpose.msra.mxu0 0.0
    %2887 = vmatprep.subr.mxu0 0.0
    %2888 = vmatpush1.xpose.msra.mxu0 0.0
    %2889 = vmatprep.subr.mxu0 0.0
    %2890 = vmatpush1.xpose.msra.mxu0 0.0
    %2891 = vmatprep.subr.mxu0 0.0
    %2892 = vmatpush1.xpose.msra.mxu0 0.0
    %2893 = vmatprep.subr.mxu0 0.0
    %2894 = vmatpush1.xpose.msra.mxu0 0.0
    %2895 = vmatprep.subr.mxu0 0.0
    %2896 = vmatpush1.xpose.msra.mxu0 0.0
    %2897 = vmatprep.subr.mxu0 0.0
    %2898 = vmatpush1.xpose.msra.mxu0 0.0
    %2899 = vmatprep.subr.mxu0 0.0
    %2900 = vmatpush1.xpose.msra.mxu0 0.0
    %2901 = vmatprep.subr.mxu0 0.0
    %2902 = vmatpush1.xpose.msra.mxu0 0.0
    %2903 = vmatprep.subr.mxu0 0.0
    %2904 = vmatpush1.xpose.msra.mxu0 0.0
    %2905 = vmatprep.subr.mxu0 0.0
    %2906 = vmatpush1.xpose.msra.mxu0 0.0
    %2907 = vmatprep.subr.mxu0 0.0
    %2908 = vmatpush1.xpose.msra.mxu0 0.0
    %2909 = vmatprep.subr.mxu0 0.0
    %2910 = vmatpush1.xpose.msra.mxu0 0.0
    %2911 = vmatprep.subr.mxu0 0.0
    %2912 = vmatpush1.xpose.msra.mxu0 0.0
    %2913 = vmatprep.subr.mxu0 0.0
    %2914 = vmatpush1.xpose.msra.mxu0 0.0
    %2915 = vmatprep.subr.mxu0 0.0
    %2916 = vmatpush1.xpose.msra.mxu0 0.0
    %2917 = vmatprep.subr.mxu0 0.0
    %2918 = vmatpush1.xpose.msra.mxu0 0.0
    %2919 = vmatprep.subr.mxu0 0.0
    %2920 = vmatpush1.xpose.msra.mxu0 0.0
    %2921 = vmatprep.subr.mxu0 0.0
    %2922 = vmatpush1.xpose.msra.mxu0 0.0
    %2923 = vmatprep.subr.mxu0 0.0
    %2924 = vmatpush1.xpose.msra.mxu0 0.0
    %2925 = vmatprep.subr.mxu0 0.0
    %2926 = vmatpush1.xpose.msra.mxu0 0.0
    %2927 = vmatprep.subr.mxu0 0.0
    %2928 = vmatpush1.xpose.msra.mxu0 0.0
    %2929 = vmatprep.subr.mxu0 0.0
    %2930 = vmatpush1.xpose.msra.mxu0 0.0
    %2931 = vmatprep.subr.mxu0 0.0
    %2932 = vmatpush1.xpose.msra.mxu0 0.0
    %2933 = vmatprep.subr.mxu0 0.0
    %2934 = vmatpush1.xpose.msra.mxu0 0.0
    %2935 = vmatprep.subr.mxu0 0.0
    %2936 = vmatpush1.xpose.msra.mxu0 0.0
    %2937 = vmatprep.subr.mxu0 0.0
    %2938 = vmatpush1.xpose.msra.mxu0 0.0
    %2939 = vmatprep.subr.mxu0 0.0
    %2940 = vmatpush1.xpose.msra.mxu0 0.0
    %2941 = vmatprep.mubr.f32.mxu0 0.0
    %2942 = vmatmul.mubr.f32.gmra.mrb[0].mxu0 %v2873
    %v2943 = vpop.f32.mrb[0].mxu0
    %v2944 = vadd.f32 0.0, %v2943
    %v2945 = vpop.f32.mrb[0].mxu0
    %2946 = vdwg.mxu0
    %2947 = vrot.lane.b32.xlu0 %v2468, 96
    %v2948 = vpop.permute.xlu0 %2947
    %2949 = vrot.lane.b32.xlu0 %v2470, 96
    %v2950 = vpop.permute.xlu0 %2949
    %v2951 = vsel %vm542, %v2948, 0
    %v2953 = vsel %vm542, %v2950, 0
    %2955 = vmatprep.subr.mxu0 0.0
    %2956 = vmatpush1.xpose.msra.mxu0 %v2953
    %2957 = vmatprep.subr.mxu0 0.0
    %2958 = vmatpush1.xpose.msra.mxu0 0.0
    %2959 = vmatprep.subr.mxu0 0.0
    %2960 = vmatpush1.xpose.msra.mxu0 0.0
    %2961 = vmatprep.subr.mxu0 0.0
    %2962 = vmatpush1.xpose.msra.mxu0 0.0
    %2963 = vmatprep.subr.mxu0 0.0
    %2964 = vmatpush1.xpose.msra.mxu0 0.0
    %2965 = vmatprep.subr.mxu0 0.0
    %2966 = vmatpush1.xpose.msra.mxu0 0.0
    %2967 = vmatprep.subr.mxu0 0.0
    %2968 = vmatpush1.xpose.msra.mxu0 0.0
    %2969 = vmatprep.subr.mxu0 0.0
    %2970 = vmatpush1.xpose.msra.mxu0 0.0
    %2971 = vmatprep.subr.mxu0 0.0
    %2972 = vmatpush1.xpose.msra.mxu0 0.0
    %2973 = vmatprep.subr.mxu0 0.0
    %2974 = vmatpush1.xpose.msra.mxu0 0.0
    %2975 = vmatprep.subr.mxu0 0.0
    %2976 = vmatpush1.xpose.msra.mxu0 0.0
    %2977 = vmatprep.subr.mxu0 0.0
    %2978 = vmatpush1.xpose.msra.mxu0 0.0
    %2979 = vmatprep.subr.mxu0 0.0
    %2980 = vmatpush1.xpose.msra.mxu0 0.0
    %2981 = vmatprep.subr.mxu0 0.0
    %2982 = vmatpush1.xpose.msra.mxu0 0.0
    %2983 = vmatprep.subr.mxu0 0.0
    %2984 = vmatpush1.xpose.msra.mxu0 0.0
    %2985 = vmatprep.subr.mxu0 0.0
    %2986 = vmatpush1.xpose.msra.mxu0 0.0
    %2987 = vmatprep.subr.mxu0 0.0
    %2988 = vmatpush1.xpose.msra.mxu0 0.0
    %2989 = vmatprep.subr.mxu0 0.0
    %2990 = vmatpush1.xpose.msra.mxu0 0.0
    %2991 = vmatprep.subr.mxu0 0.0
    %2992 = vmatpush1.xpose.msra.mxu0 0.0
    %2993 = vmatprep.subr.mxu0 0.0
    %2994 = vmatpush1.xpose.msra.mxu0 0.0
    %2995 = vmatprep.subr.mxu0 0.0
    %2996 = vmatpush1.xpose.msra.mxu0 0.0
    %2997 = vmatprep.subr.mxu0 0.0
    %2998 = vmatpush1.xpose.msra.mxu0 0.0
    %2999 = vmatprep.subr.mxu0 0.0
    %3000 = vmatpush1.xpose.msra.mxu0 0.0
    %3001 = vmatprep.subr.mxu0 0.0
    %3002 = vmatpush1.xpose.msra.mxu0 0.0
    %3003 = vmatprep.subr.mxu0 0.0
    %3004 = vmatpush1.xpose.msra.mxu0 0.0
    %3005 = vmatprep.subr.mxu0 0.0
    %3006 = vmatpush1.xpose.msra.mxu0 0.0
    %3007 = vmatprep.subr.mxu0 0.0
    %3008 = vmatpush1.xpose.msra.mxu0 0.0
    %3009 = vmatprep.subr.mxu0 0.0
    %3010 = vmatpush1.xpose.msra.mxu0 0.0
    %3011 = vmatprep.subr.mxu0 0.0
    %3012 = vmatpush1.xpose.msra.mxu0 0.0
    %3013 = vmatprep.subr.mxu0 0.0
    %3014 = vmatpush1.xpose.msra.mxu0 0.0
    %3015 = vmatprep.subr.mxu0 0.0
    %3016 = vmatpush1.xpose.msra.mxu0 0.0
    %3017 = vmatprep.subr.mxu0 0.0
    %3018 = vmatpush1.xpose.msra.mxu0 0.0
    %3019 = vmatprep.mubr.f32.mxu0 0.0
    %3020 = vmatmul.mubr.f32.gmra.mrb[0].mxu0 %v2951
    %v3021 = vpop.f32.mrb[0].mxu0
    %v3022 = vadd.f32 0.0, %v3021
    %v3023 = vpop.f32.mrb[0].mxu0
    %3024 = vdwg.mxu0
    %v3025 = vmul.f32 %v2944, 0.17677669
    %v3026 = vmul.f32 %v3022, 0.17677669
    %v3027 = vsel %vm697, %v3025, -inf
    %3028 = vmax.xlane.f32.xlu0 %v3027
    %v3029 = vpop.xlane.xlu0 %3028
    %v3030 = vsel %vm697, %v3026, -inf
    %3031 = vmax.xlane.f32.xlu0 %v3030
    %v3032 = vpop.xlane.xlu0 %3031
    %v3033 = vsub.f32 %v3025, %v3029
    %v3034 = vsub.f32 %v3026, %v3032
    %v3035 = vmul.f32 %v3033, 1.442695
    %v3036 = vpow.pop %v3035
    %v3037 = vmul.f32 %v3034, 1.442695
    %v3038 = vpow.pop %v3037
    %v3039 = vsel %vm697, %v3036, 0.0
    %3040 = vadd.xlane.f32.xlu0 %v3039
    %v3041 = vpop.xlane.xlu0 %3040
    %v3042 = vsel %vm697, %v3038, 0.0
    %3043 = vadd.xlane.f32.xlu0 %v3042
    %v3044 = vpop.xlane.xlu0 %3043
    %v3045 = vrcp.pop %v3041
    %v3046 = vrcp.pop %v3044
    %v3047 = vmul.f32 %v3036, %v3045
    %v3048 = vmul.f32 %v3038, %v3046
    %3050 = vrot.lane.b32.xlu0 %v2539, 96
    %v3051 = vpop.permute.xlu0 %3050
    %v3054 = vsel %vm697, %v3047, 0
    %3056 = vmatprep.subr.mxu0 0.0
    %3057 = vmatpush1.msra.mxu0 %v3051
    %3058 = vmatprep.subr.mxu0 0.0
    %3059 = vmatpush1.msra.mxu0 0.0
    %3060 = vmatprep.subr.mxu0 0.0
    %3061 = vmatpush1.msra.mxu0 0.0
    %3062 = vmatprep.subr.mxu0 0.0
    %3063 = vmatpush1.msra.mxu0 0.0
    %3064 = vmatprep.subr.mxu0 0.0
    %3065 = vmatpush1.msra.mxu0 0.0
    %3066 = vmatprep.subr.mxu0 0.0
    %3067 = vmatpush1.msra.mxu0 0.0
    %3068 = vmatprep.subr.mxu0 0.0
    %3069 = vmatpush1.msra.mxu0 0.0
    %3070 = vmatprep.subr.mxu0 0.0
    %3071 = vmatpush1.msra.mxu0 0.0
    %3072 = vmatprep.subr.mxu0 0.0
    %3073 = vmatpush1.msra.mxu0 0.0
    %3074 = vmatprep.subr.mxu0 0.0
    %3075 = vmatpush1.msra.mxu0 0.0
    %3076 = vmatprep.subr.mxu0 0.0
    %3077 = vmatpush1.msra.mxu0 0.0
    %3078 = vmatprep.subr.mxu0 0.0
    %3079 = vmatpush1.msra.mxu0 0.0
    %3080 = vmatprep.subr.mxu0 0.0
    %3081 = vmatpush1.msra.mxu0 0.0
    %3082 = vmatprep.subr.mxu0 0.0
    %3083 = vmatpush1.msra.mxu0 0.0
    %3084 = vmatprep.subr.mxu0 0.0
    %3085 = vmatpush1.msra.mxu0 0.0
    %3086 = vmatprep.subr.mxu0 0.0
    %3087 = vmatpush1.msra.mxu0 0.0
    %3088 = vmatprep.subr.mxu0 0.0
    %3089 = vmatpush1.msra.mxu0 0.0
    %3090 = vmatprep.subr.mxu0 0.0
    %3091 = vmatpush1.msra.mxu0 0.0
    %3092 = vmatprep.subr.mxu0 0.0
    %3093 = vmatpush1.msra.mxu0 0.0
    %3094 = vmatprep.subr.mxu0 0.0
    %3095 = vmatpush1.msra.mxu0 0.0
    %3096 = vmatprep.subr.mxu0 0.0
    %3097 = vmatpush1.msra.mxu0 0.0
    %3098 = vmatprep.subr.mxu0 0.0
    %3099 = vmatpush1.msra.mxu0 0.0
    %3100 = vmatprep.subr.mxu0 0.0
    %3101 = vmatpush1.msra.mxu0 0.0
    %3102 = vmatprep.subr.mxu0 0.0
    %3103 = vmatpush1.msra.mxu0 0.0
    %3104 = vmatprep.subr.mxu0 0.0
    %3105 = vmatpush1.msra.mxu0 0.0
    %3106 = vmatprep.subr.mxu0 0.0
    %3107 = vmatpush1.msra.mxu0 0.0
    %3108 = vmatprep.subr.mxu0 0.0
    %3109 = vmatpush1.msra.mxu0 0.0
    %3110 = vmatprep.subr.mxu0 0.0
    %3111 = vmatpush1.msra.mxu0 0.0
    %3112 = vmatprep.subr.mxu0 0.0
    %3113 = vmatpush1.msra.mxu0 0.0
    %3114 = vmatprep.subr.mxu0 0.0
    %3115 = vmatpush1.msra.mxu0 0.0
    %3116 = vmatprep.subr.mxu0 0.0
    %3117 = vmatpush1.msra.mxu0 0.0
    %3118 = vmatprep.subr.mxu0 0.0
    %3119 = vmatpush1.msra.mxu0 0.0
    %3120 = vmatprep.mubr.f32.mxu0 0.0
    %3121 = vmatmul.mubr.f32.gmra.mrb[0].mxu0 %v3054
    %v3122 = vpop.f32.mrb[0].mxu0
    %v3123 = vadd.f32 0.0, %v3122
    %v3124 = vpop.f32.mrb[0].mxu0
    %3125 = vdwg.mxu0
    %3127 = vrot.lane.b32.xlu0 %v2544, 96
    %v3128 = vpop.permute.xlu0 %3127
    %v3131 = vsel %vm697, %v3048, 0
    %3133 = vmatprep.subr.mxu0 0.0
    %3134 = vmatpush1.msra.mxu0 %v3128
    %3135 = vmatprep.subr.mxu0 0.0
    %3136 = vmatpush1.msra.mxu0 0.0
    %3137 = vmatprep.subr.mxu0 0.0
    %3138 = vmatpush1.msra.mxu0 0.0
    %3139 = vmatprep.subr.mxu0 0.0
    %3140 = vmatpush1.msra.mxu0 0.0
    %3141 = vmatprep.subr.mxu0 0.0
    %3142 = vmatpush1.msra.mxu0 0.0
    %3143 = vmatprep.subr.mxu0 0.0
    %3144 = vmatpush1.msra.mxu0 0.0
    %3145 = vmatprep.subr.mxu0 0.0
    %3146 = vmatpush1.msra.mxu0 0.0
    %3147 = vmatprep.subr.mxu0 0.0
    %3148 = vmatpush1.msra.mxu0 0.0
    %3149 = vmatprep.subr.mxu0 0.0
    %3150 = vmatpush1.msra.mxu0 0.0
    %3151 = vmatprep.subr.mxu0 0.0
    %3152 = vmatpush1.msra.mxu0 0.0
    %3153 = vmatprep.subr.mxu0 0.0
    %3154 = vmatpush1.msra.mxu0 0.0
    %3155 = vmatprep.subr.mxu0 0.0
    %3156 = vmatpush1.msra.mxu0 0.0
    %3157 = vmatprep.subr.mxu0 0.0
    %3158 = vmatpush1.msra.mxu0 0.0
    %3159 = vmatprep.subr.mxu0 0.0
    %3160 = vmatpush1.msra.mxu0 0.0
    %3161 = vmatprep.subr.mxu0 0.0
    %3162 = vmatpush1.msra.mxu0 0.0
    %3163 = vmatprep.subr.mxu0 0.0
    %3164 = vmatpush1.msra.mxu0 0.0
    %3165 = vmatprep.subr.mxu0 0.0
    %3166 = vmatpush1.msra.mxu0 0.0
    %3167 = vmatprep.subr.mxu0 0.0
    %3168 = vmatpush1.msra.mxu0 0.0
    %3169 = vmatprep.subr.mxu0 0.0
    %3170 = vmatpush1.msra.mxu0 0.0
    %3171 = vmatprep.subr.mxu0 0.0
    %3172 = vmatpush1.msra.mxu0 0.0
    %3173 = vmatprep.subr.mxu0 0.0
    %3174 = vmatpush1.msra.mxu0 0.0
    %3175 = vmatprep.subr.mxu0 0.0
    %3176 = vmatpush1.msra.mxu0 0.0
    %3177 = vmatprep.subr.mxu0 0.0
    %3178 = vmatpush1.msra.mxu0 0.0
    %3179 = vmatprep.subr.mxu0 0.0
    %3180 = vmatpush1.msra.mxu0 0.0
    %3181 = vmatprep.subr.mxu0 0.0
    %3182 = vmatpush1.msra.mxu0 0.0
    %3183 = vmatprep.subr.mxu0 0.0
    %3184 = vmatpush1.msra.mxu0 0.0
    %3185 = vmatprep.subr.mxu0 0.0
    %3186 = vmatpush1.msra.mxu0 0.0
    %3187 = vmatprep.subr.mxu0 0.0
    %3188 = vmatpush1.msra.mxu0 0.0
    %3189 = vmatprep.subr.mxu0 0.0
    %3190 = vmatpush1.msra.mxu0 0.0
    %3191 = vmatprep.subr.mxu0 0.0
    %3192 = vmatpush1.msra.mxu0 0.0
    %3193 = vmatprep.subr.mxu0 0.0
    %3194 = vmatpush1.msra.mxu0 0.0
    %3195 = vmatprep.subr.mxu0 0.0
    %3196 = vmatpush1.msra.mxu0 0.0
    %3197 = vmatprep.mubr.f32.mxu0 0.0
    %3198 = vmatmul.mubr.f32.gmra.mrb[0].mxu0 %v3131
    %v3199 = vpop.f32.mrb[0].mxu0
    %v3200 = vadd.f32 0.0, %v3199
    %v3201 = vpop.f32.mrb[0].mxu0
    %3202 = vdwg.mxu0
    %3203 = vrot.lane.b32.xlu0 %v2462, 64
    %v3204 = vpop.permute.xlu0 %3203
    %3205 = vrot.lane.b32.xlu0 %v2464, 64
    %v3206 = vpop.permute.xlu0 %3205
    %v3207 = vsel %vm542, %v3204, 0
    %v3209 = vsel %vm542, %v3206, 0
    %3211 = vmatprep.subr.mxu0 0.0
    %3212 = vmatpush1.xpose.msra.mxu0 %v3209
    %3213 = vmatprep.subr.mxu0 0.0
    %3214 = vmatpush1.xpose.msra.mxu0 0.0
    %3215 = vmatprep.subr.mxu0 0.0
    %3216 = vmatpush1.xpose.msra.mxu0 0.0
    %3217 = vmatprep.subr.mxu0 0.0
    %3218 = vmatpush1.xpose.msra.mxu0 0.0
    %3219 = vmatprep.subr.mxu0 0.0
    %3220 = vmatpush1.xpose.msra.mxu0 0.0
    %3221 = vmatprep.subr.mxu0 0.0
    %3222 = vmatpush1.xpose.msra.mxu0 0.0
    %3223 = vmatprep.subr.mxu0 0.0
    %3224 = vmatpush1.xpose.msra.mxu0 0.0
    %3225 = vmatprep.subr.mxu0 0.0
    %3226 = vmatpush1.xpose.msra.mxu0 0.0
    %3227 = vmatprep.subr.mxu0 0.0
    %3228 = vmatpush1.xpose.msra.mxu0 0.0
    %3229 = vmatprep.subr.mxu0 0.0
    %3230 = vmatpush1.xpose.msra.mxu0 0.0
    %3231 = vmatprep.subr.mxu0 0.0
    %3232 = vmatpush1.xpose.msra.mxu0 0.0
    %3233 = vmatprep.subr.mxu0 0.0
    %3234 = vmatpush1.xpose.msra.mxu0 0.0
    %3235 = vmatprep.subr.mxu0 0.0
    %3236 = vmatpush1.xpose.msra.mxu0 0.0
    %3237 = vmatprep.subr.mxu0 0.0
    %3238 = vmatpush1.xpose.msra.mxu0 0.0
    %3239 = vmatprep.subr.mxu0 0.0
    %3240 = vmatpush1.xpose.msra.mxu0 0.0
    %3241 = vmatprep.subr.mxu0 0.0
    %3242 = vmatpush1.xpose.msra.mxu0 0.0
    %3243 = vmatprep.subr.mxu0 0.0
    %3244 = vmatpush1.xpose.msra.mxu0 0.0
    %3245 = vmatprep.subr.mxu0 0.0
    %3246 = vmatpush1.xpose.msra.mxu0 0.0
    %3247 = vmatprep.subr.mxu0 0.0
    %3248 = vmatpush1.xpose.msra.mxu0 0.0
    %3249 = vmatprep.subr.mxu0 0.0
    %3250 = vmatpush1.xpose.msra.mxu0 0.0
    %3251 = vmatprep.subr.mxu0 0.0
    %3252 = vmatpush1.xpose.msra.mxu0 0.0
    %3253 = vmatprep.subr.mxu0 0.0
    %3254 = vmatpush1.xpose.msra.mxu0 0.0
    %3255 = vmatprep.subr.mxu0 0.0
    %3256 = vmatpush1.xpose.msra.mxu0 0.0
    %3257 = vmatprep.subr.mxu0 0.0
    %3258 = vmatpush1.xpose.msra.mxu0 0.0
    %3259 = vmatprep.subr.mxu0 0.0
    %3260 = vmatpush1.xpose.msra.mxu0 0.0
    %3261 = vmatprep.subr.mxu0 0.0
    %3262 = vmatpush1.xpose.msra.mxu0 0.0
    %3263 = vmatprep.subr.mxu0 0.0
    %3264 = vmatpush1.xpose.msra.mxu0 0.0
    %3265 = vmatprep.subr.mxu0 0.0
    %3266 = vmatpush1.xpose.msra.mxu0 0.0
    %3267 = vmatprep.subr.mxu0 0.0
    %3268 = vmatpush1.xpose.msra.mxu0 0.0
    %3269 = vmatprep.subr.mxu0 0.0
    %3270 = vmatpush1.xpose.msra.mxu0 0.0
    %3271 = vmatprep.subr.mxu0 0.0
    %3272 = vmatpush1.xpose.msra.mxu0 0.0
    %3273 = vmatprep.subr.mxu0 0.0
    %3274 = vmatpush1.xpose.msra.mxu0 0.0
    %3275 = vmatprep.mubr.f32.mxu0 0.0
    %3276 = vmatmul.mubr.f32.gmra.mrb[0].mxu0 %v3207
    %v3277 = vpop.f32.mrb[0].mxu0
    %v3278 = vadd.f32 0.0, %v3277
    %v3279 = vpop.f32.mrb[0].mxu0
    %3280 = vdwg.mxu0
    %3281 = vrot.lane.b32.xlu0 %v2468, 64
    %v3282 = vpop.permute.xlu0 %3281
    %3283 = vrot.lane.b32.xlu0 %v2470, 64
    %v3284 = vpop.permute.xlu0 %3283
    %v3285 = vsel %vm542, %v3282, 0
    %v3287 = vsel %vm542, %v3284, 0
    %3289 = vmatprep.subr.mxu0 0.0
    %3290 = vmatpush1.xpose.msra.mxu0 %v3287
    %3291 = vmatprep.subr.mxu0 0.0
    %3292 = vmatpush1.xpose.msra.mxu0 0.0
    %3293 = vmatprep.subr.mxu0 0.0
    %3294 = vmatpush1.xpose.msra.mxu0 0.0
    %3295 = vmatprep.subr.mxu0 0.0
    %3296 = vmatpush1.xpose.msra.mxu0 0.0
    %3297 = vmatprep.subr.mxu0 0.0
    %3298 = vmatpush1.xpose.msra.mxu0 0.0
    %3299 = vmatprep.subr.mxu0 0.0
    %3300 = vmatpush1.xpose.msra.mxu0 0.0
    %3301 = vmatprep.subr.mxu0 0.0
    %3302 = vmatpush1.xpose.msra.mxu0 0.0
    %3303 = vmatprep.subr.mxu0 0.0
    %3304 = vmatpush1.xpose.msra.mxu0 0.0
    %3305 = vmatprep.subr.mxu0 0.0
    %3306 = vmatpush1.xpose.msra.mxu0 0.0
    %3307 = vmatprep.subr.mxu0 0.0
    %3308 = vmatpush1.xpose.msra.mxu0 0.0
    %3309 = vmatprep.subr.mxu0 0.0
    %3310 = vmatpush1.xpose.msra.mxu0 0.0
    %3311 = vmatprep.subr.mxu0 0.0
    %3312 = vmatpush1.xpose.msra.mxu0 0.0
    %3313 = vmatprep.subr.mxu0 0.0
    %3314 = vmatpush1.xpose.msra.mxu0 0.0
    %3315 = vmatprep.subr.mxu0 0.0
    %3316 = vmatpush1.xpose.msra.mxu0 0.0
    %3317 = vmatprep.subr.mxu0 0.0
    %3318 = vmatpush1.xpose.msra.mxu0 0.0
    %3319 = vmatprep.subr.mxu0 0.0
    %3320 = vmatpush1.xpose.msra.mxu0 0.0
    %3321 = vmatprep.subr.mxu0 0.0
    %3322 = vmatpush1.xpose.msra.mxu0 0.0
    %3323 = vmatprep.subr.mxu0 0.0
    %3324 = vmatpush1.xpose.msra.mxu0 0.0
    %3325 = vmatprep.subr.mxu0 0.0
    %3326 = vmatpush1.xpose.msra.mxu0 0.0
    %3327 = vmatprep.subr.mxu0 0.0
    %3328 = vmatpush1.xpose.msra.mxu0 0.0
    %3329 = vmatprep.subr.mxu0 0.0
    %3330 = vmatpush1.xpose.msra.mxu0 0.0
    %3331 = vmatprep.subr.mxu0 0.0
    %3332 = vmatpush1.xpose.msra.mxu0 0.0
    %3333 = vmatprep.subr.mxu0 0.0
    %3334 = vmatpush1.xpose.msra.mxu0 0.0
    %3335 = vmatprep.subr.mxu0 0.0
    %3336 = vmatpush1.xpose.msra.mxu0 0.0
    %3337 = vmatprep.subr.mxu0 0.0
    %3338 = vmatpush1.xpose.msra.mxu0 0.0
    %3339 = vmatprep.subr.mxu0 0.0
    %3340 = vmatpush1.xpose.msra.mxu0 0.0
    %3341 = vmatprep.subr.mxu0 0.0
    %3342 = vmatpush1.xpose.msra.mxu0 0.0
    %3343 = vmatprep.subr.mxu0 0.0
    %3344 = vmatpush1.xpose.msra.mxu0 0.0
    %3345 = vmatprep.subr.mxu0 0.0
    %3346 = vmatpush1.xpose.msra.mxu0 0.0
    %3347 = vmatprep.subr.mxu0 0.0
    %3348 = vmatpush1.xpose.msra.mxu0 0.0
    %3349 = vmatprep.subr.mxu0 0.0
    %3350 = vmatpush1.xpose.msra.mxu0 0.0
    %3351 = vmatprep.subr.mxu0 0.0
    %3352 = vmatpush1.xpose.msra.mxu0 0.0
    %3353 = vmatprep.mubr.f32.mxu0 0.0
    %3354 = vmatmul.mubr.f32.gmra.mrb[0].mxu0 %v3285
    %v3355 = vpop.f32.mrb[0].mxu0
    %v3356 = vadd.f32 0.0, %v3355
    %v3357 = vpop.f32.mrb[0].mxu0
    %3358 = vdwg.mxu0
    %v3359 = vmul.f32 %v3278, 0.17677669
    %v3360 = vmul.f32 %v3356, 0.17677669
    %v3361 = vsel %vm697, %v3359, -inf
    %3362 = vmax.xlane.f32.xlu0 %v3361
    %v3363 = vpop.xlane.xlu0 %3362
    %v3364 = vsel %vm697, %v3360, -inf
    %3365 = vmax.xlane.f32.xlu0 %v3364
    %v3366 = vpop.xlane.xlu0 %3365
    %v3367 = vsub.f32 %v3359, %v3363
    %v3368 = vsub.f32 %v3360, %v3366
    %v3369 = vmul.f32 %v3367, 1.442695
    %v3370 = vpow.pop %v3369
    %v3371 = vmul.f32 %v3368, 1.442695
    %v3372 = vpow.pop %v3371
    %v3373 = vsel %vm697, %v3370, 0.0
    %3374 = vadd.xlane.f32.xlu0 %v3373
    %v3375 = vpop.xlane.xlu0 %3374
    %v3376 = vsel %vm697, %v3372, 0.0
    %3377 = vadd.xlane.f32.xlu0 %v3376
    %v3378 = vpop.xlane.xlu0 %3377
    %v3379 = vrcp.pop %v3375
    %v3380 = vrcp.pop %v3378
    %v3381 = vmul.f32 %v3370, %v3379
    %v3382 = vmul.f32 %v3372, %v3380
    %3383 = vrot.lane.b32.xlu0 %v2539, 64
    %v3384 = vpop.permute.xlu0 %3383
    %v3387 = vsel %vm697, %v3381, 0
    %3389 = vmatprep.subr.mxu0 0.0
    %3390 = vmatpush1.msra.mxu0 %v3384
    %3391 = vmatprep.subr.mxu0 0.0
    %3392 = vmatpush1.msra.mxu0 0.0
    %3393 = vmatprep.subr.mxu0 0.0
    %3394 = vmatpush1.msra.mxu0 0.0
    %3395 = vmatprep.subr.mxu0 0.0
    %3396 = vmatpush1.msra.mxu0 0.0
    %3397 = vmatprep.subr.mxu0 0.0
    %3398 = vmatpush1.msra.mxu0 0.0
    %3399 = vmatprep.subr.mxu0 0.0
    %3400 = vmatpush1.msra.mxu0 0.0
    %3401 = vmatprep.subr.mxu0 0.0
    %3402 = vmatpush1.msra.mxu0 0.0
    %3403 = vmatprep.subr.mxu0 0.0
    %3404 = vmatpush1.msra.mxu0 0.0
    %3405 = vmatprep.subr.mxu0 0.0
    %3406 = vmatpush1.msra.mxu0 0.0
    %3407 = vmatprep.subr.mxu0 0.0
    %3408 = vmatpush1.msra.mxu0 0.0
    %3409 = vmatprep.subr.mxu0 0.0
    %3410 = vmatpush1.msra.mxu0 0.0
    %3411 = vmatprep.subr.mxu0 0.0
    %3412 = vmatpush1.msra.mxu0 0.0
    %3413 = vmatprep.subr.mxu0 0.0
    %3414 = vmatpush1.msra.mxu0 0.0
    %3415 = vmatprep.subr.mxu0 0.0
    %3416 = vmatpush1.msra.mxu0 0.0
    %3417 = vmatprep.subr.mxu0 0.0
    %3418 = vmatpush1.msra.mxu0 0.0
    %3419 = vmatprep.subr.mxu0 0.0
    %3420 = vmatpush1.msra.mxu0 0.0
    %3421 = vmatprep.subr.mxu0 0.0
    %3422 = vmatpush1.msra.mxu0 0.0
    %3423 = vmatprep.subr.mxu0 0.0
    %3424 = vmatpush1.msra.mxu0 0.0
    %3425 = vmatprep.subr.mxu0 0.0
    %3426 = vmatpush1.msra.mxu0 0.0
    %3427 = vmatprep.subr.mxu0 0.0
    %3428 = vmatpush1.msra.mxu0 0.0
    %3429 = vmatprep.subr.mxu0 0.0
    %3430 = vmatpush1.msra.mxu0 0.0
    %3431 = vmatprep.subr.mxu0 0.0
    %3432 = vmatpush1.msra.mxu0 0.0
    %3433 = vmatprep.subr.mxu0 0.0
    %3434 = vmatpush1.msra.mxu0 0.0
    %3435 = vmatprep.subr.mxu0 0.0
    %3436 = vmatpush1.msra.mxu0 0.0
    %3437 = vmatprep.subr.mxu0 0.0
    %3438 = vmatpush1.msra.mxu0 0.0
    %3439 = vmatprep.subr.mxu0 0.0
    %3440 = vmatpush1.msra.mxu0 0.0
    %3441 = vmatprep.subr.mxu0 0.0
    %3442 = vmatpush1.msra.mxu0 0.0
    %3443 = vmatprep.subr.mxu0 0.0
    %3444 = vmatpush1.msra.mxu0 0.0
    %3445 = vmatprep.subr.mxu0 0.0
    %3446 = vmatpush1.msra.mxu0 0.0
    %3447 = vmatprep.subr.mxu0 0.0
    %3448 = vmatpush1.msra.mxu0 0.0
    %3449 = vmatprep.subr.mxu0 0.0
    %3450 = vmatpush1.msra.mxu0 0.0
    %3451 = vmatprep.subr.mxu0 0.0
    %3452 = vmatpush1.msra.mxu0 0.0
    %3453 = vmatprep.mubr.f32.mxu0 0.0
    %3454 = vmatmul.mubr.f32.gmra.mrb[0].mxu0 %v3387
    %v3455 = vpop.f32.mrb[0].mxu0
    %v3456 = vadd.f32 0.0, %v3455
    %v3457 = vpop.f32.mrb[0].mxu0
    %3458 = vdwg.mxu0
    %3459 = vrot.lane.b32.xlu0 %v2544, 64
    %v3460 = vpop.permute.xlu0 %3459
    %v3463 = vsel %vm697, %v3382, 0
    %3465 = vmatprep.subr.mxu0 0.0
    %3466 = vmatpush1.msra.mxu0 %v3460
    %3467 = vmatprep.subr.mxu0 0.0
    %3468 = vmatpush1.msra.mxu0 0.0
    %3469 = vmatprep.subr.mxu0 0.0
    %3470 = vmatpush1.msra.mxu0 0.0
    %3471 = vmatprep.subr.mxu0 0.0
    %3472 = vmatpush1.msra.mxu0 0.0
    %3473 = vmatprep.subr.mxu0 0.0
    %3474 = vmatpush1.msra.mxu0 0.0
    %3475 = vmatprep.subr.mxu0 0.0
    %3476 = vmatpush1.msra.mxu0 0.0
    %3477 = vmatprep.subr.mxu0 0.0
    %3478 = vmatpush1.msra.mxu0 0.0
    %3479 = vmatprep.subr.mxu0 0.0
    %3480 = vmatpush1.msra.mxu0 0.0
    %3481 = vmatprep.subr.mxu0 0.0
    %3482 = vmatpush1.msra.mxu0 0.0
    %3483 = vmatprep.subr.mxu0 0.0
    %3484 = vmatpush1.msra.mxu0 0.0
    %3485 = vmatprep.subr.mxu0 0.0
    %3486 = vmatpush1.msra.mxu0 0.0
    %3487 = vmatprep.subr.mxu0 0.0
    %3488 = vmatpush1.msra.mxu0 0.0
    %3489 = vmatprep.subr.mxu0 0.0
    %3490 = vmatpush1.msra.mxu0 0.0
    %3491 = vmatprep.subr.mxu0 0.0
    %3492 = vmatpush1.msra.mxu0 0.0
    %3493 = vmatprep.subr.mxu0 0.0
    %3494 = vmatpush1.msra.mxu0 0.0
    %3495 = vmatprep.subr.mxu0 0.0
    %3496 = vmatpush1.msra.mxu0 0.0
    %3497 = vmatprep.subr.mxu0 0.0
    %3498 = vmatpush1.msra.mxu0 0.0
    %3499 = vmatprep.subr.mxu0 0.0
    %3500 = vmatpush1.msra.mxu0 0.0
    %3501 = vmatprep.subr.mxu0 0.0
    %3502 = vmatpush1.msra.mxu0 0.0
    %3503 = vmatprep.subr.mxu0 0.0
    %3504 = vmatpush1.msra.mxu0 0.0
    %3505 = vmatprep.subr.mxu0 0.0
    %3506 = vmatpush1.msra.mxu0 0.0
    %3507 = vmatprep.subr.mxu0 0.0
    %3508 = vmatpush1.msra.mxu0 0.0
    %3509 = vmatprep.subr.mxu0 0.0
    %3510 = vmatpush1.msra.mxu0 0.0
    %3511 = vmatprep.subr.mxu0 0.0
    %3512 = vmatpush1.msra.mxu0 0.0
    %3513 = vmatprep.subr.mxu0 0.0
    %3514 = vmatpush1.msra.mxu0 0.0
    %3515 = vmatprep.subr.mxu0 0.0
    %3516 = vmatpush1.msra.mxu0 0.0
    %3517 = vmatprep.subr.mxu0 0.0
    %3518 = vmatpush1.msra.mxu0 0.0
    %3519 = vmatprep.subr.mxu0 0.0
    %3520 = vmatpush1.msra.mxu0 0.0
    %3521 = vmatprep.subr.mxu0 0.0
    %3522 = vmatpush1.msra.mxu0 0.0
    %3523 = vmatprep.subr.mxu0 0.0
    %3524 = vmatpush1.msra.mxu0 0.0
    %3525 = vmatprep.subr.mxu0 0.0
    %3526 = vmatpush1.msra.mxu0 0.0
    %3527 = vmatprep.subr.mxu0 0.0
    %3528 = vmatpush1.msra.mxu0 0.0
    %3529 = vmatprep.mubr.f32.mxu0 0.0
    %3530 = vmatmul.mubr.f32.gmra.mrb[0].mxu0 %v3463
    %v3531 = vpop.f32.mrb[0].mxu0
    %v3532 = vadd.f32 0.0, %v3531
    %v3533 = vpop.f32.mrb[0].mxu0
    %3534 = vdwg.mxu0
    %3535 = vrot.lane.b32.xlu0 %v2462, 32
    %v3536 = vpop.permute.xlu0 %3535
    %3537 = vrot.lane.b32.xlu0 %v2464, 32
    %v3538 = vpop.permute.xlu0 %3537
    %v3539 = vsel %vm542, %v3536, 0
    %v3541 = vsel %vm542, %v3538, 0
    %3543 = vmatprep.subr.mxu0 0.0
    %3544 = vmatpush1.xpose.msra.mxu0 %v3541
    %3545 = vmatprep.subr.mxu0 0.0
    %3546 = vmatpush1.xpose.msra.mxu0 0.0
    %3547 = vmatprep.subr.mxu0 0.0
    %3548 = vmatpush1.xpose.msra.mxu0 0.0
    %3549 = vmatprep.subr.mxu0 0.0
    %3550 = vmatpush1.xpose.msra.mxu0 0.0
    %3551 = vmatprep.subr.mxu0 0.0
    %3552 = vmatpush1.xpose.msra.mxu0 0.0
    %3553 = vmatprep.subr.mxu0 0.0
    %3554 = vmatpush1.xpose.msra.mxu0 0.0
    %3555 = vmatprep.subr.mxu0 0.0
    %3556 = vmatpush1.xpose.msra.mxu0 0.0
    %3557 = vmatprep.subr.mxu0 0.0
    %3558 = vmatpush1.xpose.msra.mxu0 0.0
    %3559 = vmatprep.subr.mxu0 0.0
    %3560 = vmatpush1.xpose.msra.mxu0 0.0
    %3561 = vmatprep.subr.mxu0 0.0
    %3562 = vmatpush1.xpose.msra.mxu0 0.0
    %3563 = vmatprep.subr.mxu0 0.0
    %3564 = vmatpush1.xpose.msra.mxu0 0.0
    %3565 = vmatprep.subr.mxu0 0.0
    %3566 = vmatpush1.xpose.msra.mxu0 0.0
    %3567 = vmatprep.subr.mxu0 0.0
    %3568 = vmatpush1.xpose.msra.mxu0 0.0
    %3569 = vmatprep.subr.mxu0 0.0
    %3570 = vmatpush1.xpose.msra.mxu0 0.0
    %3571 = vmatprep.subr.mxu0 0.0
    %3572 = vmatpush1.xpose.msra.mxu0 0.0
    %3573 = vmatprep.subr.mxu0 0.0
    %3574 = vmatpush1.xpose.msra.mxu0 0.0
    %3575 = vmatprep.subr.mxu0 0.0
    %3576 = vmatpush1.xpose.msra.mxu0 0.0
    %3577 = vmatprep.subr.mxu0 0.0
    %3578 = vmatpush1.xpose.msra.mxu0 0.0
    %3579 = vmatprep.subr.mxu0 0.0
    %3580 = vmatpush1.xpose.msra.mxu0 0.0
    %3581 = vmatprep.subr.mxu0 0.0
    %3582 = vmatpush1.xpose.msra.mxu0 0.0
    %3583 = vmatprep.subr.mxu0 0.0
    %3584 = vmatpush1.xpose.msra.mxu0 0.0
    %3585 = vmatprep.subr.mxu0 0.0
    %3586 = vmatpush1.xpose.msra.mxu0 0.0
    %3587 = vmatprep.subr.mxu0 0.0
    %3588 = vmatpush1.xpose.msra.mxu0 0.0
    %3589 = vmatprep.subr.mxu0 0.0
    %3590 = vmatpush1.xpose.msra.mxu0 0.0
    %3591 = vmatprep.subr.mxu0 0.0
    %3592 = vmatpush1.xpose.msra.mxu0 0.0
    %3593 = vmatprep.subr.mxu0 0.0
    %3594 = vmatpush1.xpose.msra.mxu0 0.0
    %3595 = vmatprep.subr.mxu0 0.0
    %3596 = vmatpush1.xpose.msra.mxu0 0.0
    %3597 = vmatprep.subr.mxu0 0.0
    %3598 = vmatpush1.xpose.msra.mxu0 0.0
    %3599 = vmatprep.subr.mxu0 0.0
    %3600 = vmatpush1.xpose.msra.mxu0 0.0
    %3601 = vmatprep.subr.mxu0 0.0
    %3602 = vmatpush1.xpose.msra.mxu0 0.0
    %3603 = vmatprep.subr.mxu0 0.0
    %3604 = vmatpush1.xpose.msra.mxu0 0.0
    %3605 = vmatprep.subr.mxu0 0.0
    %3606 = vmatpush1.xpose.msra.mxu0 0.0
    %3607 = vmatprep.mubr.f32.mxu0 0.0
    %3608 = vmatmul.mubr.f32.gmra.mrb[0].mxu0 %v3539
    %v3609 = vpop.f32.mrb[0].mxu0
    %v3610 = vadd.f32 0.0, %v3609
    %v3611 = vpop.f32.mrb[0].mxu0
    %3612 = vdwg.mxu0
    %3613 = vrot.lane.b32.xlu0 %v2468, 32
    %v3614 = vpop.permute.xlu0 %3613
    %3615 = vrot.lane.b32.xlu0 %v2470, 32
    %v3616 = vpop.permute.xlu0 %3615
    %v3617 = vsel %vm542, %v3614, 0
    %v3619 = vsel %vm542, %v3616, 0
    %3621 = vmatprep.subr.mxu0 0.0
    %3622 = vmatpush1.xpose.msra.mxu0 %v3619
    %3623 = vmatprep.subr.mxu0 0.0
    %3624 = vmatpush1.xpose.msra.mxu0 0.0
    %3625 = vmatprep.subr.mxu0 0.0
    %3626 = vmatpush1.xpose.msra.mxu0 0.0
    %3627 = vmatprep.subr.mxu0 0.0
    %3628 = vmatpush1.xpose.msra.mxu0 0.0
    %3629 = vmatprep.subr.mxu0 0.0
    %3630 = vmatpush1.xpose.msra.mxu0 0.0
    %3631 = vmatprep.subr.mxu0 0.0
    %3632 = vmatpush1.xpose.msra.mxu0 0.0
    %3633 = vmatprep.subr.mxu0 0.0
    %3634 = vmatpush1.xpose.msra.mxu0 0.0
    %3635 = vmatprep.subr.mxu0 0.0
    %3636 = vmatpush1.xpose.msra.mxu0 0.0
    %3637 = vmatprep.subr.mxu0 0.0
    %3638 = vmatpush1.xpose.msra.mxu0 0.0
    %3639 = vmatprep.subr.mxu0 0.0
    %3640 = vmatpush1.xpose.msra.mxu0 0.0
    %3641 = vmatprep.subr.mxu0 0.0
    %3642 = vmatpush1.xpose.msra.mxu0 0.0
    %3643 = vmatprep.subr.mxu0 0.0
    %3644 = vmatpush1.xpose.msra.mxu0 0.0
    %3645 = vmatprep.subr.mxu0 0.0
    %3646 = vmatpush1.xpose.msra.mxu0 0.0
    %3647 = vmatprep.subr.mxu0 0.0
    %3648 = vmatpush1.xpose.msra.mxu0 0.0
    %3649 = vmatprep.subr.mxu0 0.0
    %3650 = vmatpush1.xpose.msra.mxu0 0.0
    %3651 = vmatprep.subr.mxu0 0.0
    %3652 = vmatpush1.xpose.msra.mxu0 0.0
    %3653 = vmatprep.subr.mxu0 0.0
    %3654 = vmatpush1.xpose.msra.mxu0 0.0
    %3655 = vmatprep.subr.mxu0 0.0
    %3656 = vmatpush1.xpose.msra.mxu0 0.0
    %3657 = vmatprep.subr.mxu0 0.0
    %3658 = vmatpush1.xpose.msra.mxu0 0.0
    %3659 = vmatprep.subr.mxu0 0.0
    %3660 = vmatpush1.xpose.msra.mxu0 0.0
    %3661 = vmatprep.subr.mxu0 0.0
    %3662 = vmatpush1.xpose.msra.mxu0 0.0
    %3663 = vmatprep.subr.mxu0 0.0
    %3664 = vmatpush1.xpose.msra.mxu0 0.0
    %3665 = vmatprep.subr.mxu0 0.0
    %3666 = vmatpush1.xpose.msra.mxu0 0.0
    %3667 = vmatprep.subr.mxu0 0.0
    %3668 = vmatpush1.xpose.msra.mxu0 0.0
    %3669 = vmatprep.subr.mxu0 0.0
    %3670 = vmatpush1.xpose.msra.mxu0 0.0
    %3671 = vmatprep.subr.mxu0 0.0
    %3672 = vmatpush1.xpose.msra.mxu0 0.0
    %3673 = vmatprep.subr.mxu0 0.0
    %3674 = vmatpush1.xpose.msra.mxu0 0.0
    %3675 = vmatprep.subr.mxu0 0.0
    %3676 = vmatpush1.xpose.msra.mxu0 0.0
    %3677 = vmatprep.subr.mxu0 0.0
    %3678 = vmatpush1.xpose.msra.mxu0 0.0
    %3679 = vmatprep.subr.mxu0 0.0
    %3680 = vmatpush1.xpose.msra.mxu0 0.0
    %3681 = vmatprep.subr.mxu0 0.0
    %3682 = vmatpush1.xpose.msra.mxu0 0.0
    %3683 = vmatprep.subr.mxu0 0.0
    %3684 = vmatpush1.xpose.msra.mxu0 0.0
    %3685 = vmatprep.mubr.f32.mxu0 0.0
    %3686 = vmatmul.mubr.f32.gmra.mrb[0].mxu0 %v3617
    %v3687 = vpop.f32.mrb[0].mxu0
    %v3688 = vadd.f32 0.0, %v3687
    %v3689 = vpop.f32.mrb[0].mxu0
    %3690 = vdwg.mxu0
    %v3691 = vmul.f32 %v3610, 0.17677669
    %v3692 = vmul.f32 %v3688, 0.17677669
    %v3693 = vsel %vm697, %v3691, -inf
    %3694 = vmax.xlane.f32.xlu0 %v3693
    %v3695 = vpop.xlane.xlu0 %3694
    %v3696 = vsel %vm697, %v3692, -inf
    %3697 = vmax.xlane.f32.xlu0 %v3696
    %v3698 = vpop.xlane.xlu0 %3697
    %v3699 = vsub.f32 %v3691, %v3695
    %v3700 = vsub.f32 %v3692, %v3698
    %v3701 = vmul.f32 %v3699, 1.442695
    %v3702 = vpow.pop %v3701
    %v3703 = vmul.f32 %v3700, 1.442695
    %v3704 = vpow.pop %v3703
    %v3705 = vsel %vm697, %v3702, 0.0
    %3706 = vadd.xlane.f32.xlu0 %v3705
    %v3707 = vpop.xlane.xlu0 %3706
    %v3708 = vsel %vm697, %v3704, 0.0
    %3709 = vadd.xlane.f32.xlu0 %v3708
    %v3710 = vpop.xlane.xlu0 %3709
    %v3711 = vrcp.pop %v3707
    %v3712 = vrcp.pop %v3710
    %v3713 = vmul.f32 %v3702, %v3711
    %v3714 = vmul.f32 %v3704, %v3712
    %3715 = vrot.lane.b32.xlu0 %v2539, 32
    %v3716 = vpop.permute.xlu0 %3715
    %v3719 = vsel %vm697, %v3713, 0
    %3721 = vmatprep.subr.mxu0 0.0
    %3722 = vmatpush1.msra.mxu0 %v3716
    %3723 = vmatprep.subr.mxu0 0.0
    %3724 = vmatpush1.msra.mxu0 0.0
    %3725 = vmatprep.subr.mxu0 0.0
    %3726 = vmatpush1.msra.mxu0 0.0
    %3727 = vmatprep.subr.mxu0 0.0
    %3728 = vmatpush1.msra.mxu0 0.0
    %3729 = vmatprep.subr.mxu0 0.0
    %3730 = vmatpush1.msra.mxu0 0.0
    %3731 = vmatprep.subr.mxu0 0.0
    %3732 = vmatpush1.msra.mxu0 0.0
    %3733 = vmatprep.subr.mxu0 0.0
    %3734 = vmatpush1.msra.mxu0 0.0
    %3735 = vmatprep.subr.mxu0 0.0
    %3736 = vmatpush1.msra.mxu0 0.0
    %3737 = vmatprep.subr.mxu0 0.0
    %3738 = vmatpush1.msra.mxu0 0.0
    %3739 = vmatprep.subr.mxu0 0.0
    %3740 = vmatpush1.msra.mxu0 0.0
    %3741 = vmatprep.subr.mxu0 0.0
    %3742 = vmatpush1.msra.mxu0 0.0
    %3743 = vmatprep.subr.mxu0 0.0
    %3744 = vmatpush1.msra.mxu0 0.0
    %3745 = vmatprep.subr.mxu0 0.0
    %3746 = vmatpush1.msra.mxu0 0.0
    %3747 = vmatprep.subr.mxu0 0.0
    %3748 = vmatpush1.msra.mxu0 0.0
    %3749 = vmatprep.subr.mxu0 0.0
    %3750 = vmatpush1.msra.mxu0 0.0
    %3751 = vmatprep.subr.mxu0 0.0
    %3752 = vmatpush1.msra.mxu0 0.0
    %3753 = vmatprep.subr.mxu0 0.0
    %3754 = vmatpush1.msra.mxu0 0.0
    %3755 = vmatprep.subr.mxu0 0.0
    %3756 = vmatpush1.msra.mxu0 0.0
    %3757 = vmatprep.subr.mxu0 0.0
    %3758 = vmatpush1.msra.mxu0 0.0
    %3759 = vmatprep.subr.mxu0 0.0
    %3760 = vmatpush1.msra.mxu0 0.0
    %3761 = vmatprep.subr.mxu0 0.0
    %3762 = vmatpush1.msra.mxu0 0.0
    %3763 = vmatprep.subr.mxu0 0.0
    %3764 = vmatpush1.msra.mxu0 0.0
    %3765 = vmatprep.subr.mxu0 0.0
    %3766 = vmatpush1.msra.mxu0 0.0
    %3767 = vmatprep.subr.mxu0 0.0
    %3768 = vmatpush1.msra.mxu0 0.0
    %3769 = vmatprep.subr.mxu0 0.0
    %3770 = vmatpush1.msra.mxu0 0.0
    %3771 = vmatprep.subr.mxu0 0.0
    %3772 = vmatpush1.msra.mxu0 0.0
    %3773 = vmatprep.subr.mxu0 0.0
    %3774 = vmatpush1.msra.mxu0 0.0
    %3775 = vmatprep.subr.mxu0 0.0
    %3776 = vmatpush1.msra.mxu0 0.0
    %3777 = vmatprep.subr.mxu0 0.0
    %3778 = vmatpush1.msra.mxu0 0.0
    %3779 = vmatprep.subr.mxu0 0.0
    %3780 = vmatpush1.msra.mxu0 0.0
    %3781 = vmatprep.subr.mxu0 0.0
    %3782 = vmatpush1.msra.mxu0 0.0
    %3783 = vmatprep.subr.mxu0 0.0
    %3784 = vmatpush1.msra.mxu0 0.0
    %3785 = vmatprep.mubr.f32.mxu0 0.0
    %3786 = vmatmul.mubr.f32.gmra.mrb[0].mxu0 %v3719
    %v3787 = vpop.f32.mrb[0].mxu0
    %v3788 = vadd.f32 0.0, %v3787
    %v3789 = vpop.f32.mrb[0].mxu0
    %3790 = vdwg.mxu0
    %3791 = vrot.lane.b32.xlu0 %v2544, 32
    %v3792 = vpop.permute.xlu0 %3791
    %v3795 = vsel %vm697, %v3714, 0
    %3797 = vmatprep.subr.mxu0 0.0
    %3798 = vmatpush1.msra.mxu0 %v3792
    %3799 = vmatprep.subr.mxu0 0.0
    %3800 = vmatpush1.msra.mxu0 0.0
    %3801 = vmatprep.subr.mxu0 0.0
    %3802 = vmatpush1.msra.mxu0 0.0
    %3803 = vmatprep.subr.mxu0 0.0
    %3804 = vmatpush1.msra.mxu0 0.0
    %3805 = vmatprep.subr.mxu0 0.0
    %3806 = vmatpush1.msra.mxu0 0.0
    %3807 = vmatprep.subr.mxu0 0.0
    %3808 = vmatpush1.msra.mxu0 0.0
    %3809 = vmatprep.subr.mxu0 0.0
    %3810 = vmatpush1.msra.mxu0 0.0
    %3811 = vmatprep.subr.mxu0 0.0
    %3812 = vmatpush1.msra.mxu0 0.0
    %3813 = vmatprep.subr.mxu0 0.0
    %3814 = vmatpush1.msra.mxu0 0.0
    %3815 = vmatprep.subr.mxu0 0.0
    %3816 = vmatpush1.msra.mxu0 0.0
    %3817 = vmatprep.subr.mxu0 0.0
    %3818 = vmatpush1.msra.mxu0 0.0
    %3819 = vmatprep.subr.mxu0 0.0
    %3820 = vmatpush1.msra.mxu0 0.0
    %3821 = vmatprep.subr.mxu0 0.0
    %3822 = vmatpush1.msra.mxu0 0.0
    %3823 = vmatprep.subr.mxu0 0.0
    %3824 = vmatpush1.msra.mxu0 0.0
    %3825 = vmatprep.subr.mxu0 0.0
    %3826 = vmatpush1.msra.mxu0 0.0
    %3827 = vmatprep.subr.mxu0 0.0
    %3828 = vmatpush1.msra.mxu0 0.0
    %3829 = vmatprep.subr.mxu0 0.0
    %3830 = vmatpush1.msra.mxu0 0.0
    %3831 = vmatprep.subr.mxu0 0.0
    %3832 = vmatpush1.msra.mxu0 0.0
    %3833 = vmatprep.subr.mxu0 0.0
    %3834 = vmatpush1.msra.mxu0 0.0
    %3835 = vmatprep.subr.mxu0 0.0
    %3836 = vmatpush1.msra.mxu0 0.0
    %3837 = vmatprep.subr.mxu0 0.0
    %3838 = vmatpush1.msra.mxu0 0.0
    %3839 = vmatprep.subr.mxu0 0.0
    %3840 = vmatpush1.msra.mxu0 0.0
    %3841 = vmatprep.subr.mxu0 0.0
    %3842 = vmatpush1.msra.mxu0 0.0
    %3843 = vmatprep.subr.mxu0 0.0
    %3844 = vmatpush1.msra.mxu0 0.0
    %3845 = vmatprep.subr.mxu0 0.0
    %3846 = vmatpush1.msra.mxu0 0.0
    %3847 = vmatprep.subr.mxu0 0.0
    %3848 = vmatpush1.msra.mxu0 0.0
    %3849 = vmatprep.subr.mxu0 0.0
    %3850 = vmatpush1.msra.mxu0 0.0
    %3851 = vmatprep.subr.mxu0 0.0
    %3852 = vmatpush1.msra.mxu0 0.0
    %3853 = vmatprep.subr.mxu0 0.0
    %3854 = vmatpush1.msra.mxu0 0.0
    %3855 = vmatprep.subr.mxu0 0.0
    %3856 = vmatpush1.msra.mxu0 0.0
    %3857 = vmatprep.subr.mxu0 0.0
    %3858 = vmatpush1.msra.mxu0 0.0
    %3859 = vmatprep.subr.mxu0 0.0
    %3860 = vmatpush1.msra.mxu0 0.0
    %3861 = vmatprep.mubr.f32.mxu0 0.0
    %3862 = vmatmul.mubr.f32.gmra.mrb[0].mxu0 %v3795
    %v3863 = vpop.f32.mrb[0].mxu0
    %v3864 = vadd.f32 0.0, %v3863
    %v3865 = vpop.f32.mrb[0].mxu0
    %3866 = vdwg.mxu0
    %3869 = vrot.lane.b32.xlu0 %v3123, 32
    %v3870 = vpop.permute.xlu0 %3869
    %3871 = vrot.lane.b32.xlu0 %v3200, 32
    %v3872 = vpop.permute.xlu0 %3871
    %3877 = vrot.lane.b32.xlu0 %v3456, 64
    %v3878 = vpop.permute.xlu0 %3877
    %3879 = vrot.lane.b32.xlu0 %v3532, 64
    %v3880 = vpop.permute.xlu0 %3879
    %3885 = vrot.lane.b32.xlu0 %v3788, 96
    %v3886 = vpop.permute.xlu0 %3885
    %3887 = vrot.lane.b32.xlu0 %v3864, 96
    %v3888 = vpop.permute.xlu0 %3887
    %v3891 = vsel %vm542, %v2793, %v3870
    %v3892 = vsel %vm542, %v2866, %v3872
    %v3893 = vsel %vm1890, %v3891, %v3878
    %v3894 = vsel %vm1890, %v3892, %v3880
    %v3895 = vsel %vm1893, %v3893, %v3886
    %v3896 = vsel %vm1893, %v3894, %v3888
    %v3898 = vlaneseq
    %v3899 = vshrl.u32 %v3898, 7
    %v3900 = vsub.s32 0, %v3899
    %v3901 = vrot.slane %v2300, %v3900
    %3903 = vmatprep.subr.mxu0 0.0
    %3904 = vmatpush1.msra.mxu0 %v2283
    %3905 = vmatprep.subr.mxu0 0.0
    %3906 = vmatpush1.msra.mxu0 %v2284
    %3907 = vmatprep.subr.mxu0 0.0
    %3908 = vmatpush1.msra.mxu0 %v2285
    %3909 = vmatprep.subr.mxu0 0.0
    %3910 = vmatpush1.msra.mxu0 %v2286
    %3911 = vmatprep.subr.mxu0 0.0
    %3912 = vmatpush1.msra.mxu0 %v2287
    %3913 = vmatprep.subr.mxu0 0.0
    %3914 = vmatpush1.msra.mxu0 %v2288
    %3915 = vmatprep.subr.mxu0 0.0
    %3916 = vmatpush1.msra.mxu0 %v2289
    %3917 = vmatprep.subr.mxu0 0.0
    %3918 = vmatpush1.msra.mxu0 %v2290
    %3919 = vmatprep.subr.mxu0 0.0
    %3920 = vmatpush1.msra.mxu0 %v2291
    %3921 = vmatprep.subr.mxu0 0.0
    %3922 = vmatpush1.msra.mxu0 %v2292
    %3923 = vmatprep.subr.mxu0 0.0
    %3924 = vmatpush1.msra.mxu0 %v2293
    %3925 = vmatprep.subr.mxu0 0.0
    %3926 = vmatpush1.msra.mxu0 %v2294
    %3927 = vmatprep.subr.mxu0 0.0
    %3928 = vmatpush1.msra.mxu0 %v2295
    %3929 = vmatprep.subr.mxu0 0.0
    %3930 = vmatpush1.msra.mxu0 %v2296
    %3931 = vmatprep.subr.mxu0 0.0
    %3932 = vmatpush1.msra.mxu0 %v2297
    %3933 = vmatprep.subr.mxu0 0.0
    %3934 = vmatpush1.msra.mxu0 %v2298
    %3935 = vmatprep.subr.mxu0 0.0
    %3936 = vmatpush1.msra.mxu0 0.0
    %3937 = vmatprep.subr.mxu0 0.0
    %3938 = vmatpush1.msra.mxu0 0.0
    %3939 = vmatprep.subr.mxu0 0.0
    %3940 = vmatpush1.msra.mxu0 0.0
    %3941 = vmatprep.subr.mxu0 0.0
    %3942 = vmatpush1.msra.mxu0 0.0
    %3943 = vmatprep.subr.mxu0 0.0
    %3944 = vmatpush1.msra.mxu0 0.0
    %3945 = vmatprep.subr.mxu0 0.0
    %3946 = vmatpush1.msra.mxu0 0.0
    %3947 = vmatprep.subr.mxu0 0.0
    %3948 = vmatpush1.msra.mxu0 0.0
    %3949 = vmatprep.subr.mxu0 0.0
    %3950 = vmatpush1.msra.mxu0 0.0
    %3951 = vmatprep.subr.mxu0 0.0
    %3952 = vmatpush1.msra.mxu0 0.0
    %3953 = vmatprep.subr.mxu0 0.0
    %3954 = vmatpush1.msra.mxu0 0.0
    %3955 = vmatprep.subr.mxu0 0.0
    %3956 = vmatpush1.msra.mxu0 0.0
    %3957 = vmatprep.subr.mxu0 0.0
    %3958 = vmatpush1.msra.mxu0 0.0
    %3959 = vmatprep.subr.mxu0 0.0
    %3960 = vmatpush1.msra.mxu0 0.0
    %3961 = vmatprep.subr.mxu0 0.0
    %3962 = vmatpush1.msra.mxu0 0.0
    %3963 = vmatprep.subr.mxu0 0.0
    %3964 = vmatpush1.msra.mxu0 0.0
    %3965 = vmatprep.subr.mxu0 0.0
    %3966 = vmatpush1.msra.mxu0 0.0
    %3967 = vmatprep.mubr.f32.mxu0 0.0
    %3968 = vmatmul.mubr.f32.gmra.mrb[0].mxu0 %v3895
    %v3969 = vpop.f32.mrb[0].mxu0
    %v3970 = vadd.f32 %v3901, %v3969
    %v3971 = vpop.f32.mrb[0].mxu0
    %3972 = vmatprep.mubr.f32.mxu0 0.0
    %3973 = vmatmul.mubr.f32.gmra.mrb[0].mxu0 %v3896
    %v3974 = vpop.f32.mrb[0].mxu0
    %v3975 = vadd.f32 %v3901, %v3974
    %v3976 = vpop.f32.mrb[0].mxu0
    %3977 = vdwg.mxu0
    %v3978 = vadd.f32 %v2229, %v3970
    %v3979 = vadd.f32 %v2230, %v3975
    %3980 = vadd.xlane.f32.xlu0 %v3978
    %v3981 = vpop.xlane.xlu0 %3980
    %3982 = vadd.xlane.f32.xlu0 %v3979
    %v3983 = vpop.xlane.xlu0 %3982
    %v3984 = vmul.f32 %v3981, %v1983
    %v3985 = vmul.f32 %v3983, %v1983
    %v3986 = vsub.f32 %v3978, %v3984
    %v3987 = vsub.f32 %v3979, %v3985
    %v3988 = vmul.f32 %v3986, %v3986
    %v3989 = vmul.f32 %v3987, %v3987
    %3990 = vadd.xlane.f32.xlu0 %v3988
    %v3991 = vpop.xlane.xlu0 %3990
    %3992 = vadd.xlane.f32.xlu0 %v3989
    %v3993 = vpop.xlane.xlu0 %3992
    %v3994 = vmul.f32 %v3991, %v1983
    %v3995 = vmul.f32 %v3993, %v1983
    %v3996 = vadd.f32 %v3994, 1e-05
    %v3997 = vadd.f32 %v3995, 1e-05
    %v3998 = vrsqrt.pop %v3996
    %v3999 = vrsqrt.pop %v3997
    %v4000 = vmul.f32 %v3986, %v3998
    %v4001 = vmul.f32 %v3987, %v3999
    %v4003 = vlaneseq
    %v4004 = vshrl.u32 %v4003, 7
    %v4005 = vsub.s32 0, %v4004
    %v4006 = vrot.slane %v2302, %v4005
    %v4008 = vmul.f32 %v4000, %v4006
    %v4009 = vmul.f32 %v4001, %v4006
    %v4011 = vlaneseq
    %v4012 = vshrl.u32 %v4011, 7
    %v4013 = vsub.s32 0, %v4012
    %v4014 = vrot.slane %v2304, %v4013
    %v4016 = vadd.f32 %v4008, %v4014
    %v4017 = vadd.f32 %v4009, %v4014
    %v4019 = vlaneseq
    %v4020 = vshrl.u32 %v4019, 7
    %v4021 = vsub.s32 0, %v4020
    %v4022 = vrot.slane %v2339, %v4021
    %v4023 = vlaneseq
    %v4024 = vshrl.u32 %v4023, 7
    %v4025 = vsub.s32 1, %v4024
    %v4026 = vrot.slane %v2339, %v4025
    %4029 = vmatprep.subr.mxu0 %v2307
    %4030 = vmatpush1.msra.mxu0 %v2306
    %4031 = vmatprep.subr.mxu0 %v2309
    %4032 = vmatpush1.msra.mxu0 %v2308
    %4033 = vmatprep.subr.mxu0 %v2311
    %4034 = vmatpush1.msra.mxu0 %v2310
    %4035 = vmatprep.subr.mxu0 %v2313
    %4036 = vmatpush1.msra.mxu0 %v2312
    %4037 = vmatprep.subr.mxu0 %v2315
    %4038 = vmatpush1.msra.mxu0 %v2314
    %4039 = vmatprep.subr.mxu0 %v2317
    %4040 = vmatpush1.msra.mxu0 %v2316
    %4041 = vmatprep.subr.mxu0 %v2319
    %4042 = vmatpush1.msra.mxu0 %v2318
    %4043 = vmatprep.subr.mxu0 %v2321
    %4044 = vmatpush1.msra.mxu0 %v2320
    %4045 = vmatprep.subr.mxu0 %v2323
    %4046 = vmatpush1.msra.mxu0 %v2322
    %4047 = vmatprep.subr.mxu0 %v2325
    %4048 = vmatpush1.msra.mxu0 %v2324
    %4049 = vmatprep.subr.mxu0 %v2327
    %4050 = vmatpush1.msra.mxu0 %v2326
    %4051 = vmatprep.subr.mxu0 %v2329
    %4052 = vmatpush1.msra.mxu0 %v2328
    %4053 = vmatprep.subr.mxu0 %v2331
    %4054 = vmatpush1.msra.mxu0 %v2330
    %4055 = vmatprep.subr.mxu0 %v2333
    %4056 = vmatpush1.msra.mxu0 %v2332
    %4057 = vmatprep.subr.mxu0 %v2335
    %4058 = vmatpush1.msra.mxu0 %v2334
    %4059 = vmatprep.subr.mxu0 %v2337
    %4060 = vmatpush1.msra.mxu0 %v2336
    %4061 = vmatprep.subr.mxu0 0.0
    %4062 = vmatpush1.msra.mxu0 0.0
    %4063 = vmatprep.subr.mxu0 0.0
    %4064 = vmatpush1.msra.mxu0 0.0
    %4065 = vmatprep.subr.mxu0 0.0
    %4066 = vmatpush1.msra.mxu0 0.0
    %4067 = vmatprep.subr.mxu0 0.0
    %4068 = vmatpush1.msra.mxu0 0.0
    %4069 = vmatprep.subr.mxu0 0.0
    %4070 = vmatpush1.msra.mxu0 0.0
    %4071 = vmatprep.subr.mxu0 0.0
    %4072 = vmatpush1.msra.mxu0 0.0
    %4073 = vmatprep.subr.mxu0 0.0
    %4074 = vmatpush1.msra.mxu0 0.0
    %4075 = vmatprep.subr.mxu0 0.0
    %4076 = vmatpush1.msra.mxu0 0.0
    %4077 = vmatprep.subr.mxu0 0.0
    %4078 = vmatpush1.msra.mxu0 0.0
    %4079 = vmatprep.subr.mxu0 0.0
    %4080 = vmatpush1.msra.mxu0 0.0
    %4081 = vmatprep.subr.mxu0 0.0
    %4082 = vmatpush1.msra.mxu0 0.0
    %4083 = vmatprep.subr.mxu0 0.0
    %4084 = vmatpush1.msra.mxu0 0.0
    %4085 = vmatprep.subr.mxu0 0.0
    %4086 = vmatpush1.msra.mxu0 0.0
    %4087 = vmatprep.subr.mxu0 0.0
    %4088 = vmatpush1.msra.mxu0 0.0
    %4089 = vmatprep.subr.mxu0 0.0
    %4090 = vmatpush1.msra.mxu0 0.0
    %4091 = vmatprep.subr.mxu0 0.0
    %4092 = vmatpush1.msra.mxu0 0.0
    %4093 = vmatprep.mubr.f32.mxu0 0.0
    %4094 = vmatmul.mubr.f32.gmra.mrb[0].mxu0 %v4016
    %v4095 = vpop.f32.mrb[0].mxu0
    %v4096 = vadd.f32 %v4022, %v4095
    %v4097 = vpop.f32.mrb[0].mxu0
    %v4098 = vadd.f32 %v4026, %v4097
    %4099 = vmatprep.mubr.f32.mxu0 0.0
    %4100 = vmatmul.mubr.f32.gmra.mrb[0].mxu0 %v4017
    %v4101 = vpop.f32.mrb[0].mxu0
    %v4102 = vadd.f32 %v4022, %v4101
    %v4103 = vpop.f32.mrb[0].mxu0
    %v4104 = vadd.f32 %v4026, %v4103
    %4105 = vdwg.mxu0
    %v4106 = vmax.f32 %v4096, 0.0
    %v4107 = vmax.f32 %v4098, 0.0
    %v4108 = vmax.f32 %v4102, 0.0
    %v4109 = vmax.f32 %v4104, 0.0
    %v4111 = vlaneseq
    %v4112 = vshrl.u32 %v4111, 7
    %v4113 = vsub.s32 0, %v4112
    %v4114 = vrot.slane %v2374, %v4113
    %4116 = vmatprep.subr.mxu0 0.0
    %4117 = vmatpush1.msra.mxu0 %v2341
    %4118 = vmatprep.subr.mxu0 0.0
    %4119 = vmatpush1.msra.mxu0 %v2342
    %4120 = vmatprep.subr.mxu0 0.0
    %4121 = vmatpush1.msra.mxu0 %v2343
    %4122 = vmatprep.subr.mxu0 0.0
    %4123 = vmatpush1.msra.mxu0 %v2344
    %4124 = vmatprep.subr.mxu0 0.0
    %4125 = vmatpush1.msra.mxu0 %v2345
    %4126 = vmatprep.subr.mxu0 0.0
    %4127 = vmatpush1.msra.mxu0 %v2346
    %4128 = vmatprep.subr.mxu0 0.0
    %4129 = vmatpush1.msra.mxu0 %v2347
    %4130 = vmatprep.subr.mxu0 0.0
    %4131 = vmatpush1.msra.mxu0 %v2348
    %4132 = vmatprep.subr.mxu0 0.0
    %4133 = vmatpush1.msra.mxu0 %v2349
    %4134 = vmatprep.subr.mxu0 0.0
    %4135 = vmatpush1.msra.mxu0 %v2350
    %4136 = vmatprep.subr.mxu0 0.0
    %4137 = vmatpush1.msra.mxu0 %v2351
    %4138 = vmatprep.subr.mxu0 0.0
    %4139 = vmatpush1.msra.mxu0 %v2352
    %4140 = vmatprep.subr.mxu0 0.0
    %4141 = vmatpush1.msra.mxu0 %v2353
    %4142 = vmatprep.subr.mxu0 0.0
    %4143 = vmatpush1.msra.mxu0 %v2354
    %4144 = vmatprep.subr.mxu0 0.0
    %4145 = vmatpush1.msra.mxu0 %v2355
    %4146 = vmatprep.subr.mxu0 0.0
    %4147 = vmatpush1.msra.mxu0 %v2356
    %4148 = vmatprep.subr.mxu0 0.0
    %4149 = vmatpush1.msra.mxu0 %v2357
    %4150 = vmatprep.subr.mxu0 0.0
    %4151 = vmatpush1.msra.mxu0 %v2358
    %4152 = vmatprep.subr.mxu0 0.0
    %4153 = vmatpush1.msra.mxu0 %v2359
    %4154 = vmatprep.subr.mxu0 0.0
    %4155 = vmatpush1.msra.mxu0 %v2360
    %4156 = vmatprep.subr.mxu0 0.0
    %4157 = vmatpush1.msra.mxu0 %v2361
    %4158 = vmatprep.subr.mxu0 0.0
    %4159 = vmatpush1.msra.mxu0 %v2362
    %4160 = vmatprep.subr.mxu0 0.0
    %4161 = vmatpush1.msra.mxu0 %v2363
    %4162 = vmatprep.subr.mxu0 0.0
    %4163 = vmatpush1.msra.mxu0 %v2364
    %4164 = vmatprep.subr.mxu0 0.0
    %4165 = vmatpush1.msra.mxu0 %v2365
    %4166 = vmatprep.subr.mxu0 0.0
    %4167 = vmatpush1.msra.mxu0 %v2366
    %4168 = vmatprep.subr.mxu0 0.0
    %4169 = vmatpush1.msra.mxu0 %v2367
    %4170 = vmatprep.subr.mxu0 0.0
    %4171 = vmatpush1.msra.mxu0 %v2368
    %4172 = vmatprep.subr.mxu0 0.0
    %4173 = vmatpush1.msra.mxu0 %v2369
    %4174 = vmatprep.subr.mxu0 0.0
    %4175 = vmatpush1.msra.mxu0 %v2370
    %4176 = vmatprep.subr.mxu0 0.0
    %4177 = vmatpush1.msra.mxu0 %v2371
    %4178 = vmatprep.subr.mxu0 0.0
    %4179 = vmatpush1.msra.mxu0 %v2372
    %4180 = vmatprep.mubr.f32.mxu0 %v4107
    %4181 = vmatmul.mubr.f32.gmra.mrb[0].mxu0 %v4106
    %v4182 = vpop.f32.mrb[0].mxu0
    %v4183 = vadd.f32 %v4114, %v4182
    %v4184 = vpop.f32.mrb[0].mxu0
    %4185 = vmatprep.mubr.f32.mxu0 %v4109
    %4186 = vmatmul.mubr.f32.gmra.mrb[0].mxu0 %v4108
    %v4187 = vpop.f32.mrb[0].mxu0
    %v4188 = vadd.f32 %v4114, %v4187
    %v4189 = vpop.f32.mrb[0].mxu0
    %4190 = vdwg.mxu0
    %v4191 = vadd.f32 %v4016, %v4183
    %v4192 = vadd.f32 %v4017, %v4188
    %4193 = vadd.xlane.f32.xlu0 %v4191
    %v4194 = vpop.xlane.xlu0 %4193
    %4195 = vadd.xlane.f32.xlu0 %v4192
    %v4196 = vpop.xlane.xlu0 %4195
    %v4197 = vmul.f32 %v4194, %v1983
    %v4198 = vmul.f32 %v4196, %v1983
    %v4199 = vsub.f32 %v4191, %v4197
    %v4200 = vsub.f32 %v4192, %v4198
    %v4201 = vmul.f32 %v4199, %v4199
    %v4202 = vmul.f32 %v4200, %v4200
    %4203 = vadd.xlane.f32.xlu0 %v4201
    %v4204 = vpop.xlane.xlu0 %4203
    %4205 = vadd.xlane.f32.xlu0 %v4202
    %v4206 = vpop.xlane.xlu0 %4205
    %v4207 = vmul.f32 %v4204, %v1983
    %v4208 = vmul.f32 %v4206, %v1983
    %v4209 = vadd.f32 %v4207, 1e-05
    %v4210 = vadd.f32 %v4208, 1e-05
    %v4211 = vrsqrt.pop %v4209
    %v4212 = vrsqrt.pop %v4210
    %v4213 = vmul.f32 %v4199, %v4211
    %v4214 = vmul.f32 %v4200, %v4212
    %v4216 = vlaneseq
    %v4217 = vshrl.u32 %v4216, 7
    %v4218 = vsub.s32 0, %v4217
    %v4219 = vrot.slane %v2376, %v4218
    %v4221 = vmul.f32 %v4213, %v4219
    %v4222 = vmul.f32 %v4214, %v4219
    %v4224 = vlaneseq
    %v4225 = vshrl.u32 %v4224, 7
    %v4226 = vsub.s32 0, %v4225
    %v4227 = vrot.slane %v2378, %v4226
    %v4229 = vadd.f32 %v4221, %v4227
    %v4230 = vadd.f32 %v4222, %v4227
    %v4231 = vld [vmem:[#allocation20] sm:$0x1]
    %v4232 = vld [vmem:[#allocation22] sm:$0x1]
    %4233 = vadd.xlane.f32.xlu0 %v4229
    %v4234 = vpop.xlane.xlu0 %4233
    %4235 = vadd.xlane.f32.xlu0 %v4230
    %v4236 = vpop.xlane.xlu0 %4235
    %v4237 = vmul.f32 %v4234, %v1983
    %v4238 = vmul.f32 %v4236, %v1983
    %v4239 = vsub.f32 %v4229, %v4237
    %v4240 = vsub.f32 %v4230, %v4238
    %v4241 = vmul.f32 %v4239, %v4239
    %v4242 = vmul.f32 %v4240, %v4240
    %4243 = vadd.xlane.f32.xlu0 %v4241
    %v4244 = vpop.xlane.xlu0 %4243
    %4245 = vadd.xlane.f32.xlu0 %v4242
    %v4246 = vpop.xlane.xlu0 %4245
    %v4247 = vmul.f32 %v4244, %v1983
    %v4248 = vmul.f32 %v4246, %v1983
    %v4249 = vadd.f32 %v4247, 1e-05
    %v4250 = vadd.f32 %v4248, 1e-05
    %v4251 = vrsqrt.pop %v4249
    %v4252 = vrsqrt.pop %v4250
    %v4253 = vmul.f32 %v4239, %v4251
    %v4254 = vmul.f32 %v4240, %v4252
    %v4256 = vlaneseq
    %v4257 = vshrl.u32 %v4256, 7
    %v4258 = vsub.s32 0, %v4257
    %v4259 = vrot.slane %v4231, %v4258
    %v4261 = vmul.f32 %v4253, %v4259
    %v4262 = vmul.f32 %v4254, %v4259
    %v4264 = vlaneseq
    %v4265 = vshrl.u32 %v4264, 7
    %v4266 = vsub.s32 0, %v4265
    %v4267 = vrot.slane %v4232, %v4266
    %v4269 = vadd.f32 %v4261, %v4267
    %v4270 = vadd.f32 %v4262, %v4267
    %4271 = vst [vmem:[#allocation23] sm:$0xff] %v4269
    %4272 = vst [vmem:[#allocation23 + $0x8] sm:$0xff] %v4270
    // Predicated region
    $region122: #{transformer_forward.1} parent=1 // pred_check
      _
    $region123: #{transformer_forward.1} parent=1 // pred_check_branch
      %4274 = sbr.rel (0) target = $region125
    $region124: #{transformer_forward.1} parent=1 // pred_region
      %s4276 = ssub.s32 256, 256
      %4277 = vsyncadd [#allocation4], %s4276
      %s4278 = sshll.u32 [#allocation23], 4
      %s4279 = int_to_ptr.vmem [resolvable:$true] %s4278
      %4284 = dma.vmem_to_hbm [thread:$0]  %s4279, 256, %s17, [#allocation4], 128, 128, 8
    $region125: #{transformer_forward.1} parent=1 // pred_fallthru
      _
    // Predicated region
    $region126: #{transformer_forward.1} parent=1 // pred_check
      _
    $region127: #{transformer_forward.1} parent=1 // pred_check_branch
      %4286 = sbr.rel (0) target = $region129
    $region128: #{transformer_forward.1} parent=1 // pred_region
      %4287 = dma.done [#allocation4], 256
    $region129: #{transformer_forward.1} parent=1 // pred_fallthru
      _
    %4288 = vsyncpa [#allocation3], 1
    %4289 = vsyncpa [#allocation6], 1
    %4290 = vsyncpa [#allocation9], 1
    %4291 = vsyncpa [#allocation12], 1
    %4292 = vsyncpa [#allocation15], 1
    %4293 = vsyncpa [#allocation18], 1
    %4294 = vsyncpa [#allocation21], 1
    %4295 = vsyncpa [#allocation4], 1

</llo_original>
